<compile_context>
chip_gen: v7x
topology: tpu7x:2x2x1
jax: 0.10.0
libtpu: 0.0.40
codegen_flags: <defaults>
</compile_context>

<pallas_src>
import math
import functools

import jax
import jax.numpy as jnp
from jax.experimental import pallas as pl
from jax.experimental.pallas import tpu as pltpu


# ----------------------------------------------------------------------------
# Fused multi-layer GAT kernel (single grid step, heads unrolled in-body).
# ----------------------------------------------------------------------------
def make_fused_gat_kernel(num_layers, heads, negative_slope=0.2):
    def kernel(*refs):
        x_ref = refs[0]
        adjb_ref = refs[1]
        param_refs = refs[2:2 + 4 * num_layers]
        out_ref = refs[2 + 4 * num_layers]

        adj_bias = adjb_ref[...]                     # [N, N]: 0 (edge) / -1e30
        h_cur = x_ref[...].astype(jnp.float32)       # [N, Fin]

        for layer in range(num_layers):
            w_ref, asrc_ref, adst_ref, b_ref = param_refs[4 * layer:4 * layer + 4]

            # One lane-dense projection for all heads: [N,Fin] @ [Fin,H*C].
            xh = jnp.dot(h_cur, w_ref[...], preferred_element_type=jnp.float32)
            n = xh.shape[0]
            c = xh.shape[1] // heads

            # Attention coefficients for all heads via one matmul each:
            #   a_src[n, h] = sum_c xh[n, h*C + c] * att_src[h, c]
            a_src = jnp.dot(xh, asrc_ref[...],
                            preferred_element_type=jnp.float32)        # [N, H]
            a_dst = jnp.dot(xh, adst_ref[...],
                            preferred_element_type=jnp.float32)        # [N, H]
            a_src_t = a_src.T      # single small transpose (src idx -> lanes)

            acc = jnp.zeros((n, c), jnp.float32)      # head-sum accumulator
            for h in range(heads):                    # statically unrolled
                # e[i, j] = LeakyReLU(a_dst[i] + a_src[j]) + mask_bias[i, j]
                e = a_dst[:, h:h + 1] + a_src_t[h:h + 1, :]
                e = jnp.where(e > 0, e, negative_slope * e)
                e = e + adj_bias
                e = e - jnp.max(e, axis=-1, keepdims=True)
                p = jnp.exp(e)                        # masked entries -> 0.0
                denom = jnp.maximum(jnp.sum(p, axis=-1, keepdims=True),
                                    jnp.float32(1e-20))
                # EUP reciprocal + one Newton step (~f32 accuracy, frees VALU).
                r = pl.reciprocal(denom, approx=True)
                r = r * (2.0 - denom * r)
                attn = p * r
                acc = acc + jnp.dot(attn, xh[:, h * c:(h + 1) * c],
                                    preferred_element_type=jnp.float32)

            # concat=False -> mean over heads, then bias.
            h_cur = acc * jnp.float32(1.0 / heads) + b_ref[...]
            if layer < num_layers - 1:
                h_cur = jnp.maximum(h_cur, 0.0)       # fused ReLU

        out_ref[...] = h_cur.astype(out_ref.dtype)

    return kernel


def gat_fused(x, adj_bias, proc_params, heads):
    """Whole GATConv stack in one pallas_call."""
    n = x.shape[0]
    num_layers = len(proc_params)
    c_out = proc_params[-1]["bias"].shape[1]

    operands = [x, adj_bias]
    in_specs = [
        pl.BlockSpec(x.shape, lambda i: (0, 0)),
        pl.BlockSpec(adj_bias.shape, lambda i: (0, 0)),
    ]
    for p in proc_params:
        for name in ("weight", "att_src_mat", "att_dst_mat", "bias"):
            arr = p[name]
            operands.append(arr)
            in_specs.append(pl.BlockSpec(arr.shape, lambda i: (0, 0)))

    kernel = make_fused_gat_kernel(num_layers, heads)

    # TODO(synk): for large N, tile the destination-node axis in 128-row blocks
    # as a leading "parallel" grid axis (v7x dual-TC) and store adj as int8 to
    # stay within the 64 MiB v7x VMEM; unnecessary at these shapes.
    return pl.pallas_call(
        kernel,
        out_shape=jax.ShapeDtypeStruct((n, c_out), jnp.float32),
        grid_spec=pltpu.PrefetchScalarGridSpec(
            num_scalar_prefetch=0,
            grid=(1,),
            in_specs=in_specs,
            out_specs=pl.BlockSpec((n, c_out), lambda i: (0, 0)),
        ),
        compiler_params=pltpu.CompilerParams(
            dimension_semantics=("arbitrary",)),
    )(*operands)


# ----------------------------------------------------------------------------
# Parameter init / preprocessing / graph densification.
# ----------------------------------------------------------------------------
def _glorot(key, shape):
    fan_in, fan_out = shape[-2], shape[-1]
    limit = math.sqrt(6.0 / (fan_in + fan_out))
    return jax.random.uniform(key, shape, jnp.float32, -limit, limit)


def init_gat_params(key, dims, heads):
    """Deterministic parameter init matching GATConv shapes (concat=False)."""
    params = []
    for i in range(len(dims) - 1):
        fin, fout = dims[i], dims[i + 1]
        key, kw, ks, kd = jax.random.split(key, 4)
        params.append(dict(
            weight=_glorot(kw, (fin, heads * fout)),     # lin.weight.T
            att_src=_glorot(ks, (heads, fout)),          # att_src [H, C]
            att_dst=_glorot(kd, (heads, fout)),          # att_dst [H, C]
            bias=jnp.zeros((1, fout), jnp.float32),      # bias (zeros)
        ))
    return params


def _block_att_matrix(att):
    """[H, C] -> [H*C, H] with M[h*C + c, h] = att[h, c] (block layout)."""
    h, c = att.shape
    rows = jnp.arange(h * c)
    cols = rows // c
    m = jnp.zeros((h * c, h), jnp.float32)
    return m.at[rows, cols].set(att.reshape(-1))


def preprocess_params(params):
    """Kernel-ready parameter layout (done once, outside jit)."""
    proc = []
    for p in params:
        proc.append(dict(
            weight=p["weight"],
            att_src_mat=_block_att_matrix(p["att_src"]),
            att_dst_mat=_block_att_matrix(p["att_dst"]),
            bias=p["bias"],
        ))
    return proc


def build_adjacency(nbrs, num_nodes):
    """adj[dst, src] = 1 for edges src->dst, plus self loops (PyG default),
    and the additive softmax mask bias (0 where edge, -1e30 otherwise)."""
    src, dst = nbrs[0], nbrs[1]
    adj = jnp.zeros((num_nodes, num_nodes), jnp.float32)
    adj = adj.at[dst, src].set(1.0)
    diag = jnp.arange(num_nodes)
    adj = adj.at[diag, diag].set(1.0)
    adj_bias = jnp.where(adj > 0, 0.0, -1e30).astype(jnp.float32)
    return adj, adj_bias


@functools.partial(jax.jit, static_argnames=("heads", "num_root"))
def gat_forward(x, adj_bias, proc_params, heads, num_root):
    out = gat_fused(x, adj_bias, proc_params, heads)
    return out[:num_root]


# ----------------------------------------------------------------------------
# Pure-JAX reference of the same math (sanity check).
# ----------------------------------------------------------------------------
def gat_reference(x, adj, params, heads, num_root):
    for i, p in enumerate(params):
        n = x.shape[0]
        c = p["weight"].shape[1] // heads
        xh = (x @ p["weight"]).reshape(n, heads, c)               # [N,H,C]
        a_src = jnp.einsum("nhc,hc->nh", xh, p["att_src"])
        a_dst = jnp.einsum("nhc,hc->nh", xh, p["att_dst"])
        e = a_dst[:, None, :] + a_src[None, :, :]                 # [Ndst,Nsrc,H]
        e = jnp.where(e > 0, e, 0.2 * e)
        mask = (adj > 0)[:, :, None]
        e = jnp.where(mask, e, -1e30)
        e = e - jnp.max(e, axis=1, keepdims=True)
        pmat = jnp.where(mask, jnp.exp(e), 0.0)
        attn = pmat / jnp.sum(pmat, axis=1, keepdims=True)
        out = jnp.einsum("ijh,jhc->ihc", attn, xh)                # [N,H,C]
        x = out.mean(axis=1) + p["bias"]
        if i < len(params) - 1:
            x = jax.nn.relu(x)
    return x[:num_root]


if __name__ == "__main__":
    key = jax.random.PRNGKey(0)

    # Small GAT: dims = [16, 32, 8], 10 heads, concat=False, dropout=0.0
    dims = [16, 32, 8]
    heads = 10
    num_nodes = 20
    num_edges = 60
    num_root = 6

    k_x, k_src, k_dst, k_p = jax.random.split(key, 4)
    x = jax.random.normal(k_x, (num_nodes, dims[0]), jnp.float32)
    nbrs = jnp.stack([
        jax.random.randint(k_src, (num_edges,), 0, num_nodes),
        jax.random.randint(k_dst, (num_edges,), 0, num_nodes),
    ])  # [2, E]  row0 = src, row1 = dst (PyG edge_index convention)

    params = init_gat_params(k_p, dims, heads)
    proc_params = preprocess_params(params)
    adj, adj_bias = build_adjacency(nbrs, num_nodes)

    out = gat_forward(x, adj_bias, proc_params, heads, num_root)
    out = jax.block_until_ready(out)

    ref = gat_reference(x, adj, params, heads, num_root)
    assert out.shape == (num_root, dims[-1])
    assert jnp.allclose(out, ref, atol=2e-4, rtol=1e-3), (
        float(jnp.max(jnp.abs(out - ref))))

    print("KERNEL_OK")
</pallas_src>

<mosaic_0001>
module attributes {stable_mosaic.version = 11 : i64} {
  func.func @kernel(%arg0: i32, %arg1: memref<20x16xf32, #tpu.memory_space<vmem>>, %arg2: memref<20x20xf32, #tpu.memory_space<vmem>>, %arg3: memref<16x320xf32, #tpu.memory_space<vmem>>, %arg4: memref<320x10xf32, #tpu.memory_space<vmem>>, %arg5: memref<320x10xf32, #tpu.memory_space<vmem>>, %arg6: memref<1x32xf32, #tpu.memory_space<vmem>>, %arg7: memref<32x80xf32, #tpu.memory_space<vmem>>, %arg8: memref<80x10xf32, #tpu.memory_space<vmem>>, %arg9: memref<80x10xf32, #tpu.memory_space<vmem>>, %arg10: memref<1x8xf32, #tpu.memory_space<vmem>>, %arg11: memref<20x8xf32, #tpu.memory_space<vmem>>) attributes {dimension_semantics = [#tpu.dimension_semantics<arbitrary>], iteration_bounds = array<i64: 1>, scalar_prefetch = 0 : i64, scratch_operands = 0 : i64, tpu.core_type = #tpu.core_type<tc>, window_params = [{pipeline_mode = #tpu.pipeline_mode<synchronous>, transform_indices = @transform_0, window_bounds = array<i64: 20, 16>}, {pipeline_mode = #tpu.pipeline_mode<synchronous>, transform_indices = @transform_1, window_bounds = array<i64: 20, 20>}, {pipeline_mode = #tpu.pipeline_mode<synchronous>, transform_indices = @transform_2, window_bounds = array<i64: 16, 320>}, {pipeline_mode = #tpu.pipeline_mode<synchronous>, transform_indices = @transform_3, window_bounds = array<i64: 320, 10>}, {pipeline_mode = #tpu.pipeline_mode<synchronous>, transform_indices = @transform_4, window_bounds = array<i64: 320, 10>}, {pipeline_mode = #tpu.pipeline_mode<synchronous>, transform_indices = @transform_5, window_bounds = array<i64: 1, 32>}, {pipeline_mode = #tpu.pipeline_mode<synchronous>, transform_indices = @transform_6, window_bounds = array<i64: 32, 80>}, {pipeline_mode = #tpu.pipeline_mode<synchronous>, transform_indices = @transform_7, window_bounds = array<i64: 80, 10>}, {pipeline_mode = #tpu.pipeline_mode<synchronous>, transform_indices = @transform_8, window_bounds = array<i64: 80, 10>}, {pipeline_mode = #tpu.pipeline_mode<synchronous>, transform_indices = @transform_9, window_bounds = array<i64: 1, 8>}, {pipeline_mode = #tpu.pipeline_mode<synchronous>, transform_indices = @transform_10, window_bounds = array<i64: 20, 8>}]} {
    %c0 = arith.constant 0 : index
    %c0_0 = arith.constant 0 : index
    %0 = vector.load %arg2[%c0, %c0_0] : memref<20x20xf32, #tpu.memory_space<vmem>>, vector<20x20xf32>
    %c0_1 = arith.constant 0 : index
    %c0_2 = arith.constant 0 : index
    %1 = vector.load %arg1[%c0_1, %c0_2] : memref<20x16xf32, #tpu.memory_space<vmem>>, vector<20x16xf32>
    %c0_3 = arith.constant 0 : index
    %c0_4 = arith.constant 0 : index
    %2 = vector.load %arg3[%c0_3, %c0_4] : memref<16x320xf32, #tpu.memory_space<vmem>>, vector<16x320xf32>
    %cst = arith.constant dense<0.000000e+00> : vector<20x320xf32>
    %3 = tpu.matmul %1, %2, %cst {dimension_numbers = #tpu.dot_dimension_numbers<[1], [0], [0], [1], [0, 0, 1, 1], [], []>} : vector<20x16xf32>, vector<16x320xf32>, vector<20x320xf32> -> vector<20x320xf32>
    %c0_5 = arith.constant 0 : index
    %c0_6 = arith.constant 0 : index
    %4 = vector.load %arg4[%c0_5, %c0_6] : memref<320x10xf32, #tpu.memory_space<vmem>>, vector<320x10xf32>
    %cst_7 = arith.constant dense<0.000000e+00> : vector<20x10xf32>
    %5 = tpu.matmul %3, %4, %cst_7 {dimension_numbers = #tpu.dot_dimension_numbers<[1], [0], [0], [1], [0, 0, 1, 1], [], []>} : vector<20x320xf32>, vector<320x10xf32>, vector<20x10xf32> -> vector<20x10xf32>
    %c0_8 = arith.constant 0 : index
    %c0_9 = arith.constant 0 : index
    %6 = vector.load %arg5[%c0_8, %c0_9] : memref<320x10xf32, #tpu.memory_space<vmem>>, vector<320x10xf32>
    %cst_10 = arith.constant dense<0.000000e+00> : vector<20x10xf32>
    %7 = tpu.matmul %3, %6, %cst_10 {dimension_numbers = #tpu.dot_dimension_numbers<[1], [0], [0], [1], [0, 0, 1, 1], [], []>} : vector<20x320xf32>, vector<320x10xf32>, vector<20x10xf32> -> vector<20x10xf32>
    %8 = tpu.transpose %5, [1, 0] : vector<20x10xf32> -> vector<10x20xf32>
    %cst_11 = arith.constant 0.000000e+00 : f32
    %9 = vector.broadcast %cst_11 : f32 to vector<20x32xf32>
    %10 = vector.extract_strided_slice %7 {offsets = [0, 0], sizes = [20, 1], strides = [1, 1]} : vector<20x10xf32> to vector<20x1xf32>
    %11 = vector.extract_strided_slice %8 {offsets = [0, 0], sizes = [1, 20], strides = [1, 1]} : vector<10x20xf32> to vector<1x20xf32>
    %12 = vector.broadcast %10 : vector<20x1xf32> to vector<20x20xf32>
    %13 = vector.broadcast %11 : vector<1x20xf32> to vector<20x20xf32>
    %14 = arith.addf %12, %13 : vector<20x20xf32>
    %cst_12 = arith.constant 0.000000e+00 : f32
    %15 = vector.broadcast %cst_12 : f32 to vector<20x20xf32>
    %16 = arith.cmpf ogt, %14, %15 : vector<20x20xf32>
    %cst_13 = arith.constant 2.000000e-01 : f32
    %17 = vector.broadcast %cst_13 : f32 to vector<20x20xf32>
    %18 = arith.mulf %17, %14 : vector<20x20xf32>
    %19 = arith.select %16, %14, %18 : vector<20x20xi1>, vector<20x20xf32>
    %20 = arith.addf %19, %0 : vector<20x20xf32>
    %cst_14 = arith.constant dense<0xFF800000> : vector<20xf32>
    %21 = vector.multi_reduction <maximumf>, %20, %cst_14 [1] : vector<20x20xf32> to vector<20xf32>
    %22 = vector.shape_cast %21 : vector<20xf32> to vector<20x1xf32>
    %23 = vector.broadcast %22 : vector<20x1xf32> to vector<20x20xf32>
    %24 = arith.subf %20, %23 : vector<20x20xf32>
    %25 = math.exp %24 : vector<20x20xf32>
    %cst_15 = arith.constant dense<0.000000e+00> : vector<20xf32>
    %26 = vector.multi_reduction <add>, %25, %cst_15 [1] : vector<20x20xf32> to vector<20xf32>
    %27 = vector.shape_cast %26 : vector<20xf32> to vector<20x1xf32>
    %cst_16 = arith.constant 9.99999968E-21 : f32
    %28 = vector.broadcast %cst_16 : f32 to vector<20x1xf32>
    %29 = arith.maximumf %27, %28 : vector<20x1xf32>
    %30 = tpu.reciprocal %29 {approx = true} : vector<20x1xf32> -> vector<20x1xf32>
    %31 = arith.mulf %29, %30 : vector<20x1xf32>
    %cst_17 = arith.constant 2.000000e+00 : f32
    %32 = vector.broadcast %cst_17 : f32 to vector<20x1xf32>
    %33 = arith.subf %32, %31 : vector<20x1xf32>
    %34 = arith.mulf %30, %33 : vector<20x1xf32>
    %35 = vector.broadcast %34 : vector<20x1xf32> to vector<20x20xf32>
    %36 = arith.mulf %25, %35 : vector<20x20xf32>
    %37 = vector.extract_strided_slice %3 {offsets = [0, 0], sizes = [20, 32], strides = [1, 1]} : vector<20x320xf32> to vector<20x32xf32>
    %cst_18 = arith.constant dense<0.000000e+00> : vector<20x32xf32>
    %38 = tpu.matmul %36, %37, %cst_18 {dimension_numbers = #tpu.dot_dimension_numbers<[1], [0], [0], [1], [0, 0, 1, 1], [], []>} : vector<20x20xf32>, vector<20x32xf32>, vector<20x32xf32> -> vector<20x32xf32>
    %39 = arith.addf %9, %38 : vector<20x32xf32>
    %40 = vector.extract_strided_slice %7 {offsets = [0, 1], sizes = [20, 1], strides = [1, 1]} : vector<20x10xf32> to vector<20x1xf32>
    %41 = vector.extract_strided_slice %8 {offsets = [1, 0], sizes = [1, 20], strides = [1, 1]} : vector<10x20xf32> to vector<1x20xf32>
    %42 = vector.broadcast %40 : vector<20x1xf32> to vector<20x20xf32>
    %43 = vector.broadcast %41 : vector<1x20xf32> to vector<20x20xf32>
    %44 = arith.addf %42, %43 : vector<20x20xf32>
    %cst_19 = arith.constant 0.000000e+00 : f32
    %45 = vector.broadcast %cst_19 : f32 to vector<20x20xf32>
    %46 = arith.cmpf ogt, %44, %45 : vector<20x20xf32>
    %cst_20 = arith.constant 2.000000e-01 : f32
    %47 = vector.broadcast %cst_20 : f32 to vector<20x20xf32>
    %48 = arith.mulf %47, %44 : vector<20x20xf32>
    %49 = arith.select %46, %44, %48 : vector<20x20xi1>, vector<20x20xf32>
    %50 = arith.addf %49, %0 : vector<20x20xf32>
    %cst_21 = arith.constant dense<0xFF800000> : vector<20xf32>
    %51 = vector.multi_reduction <maximumf>, %50, %cst_21 [1] : vector<20x20xf32> to vector<20xf32>
    %52 = vector.shape_cast %51 : vector<20xf32> to vector<20x1xf32>
    %53 = vector.broadcast %52 : vector<20x1xf32> to vector<20x20xf32>
    %54 = arith.subf %50, %53 : vector<20x20xf32>
    %55 = math.exp %54 : vector<20x20xf32>
    %cst_22 = arith.constant dense<0.000000e+00> : vector<20xf32>
    %56 = vector.multi_reduction <add>, %55, %cst_22 [1] : vector<20x20xf32> to vector<20xf32>
    %57 = vector.shape_cast %56 : vector<20xf32> to vector<20x1xf32>
    %cst_23 = arith.constant 9.99999968E-21 : f32
    %58 = vector.broadcast %cst_23 : f32 to vector<20x1xf32>
    %59 = arith.maximumf %57, %58 : vector<20x1xf32>
    %60 = tpu.reciprocal %59 {approx = true} : vector<20x1xf32> -> vector<20x1xf32>
    %61 = arith.mulf %59, %60 : vector<20x1xf32>
    %cst_24 = arith.constant 2.000000e+00 : f32
    %62 = vector.broadcast %cst_24 : f32 to vector<20x1xf32>
    %63 = arith.subf %62, %61 : vector<20x1xf32>
    %64 = arith.mulf %60, %63 : vector<20x1xf32>
    %65 = vector.broadcast %64 : vector<20x1xf32> to vector<20x20xf32>
    %66 = arith.mulf %55, %65 : vector<20x20xf32>
    %67 = vector.extract_strided_slice %3 {offsets = [0, 32], sizes = [20, 32], strides = [1, 1]} : vector<20x320xf32> to vector<20x32xf32>
    %cst_25 = arith.constant dense<0.000000e+00> : vector<20x32xf32>
    %68 = tpu.matmul %66, %67, %cst_25 {dimension_numbers = #tpu.dot_dimension_numbers<[1], [0], [0], [1], [0, 0, 1, 1], [], []>} : vector<20x20xf32>, vector<20x32xf32>, vector<20x32xf32> -> vector<20x32xf32>
    %69 = arith.addf %39, %68 : vector<20x32xf32>
    %70 = vector.extract_strided_slice %7 {offsets = [0, 2], sizes = [20, 1], strides = [1, 1]} : vector<20x10xf32> to vector<20x1xf32>
    %71 = vector.extract_strided_slice %8 {offsets = [2, 0], sizes = [1, 20], strides = [1, 1]} : vector<10x20xf32> to vector<1x20xf32>
    %72 = vector.broadcast %70 : vector<20x1xf32> to vector<20x20xf32>
    %73 = vector.broadcast %71 : vector<1x20xf32> to vector<20x20xf32>
    %74 = arith.addf %72, %73 : vector<20x20xf32>
    %cst_26 = arith.constant 0.000000e+00 : f32
    %75 = vector.broadcast %cst_26 : f32 to vector<20x20xf32>
    %76 = arith.cmpf ogt, %74, %75 : vector<20x20xf32>
    %cst_27 = arith.constant 2.000000e-01 : f32
    %77 = vector.broadcast %cst_27 : f32 to vector<20x20xf32>
    %78 = arith.mulf %77, %74 : vector<20x20xf32>
    %79 = arith.select %76, %74, %78 : vector<20x20xi1>, vector<20x20xf32>
    %80 = arith.addf %79, %0 : vector<20x20xf32>
    %cst_28 = arith.constant dense<0xFF800000> : vector<20xf32>
    %81 = vector.multi_reduction <maximumf>, %80, %cst_28 [1] : vector<20x20xf32> to vector<20xf32>
    %82 = vector.shape_cast %81 : vector<20xf32> to vector<20x1xf32>
    %83 = vector.broadcast %82 : vector<20x1xf32> to vector<20x20xf32>
    %84 = arith.subf %80, %83 : vector<20x20xf32>
    %85 = math.exp %84 : vector<20x20xf32>
    %cst_29 = arith.constant dense<0.000000e+00> : vector<20xf32>
    %86 = vector.multi_reduction <add>, %85, %cst_29 [1] : vector<20x20xf32> to vector<20xf32>
    %87 = vector.shape_cast %86 : vector<20xf32> to vector<20x1xf32>
    %cst_30 = arith.constant 9.99999968E-21 : f32
    %88 = vector.broadcast %cst_30 : f32 to vector<20x1xf32>
    %89 = arith.maximumf %87, %88 : vector<20x1xf32>
    %90 = tpu.reciprocal %89 {approx = true} : vector<20x1xf32> -> vector<20x1xf32>
    %91 = arith.mulf %89, %90 : vector<20x1xf32>
    %cst_31 = arith.constant 2.000000e+00 : f32
    %92 = vector.broadcast %cst_31 : f32 to vector<20x1xf32>
    %93 = arith.subf %92, %91 : vector<20x1xf32>
    %94 = arith.mulf %90, %93 : vector<20x1xf32>
    %95 = vector.broadcast %94 : vector<20x1xf32> to vector<20x20xf32>
    %96 = arith.mulf %85, %95 : vector<20x20xf32>
    %97 = vector.extract_strided_slice %3 {offsets = [0, 64], sizes = [20, 32], strides = [1, 1]} : vector<20x320xf32> to vector<20x32xf32>
    %cst_32 = arith.constant dense<0.000000e+00> : vector<20x32xf32>
    %98 = tpu.matmul %96, %97, %cst_32 {dimension_numbers = #tpu.dot_dimension_numbers<[1], [0], [0], [1], [0, 0, 1, 1], [], []>} : vector<20x20xf32>, vector<20x32xf32>, vector<20x32xf32> -> vector<20x32xf32>
    %99 = arith.addf %69, %98 : vector<20x32xf32>
    %100 = vector.extract_strided_slice %7 {offsets = [0, 3], sizes = [20, 1], strides = [1, 1]} : vector<20x10xf32> to vector<20x1xf32>
    %101 = vector.extract_strided_slice %8 {offsets = [3, 0], sizes = [1, 20], strides = [1, 1]} : vector<10x20xf32> to vector<1x20xf32>
    %102 = vector.broadcast %100 : vector<20x1xf32> to vector<20x20xf32>
    %103 = vector.broadcast %101 : vector<1x20xf32> to vector<20x20xf32>
    %104 = arith.addf %102, %103 : vector<20x20xf32>
    %cst_33 = arith.constant 0.000000e+00 : f32
    %105 = vector.broadcast %cst_33 : f32 to vector<20x20xf32>
    %106 = arith.cmpf ogt, %104, %105 : vector<20x20xf32>
    %cst_34 = arith.constant 2.000000e-01 : f32
    %107 = vector.broadcast %cst_34 : f32 to vector<20x20xf32>
    %108 = arith.mulf %107, %104 : vector<20x20xf32>
    %109 = arith.select %106, %104, %108 : vector<20x20xi1>, vector<20x20xf32>
    %110 = arith.addf %109, %0 : vector<20x20xf32>
    %cst_35 = arith.constant dense<0xFF800000> : vector<20xf32>
    %111 = vector.multi_reduction <maximumf>, %110, %cst_35 [1] : vector<20x20xf32> to vector<20xf32>
    %112 = vector.shape_cast %111 : vector<20xf32> to vector<20x1xf32>
    %113 = vector.broadcast %112 : vector<20x1xf32> to vector<20x20xf32>
    %114 = arith.subf %110, %113 : vector<20x20xf32>
    %115 = math.exp %114 : vector<20x20xf32>
    %cst_36 = arith.constant dense<0.000000e+00> : vector<20xf32>
    %116 = vector.multi_reduction <add>, %115, %cst_36 [1] : vector<20x20xf32> to vector<20xf32>
    %117 = vector.shape_cast %116 : vector<20xf32> to vector<20x1xf32>
    %cst_37 = arith.constant 9.99999968E-21 : f32
    %118 = vector.broadcast %cst_37 : f32 to vector<20x1xf32>
    %119 = arith.maximumf %117, %118 : vector<20x1xf32>
    %120 = tpu.reciprocal %119 {approx = true} : vector<20x1xf32> -> vector<20x1xf32>
    %121 = arith.mulf %119, %120 : vector<20x1xf32>
    %cst_38 = arith.constant 2.000000e+00 : f32
    %122 = vector.broadcast %cst_38 : f32 to vector<20x1xf32>
    %123 = arith.subf %122, %121 : vector<20x1xf32>
    %124 = arith.mulf %120, %123 : vector<20x1xf32>
    %125 = vector.broadcast %124 : vector<20x1xf32> to vector<20x20xf32>
    %126 = arith.mulf %115, %125 : vector<20x20xf32>
    %127 = vector.extract_strided_slice %3 {offsets = [0, 96], sizes = [20, 32], strides = [1, 1]} : vector<20x320xf32> to vector<20x32xf32>
    %cst_39 = arith.constant dense<0.000000e+00> : vector<20x32xf32>
    %128 = tpu.matmul %126, %127, %cst_39 {dimension_numbers = #tpu.dot_dimension_numbers<[1], [0], [0], [1], [0, 0, 1, 1], [], []>} : vector<20x20xf32>, vector<20x32xf32>, vector<20x32xf32> -> vector<20x32xf32>
    %129 = arith.addf %99, %128 : vector<20x32xf32>
    %130 = vector.extract_strided_slice %7 {offsets = [0, 4], sizes = [20, 1], strides = [1, 1]} : vector<20x10xf32> to vector<20x1xf32>
    %131 = vector.extract_strided_slice %8 {offsets = [4, 0], sizes = [1, 20], strides = [1, 1]} : vector<10x20xf32> to vector<1x20xf32>
    %132 = vector.broadcast %130 : vector<20x1xf32> to vector<20x20xf32>
    %133 = vector.broadcast %131 : vector<1x20xf32> to vector<20x20xf32>
    %134 = arith.addf %132, %133 : vector<20x20xf32>
    %cst_40 = arith.constant 0.000000e+00 : f32
    %135 = vector.broadcast %cst_40 : f32 to vector<20x20xf32>
    %136 = arith.cmpf ogt, %134, %135 : vector<20x20xf32>
    %cst_41 = arith.constant 2.000000e-01 : f32
    %137 = vector.broadcast %cst_41 : f32 to vector<20x20xf32>
    %138 = arith.mulf %137, %134 : vector<20x20xf32>
    %139 = arith.select %136, %134, %138 : vector<20x20xi1>, vector<20x20xf32>
    %140 = arith.addf %139, %0 : vector<20x20xf32>
    %cst_42 = arith.constant dense<0xFF800000> : vector<20xf32>
    %141 = vector.multi_reduction <maximumf>, %140, %cst_42 [1] : vector<20x20xf32> to vector<20xf32>
    %142 = vector.shape_cast %141 : vector<20xf32> to vector<20x1xf32>
    %143 = vector.broadcast %142 : vector<20x1xf32> to vector<20x20xf32>
    %144 = arith.subf %140, %143 : vector<20x20xf32>
    %145 = math.exp %144 : vector<20x20xf32>
    %cst_43 = arith.constant dense<0.000000e+00> : vector<20xf32>
    %146 = vector.multi_reduction <add>, %145, %cst_43 [1] : vector<20x20xf32> to vector<20xf32>
    %147 = vector.shape_cast %146 : vector<20xf32> to vector<20x1xf32>
    %cst_44 = arith.constant 9.99999968E-21 : f32
    %148 = vector.broadcast %cst_44 : f32 to vector<20x1xf32>
    %149 = arith.maximumf %147, %148 : vector<20x1xf32>
    %150 = tpu.reciprocal %149 {approx = true} : vector<20x1xf32> -> vector<20x1xf32>
    %151 = arith.mulf %149, %150 : vector<20x1xf32>
    %cst_45 = arith.constant 2.000000e+00 : f32
    %152 = vector.broadcast %cst_45 : f32 to vector<20x1xf32>
    %153 = arith.subf %152, %151 : vector<20x1xf32>
    %154 = arith.mulf %150, %153 : vector<20x1xf32>
    %155 = vector.broadcast %154 : vector<20x1xf32> to vector<20x20xf32>
    %156 = arith.mulf %145, %155 : vector<20x20xf32>
    %157 = vector.extract_strided_slice %3 {offsets = [0, 128], sizes = [20, 32], strides = [1, 1]} : vector<20x320xf32> to vector<20x32xf32>
    %cst_46 = arith.constant dense<0.000000e+00> : vector<20x32xf32>
    %158 = tpu.matmul %156, %157, %cst_46 {dimension_numbers = #tpu.dot_dimension_numbers<[1], [0], [0], [1], [0, 0, 1, 1], [], []>} : vector<20x20xf32>, vector<20x32xf32>, vector<20x32xf32> -> vector<20x32xf32>
    %159 = arith.addf %129, %158 : vector<20x32xf32>
    %160 = vector.extract_strided_slice %7 {offsets = [0, 5], sizes = [20, 1], strides = [1, 1]} : vector<20x10xf32> to vector<20x1xf32>
    %161 = vector.extract_strided_slice %8 {offsets = [5, 0], sizes = [1, 20], strides = [1, 1]} : vector<10x20xf32> to vector<1x20xf32>
    %162 = vector.broadcast %160 : vector<20x1xf32> to vector<20x20xf32>
    %163 = vector.broadcast %161 : vector<1x20xf32> to vector<20x20xf32>
    %164 = arith.addf %162, %163 : vector<20x20xf32>
    %cst_47 = arith.constant 0.000000e+00 : f32
    %165 = vector.broadcast %cst_47 : f32 to vector<20x20xf32>
    %166 = arith.cmpf ogt, %164, %165 : vector<20x20xf32>
    %cst_48 = arith.constant 2.000000e-01 : f32
    %167 = vector.broadcast %cst_48 : f32 to vector<20x20xf32>
    %168 = arith.mulf %167, %164 : vector<20x20xf32>
    %169 = arith.select %166, %164, %168 : vector<20x20xi1>, vector<20x20xf32>
    %170 = arith.addf %169, %0 : vector<20x20xf32>
    %cst_49 = arith.constant dense<0xFF800000> : vector<20xf32>
    %171 = vector.multi_reduction <maximumf>, %170, %cst_49 [1] : vector<20x20xf32> to vector<20xf32>
    %172 = vector.shape_cast %171 : vector<20xf32> to vector<20x1xf32>
    %173 = vector.broadcast %172 : vector<20x1xf32> to vector<20x20xf32>
    %174 = arith.subf %170, %173 : vector<20x20xf32>
    %175 = math.exp %174 : vector<20x20xf32>
    %cst_50 = arith.constant dense<0.000000e+00> : vector<20xf32>
    %176 = vector.multi_reduction <add>, %175, %cst_50 [1] : vector<20x20xf32> to vector<20xf32>
    %177 = vector.shape_cast %176 : vector<20xf32> to vector<20x1xf32>
    %cst_51 = arith.constant 9.99999968E-21 : f32
    %178 = vector.broadcast %cst_51 : f32 to vector<20x1xf32>
    %179 = arith.maximumf %177, %178 : vector<20x1xf32>
    %180 = tpu.reciprocal %179 {approx = true} : vector<20x1xf32> -> vector<20x1xf32>
    %181 = arith.mulf %179, %180 : vector<20x1xf32>
    %cst_52 = arith.constant 2.000000e+00 : f32
    %182 = vector.broadcast %cst_52 : f32 to vector<20x1xf32>
    %183 = arith.subf %182, %181 : vector<20x1xf32>
    %184 = arith.mulf %180, %183 : vector<20x1xf32>
    %185 = vector.broadcast %184 : vector<20x1xf32> to vector<20x20xf32>
    %186 = arith.mulf %175, %185 : vector<20x20xf32>
    %187 = vector.extract_strided_slice %3 {offsets = [0, 160], sizes = [20, 32], strides = [1, 1]} : vector<20x320xf32> to vector<20x32xf32>
    %cst_53 = arith.constant dense<0.000000e+00> : vector<20x32xf32>
    %188 = tpu.matmul %186, %187, %cst_53 {dimension_numbers = #tpu.dot_dimension_numbers<[1], [0], [0], [1], [0, 0, 1, 1], [], []>} : vector<20x20xf32>, vector<20x32xf32>, vector<20x32xf32> -> vector<20x32xf32>
    %189 = arith.addf %159, %188 : vector<20x32xf32>
    %190 = vector.extract_strided_slice %7 {offsets = [0, 6], sizes = [20, 1], strides = [1, 1]} : vector<20x10xf32> to vector<20x1xf32>
    %191 = vector.extract_strided_slice %8 {offsets = [6, 0], sizes = [1, 20], strides = [1, 1]} : vector<10x20xf32> to vector<1x20xf32>
    %192 = vector.broadcast %190 : vector<20x1xf32> to vector<20x20xf32>
    %193 = vector.broadcast %191 : vector<1x20xf32> to vector<20x20xf32>
    %194 = arith.addf %192, %193 : vector<20x20xf32>
    %cst_54 = arith.constant 0.000000e+00 : f32
    %195 = vector.broadcast %cst_54 : f32 to vector<20x20xf32>
    %196 = arith.cmpf ogt, %194, %195 : vector<20x20xf32>
    %cst_55 = arith.constant 2.000000e-01 : f32
    %197 = vector.broadcast %cst_55 : f32 to vector<20x20xf32>
    %198 = arith.mulf %197, %194 : vector<20x20xf32>
    %199 = arith.select %196, %194, %198 : vector<20x20xi1>, vector<20x20xf32>
    %200 = arith.addf %199, %0 : vector<20x20xf32>
    %cst_56 = arith.constant dense<0xFF800000> : vector<20xf32>
    %201 = vector.multi_reduction <maximumf>, %200, %cst_56 [1] : vector<20x20xf32> to vector<20xf32>
    %202 = vector.shape_cast %201 : vector<20xf32> to vector<20x1xf32>
    %203 = vector.broadcast %202 : vector<20x1xf32> to vector<20x20xf32>
    %204 = arith.subf %200, %203 : vector<20x20xf32>
    %205 = math.exp %204 : vector<20x20xf32>
    %cst_57 = arith.constant dense<0.000000e+00> : vector<20xf32>
    %206 = vector.multi_reduction <add>, %205, %cst_57 [1] : vector<20x20xf32> to vector<20xf32>
    %207 = vector.shape_cast %206 : vector<20xf32> to vector<20x1xf32>
    %cst_58 = arith.constant 9.99999968E-21 : f32
    %208 = vector.broadcast %cst_58 : f32 to vector<20x1xf32>
    %209 = arith.maximumf %207, %208 : vector<20x1xf32>
    %210 = tpu.reciprocal %209 {approx = true} : vector<20x1xf32> -> vector<20x1xf32>
    %211 = arith.mulf %209, %210 : vector<20x1xf32>
    %cst_59 = arith.constant 2.000000e+00 : f32
    %212 = vector.broadcast %cst_59 : f32 to vector<20x1xf32>
    %213 = arith.subf %212, %211 : vector<20x1xf32>
    %214 = arith.mulf %210, %213 : vector<20x1xf32>
    %215 = vector.broadcast %214 : vector<20x1xf32> to vector<20x20xf32>
    %216 = arith.mulf %205, %215 : vector<20x20xf32>
    %217 = vector.extract_strided_slice %3 {offsets = [0, 192], sizes = [20, 32], strides = [1, 1]} : vector<20x320xf32> to vector<20x32xf32>
    %cst_60 = arith.constant dense<0.000000e+00> : vector<20x32xf32>
    %218 = tpu.matmul %216, %217, %cst_60 {dimension_numbers = #tpu.dot_dimension_numbers<[1], [0], [0], [1], [0, 0, 1, 1], [], []>} : vector<20x20xf32>, vector<20x32xf32>, vector<20x32xf32> -> vector<20x32xf32>
    %219 = arith.addf %189, %218 : vector<20x32xf32>
    %220 = vector.extract_strided_slice %7 {offsets = [0, 7], sizes = [20, 1], strides = [1, 1]} : vector<20x10xf32> to vector<20x1xf32>
    %221 = vector.extract_strided_slice %8 {offsets = [7, 0], sizes = [1, 20], strides = [1, 1]} : vector<10x20xf32> to vector<1x20xf32>
    %222 = vector.broadcast %220 : vector<20x1xf32> to vector<20x20xf32>
    %223 = vector.broadcast %221 : vector<1x20xf32> to vector<20x20xf32>
    %224 = arith.addf %222, %223 : vector<20x20xf32>
    %cst_61 = arith.constant 0.000000e+00 : f32
    %225 = vector.broadcast %cst_61 : f32 to vector<20x20xf32>
    %226 = arith.cmpf ogt, %224, %225 : vector<20x20xf32>
    %cst_62 = arith.constant 2.000000e-01 : f32
    %227 = vector.broadcast %cst_62 : f32 to vector<20x20xf32>
    %228 = arith.mulf %227, %224 : vector<20x20xf32>
    %229 = arith.select %226, %224, %228 : vector<20x20xi1>, vector<20x20xf32>
    %230 = arith.addf %229, %0 : vector<20x20xf32>
    %cst_63 = arith.constant dense<0xFF800000> : vector<20xf32>
    %231 = vector.multi_reduction <maximumf>, %230, %cst_63 [1] : vector<20x20xf32> to vector<20xf32>
    %232 = vector.shape_cast %231 : vector<20xf32> to vector<20x1xf32>
    %233 = vector.broadcast %232 : vector<20x1xf32> to vector<20x20xf32>
    %234 = arith.subf %230, %233 : vector<20x20xf32>
    %235 = math.exp %234 : vector<20x20xf32>
    %cst_64 = arith.constant dense<0.000000e+00> : vector<20xf32>
    %236 = vector.multi_reduction <add>, %235, %cst_64 [1] : vector<20x20xf32> to vector<20xf32>
    %237 = vector.shape_cast %236 : vector<20xf32> to vector<20x1xf32>
    %cst_65 = arith.constant 9.99999968E-21 : f32
    %238 = vector.broadcast %cst_65 : f32 to vector<20x1xf32>
    %239 = arith.maximumf %237, %238 : vector<20x1xf32>
    %240 = tpu.reciprocal %239 {approx = true} : vector<20x1xf32> -> vector<20x1xf32>
    %241 = arith.mulf %239, %240 : vector<20x1xf32>
    %cst_66 = arith.constant 2.000000e+00 : f32
    %242 = vector.broadcast %cst_66 : f32 to vector<20x1xf32>
    %243 = arith.subf %242, %241 : vector<20x1xf32>
    %244 = arith.mulf %240, %243 : vector<20x1xf32>
    %245 = vector.broadcast %244 : vector<20x1xf32> to vector<20x20xf32>
    %246 = arith.mulf %235, %245 : vector<20x20xf32>
    %247 = vector.extract_strided_slice %3 {offsets = [0, 224], sizes = [20, 32], strides = [1, 1]} : vector<20x320xf32> to vector<20x32xf32>
    %cst_67 = arith.constant dense<0.000000e+00> : vector<20x32xf32>
    %248 = tpu.matmul %246, %247, %cst_67 {dimension_numbers = #tpu.dot_dimension_numbers<[1], [0], [0], [1], [0, 0, 1, 1], [], []>} : vector<20x20xf32>, vector<20x32xf32>, vector<20x32xf32> -> vector<20x32xf32>
    %249 = arith.addf %219, %248 : vector<20x32xf32>
    %250 = vector.extract_strided_slice %7 {offsets = [0, 8], sizes = [20, 1], strides = [1, 1]} : vector<20x10xf32> to vector<20x1xf32>
    %251 = vector.extract_strided_slice %8 {offsets = [8, 0], sizes = [1, 20], strides = [1, 1]} : vector<10x20xf32> to vector<1x20xf32>
    %252 = vector.broadcast %250 : vector<20x1xf32> to vector<20x20xf32>
    %253 = vector.broadcast %251 : vector<1x20xf32> to vector<20x20xf32>
    %254 = arith.addf %252, %253 : vector<20x20xf32>
    %cst_68 = arith.constant 0.000000e+00 : f32
    %255 = vector.broadcast %cst_68 : f32 to vector<20x20xf32>
    %256 = arith.cmpf ogt, %254, %255 : vector<20x20xf32>
    %cst_69 = arith.constant 2.000000e-01 : f32
    %257 = vector.broadcast %cst_69 : f32 to vector<20x20xf32>
    %258 = arith.mulf %257, %254 : vector<20x20xf32>
    %259 = arith.select %256, %254, %258 : vector<20x20xi1>, vector<20x20xf32>
    %260 = arith.addf %259, %0 : vector<20x20xf32>
    %cst_70 = arith.constant dense<0xFF800000> : vector<20xf32>
    %261 = vector.multi_reduction <maximumf>, %260, %cst_70 [1] : vector<20x20xf32> to vector<20xf32>
    %262 = vector.shape_cast %261 : vector<20xf32> to vector<20x1xf32>
    %263 = vector.broadcast %262 : vector<20x1xf32> to vector<20x20xf32>
    %264 = arith.subf %260, %263 : vector<20x20xf32>
    %265 = math.exp %264 : vector<20x20xf32>
    %cst_71 = arith.constant dense<0.000000e+00> : vector<20xf32>
    %266 = vector.multi_reduction <add>, %265, %cst_71 [1] : vector<20x20xf32> to vector<20xf32>
    %267 = vector.shape_cast %266 : vector<20xf32> to vector<20x1xf32>
    %cst_72 = arith.constant 9.99999968E-21 : f32
    %268 = vector.broadcast %cst_72 : f32 to vector<20x1xf32>
    %269 = arith.maximumf %267, %268 : vector<20x1xf32>
    %270 = tpu.reciprocal %269 {approx = true} : vector<20x1xf32> -> vector<20x1xf32>
    %271 = arith.mulf %269, %270 : vector<20x1xf32>
    %cst_73 = arith.constant 2.000000e+00 : f32
    %272 = vector.broadcast %cst_73 : f32 to vector<20x1xf32>
    %273 = arith.subf %272, %271 : vector<20x1xf32>
    %274 = arith.mulf %270, %273 : vector<20x1xf32>
    %275 = vector.broadcast %274 : vector<20x1xf32> to vector<20x20xf32>
    %276 = arith.mulf %265, %275 : vector<20x20xf32>
    %277 = vector.extract_strided_slice %3 {offsets = [0, 256], sizes = [20, 32], strides = [1, 1]} : vector<20x320xf32> to vector<20x32xf32>
    %cst_74 = arith.constant dense<0.000000e+00> : vector<20x32xf32>
    %278 = tpu.matmul %276, %277, %cst_74 {dimension_numbers = #tpu.dot_dimension_numbers<[1], [0], [0], [1], [0, 0, 1, 1], [], []>} : vector<20x20xf32>, vector<20x32xf32>, vector<20x32xf32> -> vector<20x32xf32>
    %279 = arith.addf %249, %278 : vector<20x32xf32>
    %280 = vector.extract_strided_slice %7 {offsets = [0, 9], sizes = [20, 1], strides = [1, 1]} : vector<20x10xf32> to vector<20x1xf32>
    %281 = vector.extract_strided_slice %8 {offsets = [9, 0], sizes = [1, 20], strides = [1, 1]} : vector<10x20xf32> to vector<1x20xf32>
    %282 = vector.broadcast %280 : vector<20x1xf32> to vector<20x20xf32>
    %283 = vector.broadcast %281 : vector<1x20xf32> to vector<20x20xf32>
    %284 = arith.addf %282, %283 : vector<20x20xf32>
    %cst_75 = arith.constant 0.000000e+00 : f32
    %285 = vector.broadcast %cst_75 : f32 to vector<20x20xf32>
    %286 = arith.cmpf ogt, %284, %285 : vector<20x20xf32>
    %cst_76 = arith.constant 2.000000e-01 : f32
    %287 = vector.broadcast %cst_76 : f32 to vector<20x20xf32>
    %288 = arith.mulf %287, %284 : vector<20x20xf32>
    %289 = arith.select %286, %284, %288 : vector<20x20xi1>, vector<20x20xf32>
    %290 = arith.addf %289, %0 : vector<20x20xf32>
    %cst_77 = arith.constant dense<0xFF800000> : vector<20xf32>
    %291 = vector.multi_reduction <maximumf>, %290, %cst_77 [1] : vector<20x20xf32> to vector<20xf32>
    %292 = vector.shape_cast %291 : vector<20xf32> to vector<20x1xf32>
    %293 = vector.broadcast %292 : vector<20x1xf32> to vector<20x20xf32>
    %294 = arith.subf %290, %293 : vector<20x20xf32>
    %295 = math.exp %294 : vector<20x20xf32>
    %cst_78 = arith.constant dense<0.000000e+00> : vector<20xf32>
    %296 = vector.multi_reduction <add>, %295, %cst_78 [1] : vector<20x20xf32> to vector<20xf32>
    %297 = vector.shape_cast %296 : vector<20xf32> to vector<20x1xf32>
    %cst_79 = arith.constant 9.99999968E-21 : f32
    %298 = vector.broadcast %cst_79 : f32 to vector<20x1xf32>
    %299 = arith.maximumf %297, %298 : vector<20x1xf32>
    %300 = tpu.reciprocal %299 {approx = true} : vector<20x1xf32> -> vector<20x1xf32>
    %301 = arith.mulf %299, %300 : vector<20x1xf32>
    %cst_80 = arith.constant 2.000000e+00 : f32
    %302 = vector.broadcast %cst_80 : f32 to vector<20x1xf32>
    %303 = arith.subf %302, %301 : vector<20x1xf32>
    %304 = arith.mulf %300, %303 : vector<20x1xf32>
    %305 = vector.broadcast %304 : vector<20x1xf32> to vector<20x20xf32>
    %306 = arith.mulf %295, %305 : vector<20x20xf32>
    %307 = vector.extract_strided_slice %3 {offsets = [0, 288], sizes = [20, 32], strides = [1, 1]} : vector<20x320xf32> to vector<20x32xf32>
    %cst_81 = arith.constant dense<0.000000e+00> : vector<20x32xf32>
    %308 = tpu.matmul %306, %307, %cst_81 {dimension_numbers = #tpu.dot_dimension_numbers<[1], [0], [0], [1], [0, 0, 1, 1], [], []>} : vector<20x20xf32>, vector<20x32xf32>, vector<20x32xf32> -> vector<20x32xf32>
    %309 = arith.addf %279, %308 : vector<20x32xf32>
    %cst_82 = arith.constant 1.000000e-01 : f32
    %310 = vector.broadcast %cst_82 : f32 to vector<20x32xf32>
    %311 = arith.mulf %309, %310 : vector<20x32xf32>
    %c0_83 = arith.constant 0 : index
    %c0_84 = arith.constant 0 : index
    %312 = vector.load %arg6[%c0_83, %c0_84] : memref<1x32xf32, #tpu.memory_space<vmem>>, vector<1x32xf32>
    %313 = vector.broadcast %312 : vector<1x32xf32> to vector<20x32xf32>
    %314 = arith.addf %311, %313 : vector<20x32xf32>
    %cst_85 = arith.constant 0.000000e+00 : f32
    %315 = vector.broadcast %cst_85 : f32 to vector<20x32xf32>
    %316 = arith.maximumf %314, %315 : vector<20x32xf32>
    %c0_86 = arith.constant 0 : index
    %c0_87 = arith.constant 0 : index
    %317 = vector.load %arg7[%c0_86, %c0_87] : memref<32x80xf32, #tpu.memory_space<vmem>>, vector<32x80xf32>
    %cst_88 = arith.constant dense<0.000000e+00> : vector<20x80xf32>
    %318 = tpu.matmul %316, %317, %cst_88 {dimension_numbers = #tpu.dot_dimension_numbers<[1], [0], [0], [1], [0, 0, 1, 1], [], []>} : vector<20x32xf32>, vector<32x80xf32>, vector<20x80xf32> -> vector<20x80xf32>
    %c0_89 = arith.constant 0 : index
    %c0_90 = arith.constant 0 : index
    %319 = vector.load %arg8[%c0_89, %c0_90] : memref<80x10xf32, #tpu.memory_space<vmem>>, vector<80x10xf32>
    %cst_91 = arith.constant dense<0.000000e+00> : vector<20x10xf32>
    %320 = tpu.matmul %318, %319, %cst_91 {dimension_numbers = #tpu.dot_dimension_numbers<[1], [0], [0], [1], [0, 0, 1, 1], [], []>} : vector<20x80xf32>, vector<80x10xf32>, vector<20x10xf32> -> vector<20x10xf32>
    %c0_92 = arith.constant 0 : index
    %c0_93 = arith.constant 0 : index
    %321 = vector.load %arg9[%c0_92, %c0_93] : memref<80x10xf32, #tpu.memory_space<vmem>>, vector<80x10xf32>
    %cst_94 = arith.constant dense<0.000000e+00> : vector<20x10xf32>
    %322 = tpu.matmul %318, %321, %cst_94 {dimension_numbers = #tpu.dot_dimension_numbers<[1], [0], [0], [1], [0, 0, 1, 1], [], []>} : vector<20x80xf32>, vector<80x10xf32>, vector<20x10xf32> -> vector<20x10xf32>
    %323 = tpu.transpose %320, [1, 0] : vector<20x10xf32> -> vector<10x20xf32>
    %cst_95 = arith.constant 0.000000e+00 : f32
    %324 = vector.broadcast %cst_95 : f32 to vector<20x8xf32>
    %325 = vector.extract_strided_slice %322 {offsets = [0, 0], sizes = [20, 1], strides = [1, 1]} : vector<20x10xf32> to vector<20x1xf32>
    %326 = vector.extract_strided_slice %323 {offsets = [0, 0], sizes = [1, 20], strides = [1, 1]} : vector<10x20xf32> to vector<1x20xf32>
    %327 = vector.broadcast %325 : vector<20x1xf32> to vector<20x20xf32>
    %328 = vector.broadcast %326 : vector<1x20xf32> to vector<20x20xf32>
    %329 = arith.addf %327, %328 : vector<20x20xf32>
    %cst_96 = arith.constant 0.000000e+00 : f32
    %330 = vector.broadcast %cst_96 : f32 to vector<20x20xf32>
    %331 = arith.cmpf ogt, %329, %330 : vector<20x20xf32>
    %cst_97 = arith.constant 2.000000e-01 : f32
    %332 = vector.broadcast %cst_97 : f32 to vector<20x20xf32>
    %333 = arith.mulf %332, %329 : vector<20x20xf32>
    %334 = arith.select %331, %329, %333 : vector<20x20xi1>, vector<20x20xf32>
    %335 = arith.addf %334, %0 : vector<20x20xf32>
    %cst_98 = arith.constant dense<0xFF800000> : vector<20xf32>
    %336 = vector.multi_reduction <maximumf>, %335, %cst_98 [1] : vector<20x20xf32> to vector<20xf32>
    %337 = vector.shape_cast %336 : vector<20xf32> to vector<20x1xf32>
    %338 = vector.broadcast %337 : vector<20x1xf32> to vector<20x20xf32>
    %339 = arith.subf %335, %338 : vector<20x20xf32>
    %340 = math.exp %339 : vector<20x20xf32>
    %cst_99 = arith.constant dense<0.000000e+00> : vector<20xf32>
    %341 = vector.multi_reduction <add>, %340, %cst_99 [1] : vector<20x20xf32> to vector<20xf32>
    %342 = vector.shape_cast %341 : vector<20xf32> to vector<20x1xf32>
    %cst_100 = arith.constant 9.99999968E-21 : f32
    %343 = vector.broadcast %cst_100 : f32 to vector<20x1xf32>
    %344 = arith.maximumf %342, %343 : vector<20x1xf32>
    %345 = tpu.reciprocal %344 {approx = true} : vector<20x1xf32> -> vector<20x1xf32>
    %346 = arith.mulf %344, %345 : vector<20x1xf32>
    %cst_101 = arith.constant 2.000000e+00 : f32
    %347 = vector.broadcast %cst_101 : f32 to vector<20x1xf32>
    %348 = arith.subf %347, %346 : vector<20x1xf32>
    %349 = arith.mulf %345, %348 : vector<20x1xf32>
    %350 = vector.broadcast %349 : vector<20x1xf32> to vector<20x20xf32>
    %351 = arith.mulf %340, %350 : vector<20x20xf32>
    %352 = vector.extract_strided_slice %318 {offsets = [0, 0], sizes = [20, 8], strides = [1, 1]} : vector<20x80xf32> to vector<20x8xf32>
    %cst_102 = arith.constant dense<0.000000e+00> : vector<20x8xf32>
    %353 = tpu.matmul %351, %352, %cst_102 {dimension_numbers = #tpu.dot_dimension_numbers<[1], [0], [0], [1], [0, 0, 1, 1], [], []>} : vector<20x20xf32>, vector<20x8xf32>, vector<20x8xf32> -> vector<20x8xf32>
    %354 = arith.addf %324, %353 : vector<20x8xf32>
    %355 = vector.extract_strided_slice %322 {offsets = [0, 1], sizes = [20, 1], strides = [1, 1]} : vector<20x10xf32> to vector<20x1xf32>
    %356 = vector.extract_strided_slice %323 {offsets = [1, 0], sizes = [1, 20], strides = [1, 1]} : vector<10x20xf32> to vector<1x20xf32>
    %357 = vector.broadcast %355 : vector<20x1xf32> to vector<20x20xf32>
    %358 = vector.broadcast %356 : vector<1x20xf32> to vector<20x20xf32>
    %359 = arith.addf %357, %358 : vector<20x20xf32>
    %cst_103 = arith.constant 0.000000e+00 : f32
    %360 = vector.broadcast %cst_103 : f32 to vector<20x20xf32>
    %361 = arith.cmpf ogt, %359, %360 : vector<20x20xf32>
    %cst_104 = arith.constant 2.000000e-01 : f32
    %362 = vector.broadcast %cst_104 : f32 to vector<20x20xf32>
    %363 = arith.mulf %362, %359 : vector<20x20xf32>
    %364 = arith.select %361, %359, %363 : vector<20x20xi1>, vector<20x20xf32>
    %365 = arith.addf %364, %0 : vector<20x20xf32>
    %cst_105 = arith.constant dense<0xFF800000> : vector<20xf32>
    %366 = vector.multi_reduction <maximumf>, %365, %cst_105 [1] : vector<20x20xf32> to vector<20xf32>
    %367 = vector.shape_cast %366 : vector<20xf32> to vector<20x1xf32>
    %368 = vector.broadcast %367 : vector<20x1xf32> to vector<20x20xf32>
    %369 = arith.subf %365, %368 : vector<20x20xf32>
    %370 = math.exp %369 : vector<20x20xf32>
    %cst_106 = arith.constant dense<0.000000e+00> : vector<20xf32>
    %371 = vector.multi_reduction <add>, %370, %cst_106 [1] : vector<20x20xf32> to vector<20xf32>
    %372 = vector.shape_cast %371 : vector<20xf32> to vector<20x1xf32>
    %cst_107 = arith.constant 9.99999968E-21 : f32
    %373 = vector.broadcast %cst_107 : f32 to vector<20x1xf32>
    %374 = arith.maximumf %372, %373 : vector<20x1xf32>
    %375 = tpu.reciprocal %374 {approx = true} : vector<20x1xf32> -> vector<20x1xf32>
    %376 = arith.mulf %374, %375 : vector<20x1xf32>
    %cst_108 = arith.constant 2.000000e+00 : f32
    %377 = vector.broadcast %cst_108 : f32 to vector<20x1xf32>
    %378 = arith.subf %377, %376 : vector<20x1xf32>
    %379 = arith.mulf %375, %378 : vector<20x1xf32>
    %380 = vector.broadcast %379 : vector<20x1xf32> to vector<20x20xf32>
    %381 = arith.mulf %370, %380 : vector<20x20xf32>
    %382 = vector.extract_strided_slice %318 {offsets = [0, 8], sizes = [20, 8], strides = [1, 1]} : vector<20x80xf32> to vector<20x8xf32>
    %cst_109 = arith.constant dense<0.000000e+00> : vector<20x8xf32>
    %383 = tpu.matmul %381, %382, %cst_109 {dimension_numbers = #tpu.dot_dimension_numbers<[1], [0], [0], [1], [0, 0, 1, 1], [], []>} : vector<20x20xf32>, vector<20x8xf32>, vector<20x8xf32> -> vector<20x8xf32>
    %384 = arith.addf %354, %383 : vector<20x8xf32>
    %385 = vector.extract_strided_slice %322 {offsets = [0, 2], sizes = [20, 1], strides = [1, 1]} : vector<20x10xf32> to vector<20x1xf32>
    %386 = vector.extract_strided_slice %323 {offsets = [2, 0], sizes = [1, 20], strides = [1, 1]} : vector<10x20xf32> to vector<1x20xf32>
    %387 = vector.broadcast %385 : vector<20x1xf32> to vector<20x20xf32>
    %388 = vector.broadcast %386 : vector<1x20xf32> to vector<20x20xf32>
    %389 = arith.addf %387, %388 : vector<20x20xf32>
    %cst_110 = arith.constant 0.000000e+00 : f32
    %390 = vector.broadcast %cst_110 : f32 to vector<20x20xf32>
    %391 = arith.cmpf ogt, %389, %390 : vector<20x20xf32>
    %cst_111 = arith.constant 2.000000e-01 : f32
    %392 = vector.broadcast %cst_111 : f32 to vector<20x20xf32>
    %393 = arith.mulf %392, %389 : vector<20x20xf32>
    %394 = arith.select %391, %389, %393 : vector<20x20xi1>, vector<20x20xf32>
    %395 = arith.addf %394, %0 : vector<20x20xf32>
    %cst_112 = arith.constant dense<0xFF800000> : vector<20xf32>
    %396 = vector.multi_reduction <maximumf>, %395, %cst_112 [1] : vector<20x20xf32> to vector<20xf32>
    %397 = vector.shape_cast %396 : vector<20xf32> to vector<20x1xf32>
    %398 = vector.broadcast %397 : vector<20x1xf32> to vector<20x20xf32>
    %399 = arith.subf %395, %398 : vector<20x20xf32>
    %400 = math.exp %399 : vector<20x20xf32>
    %cst_113 = arith.constant dense<0.000000e+00> : vector<20xf32>
    %401 = vector.multi_reduction <add>, %400, %cst_113 [1] : vector<20x20xf32> to vector<20xf32>
    %402 = vector.shape_cast %401 : vector<20xf32> to vector<20x1xf32>
    %cst_114 = arith.constant 9.99999968E-21 : f32
    %403 = vector.broadcast %cst_114 : f32 to vector<20x1xf32>
    %404 = arith.maximumf %402, %403 : vector<20x1xf32>
    %405 = tpu.reciprocal %404 {approx = true} : vector<20x1xf32> -> vector<20x1xf32>
    %406 = arith.mulf %404, %405 : vector<20x1xf32>
    %cst_115 = arith.constant 2.000000e+00 : f32
    %407 = vector.broadcast %cst_115 : f32 to vector<20x1xf32>
    %408 = arith.subf %407, %406 : vector<20x1xf32>
    %409 = arith.mulf %405, %408 : vector<20x1xf32>
    %410 = vector.broadcast %409 : vector<20x1xf32> to vector<20x20xf32>
    %411 = arith.mulf %400, %410 : vector<20x20xf32>
    %412 = vector.extract_strided_slice %318 {offsets = [0, 16], sizes = [20, 8], strides = [1, 1]} : vector<20x80xf32> to vector<20x8xf32>
    %cst_116 = arith.constant dense<0.000000e+00> : vector<20x8xf32>
    %413 = tpu.matmul %411, %412, %cst_116 {dimension_numbers = #tpu.dot_dimension_numbers<[1], [0], [0], [1], [0, 0, 1, 1], [], []>} : vector<20x20xf32>, vector<20x8xf32>, vector<20x8xf32> -> vector<20x8xf32>
    %414 = arith.addf %384, %413 : vector<20x8xf32>
    %415 = vector.extract_strided_slice %322 {offsets = [0, 3], sizes = [20, 1], strides = [1, 1]} : vector<20x10xf32> to vector<20x1xf32>
    %416 = vector.extract_strided_slice %323 {offsets = [3, 0], sizes = [1, 20], strides = [1, 1]} : vector<10x20xf32> to vector<1x20xf32>
    %417 = vector.broadcast %415 : vector<20x1xf32> to vector<20x20xf32>
    %418 = vector.broadcast %416 : vector<1x20xf32> to vector<20x20xf32>
    %419 = arith.addf %417, %418 : vector<20x20xf32>
    %cst_117 = arith.constant 0.000000e+00 : f32
    %420 = vector.broadcast %cst_117 : f32 to vector<20x20xf32>
    %421 = arith.cmpf ogt, %419, %420 : vector<20x20xf32>
    %cst_118 = arith.constant 2.000000e-01 : f32
    %422 = vector.broadcast %cst_118 : f32 to vector<20x20xf32>
    %423 = arith.mulf %422, %419 : vector<20x20xf32>
    %424 = arith.select %421, %419, %423 : vector<20x20xi1>, vector<20x20xf32>
    %425 = arith.addf %424, %0 : vector<20x20xf32>
    %cst_119 = arith.constant dense<0xFF800000> : vector<20xf32>
    %426 = vector.multi_reduction <maximumf>, %425, %cst_119 [1] : vector<20x20xf32> to vector<20xf32>
    %427 = vector.shape_cast %426 : vector<20xf32> to vector<20x1xf32>
    %428 = vector.broadcast %427 : vector<20x1xf32> to vector<20x20xf32>
    %429 = arith.subf %425, %428 : vector<20x20xf32>
    %430 = math.exp %429 : vector<20x20xf32>
    %cst_120 = arith.constant dense<0.000000e+00> : vector<20xf32>
    %431 = vector.multi_reduction <add>, %430, %cst_120 [1] : vector<20x20xf32> to vector<20xf32>
    %432 = vector.shape_cast %431 : vector<20xf32> to vector<20x1xf32>
    %cst_121 = arith.constant 9.99999968E-21 : f32
    %433 = vector.broadcast %cst_121 : f32 to vector<20x1xf32>
    %434 = arith.maximumf %432, %433 : vector<20x1xf32>
    %435 = tpu.reciprocal %434 {approx = true} : vector<20x1xf32> -> vector<20x1xf32>
    %436 = arith.mulf %434, %435 : vector<20x1xf32>
    %cst_122 = arith.constant 2.000000e+00 : f32
    %437 = vector.broadcast %cst_122 : f32 to vector<20x1xf32>
    %438 = arith.subf %437, %436 : vector<20x1xf32>
    %439 = arith.mulf %435, %438 : vector<20x1xf32>
    %440 = vector.broadcast %439 : vector<20x1xf32> to vector<20x20xf32>
    %441 = arith.mulf %430, %440 : vector<20x20xf32>
    %442 = vector.extract_strided_slice %318 {offsets = [0, 24], sizes = [20, 8], strides = [1, 1]} : vector<20x80xf32> to vector<20x8xf32>
    %cst_123 = arith.constant dense<0.000000e+00> : vector<20x8xf32>
    %443 = tpu.matmul %441, %442, %cst_123 {dimension_numbers = #tpu.dot_dimension_numbers<[1], [0], [0], [1], [0, 0, 1, 1], [], []>} : vector<20x20xf32>, vector<20x8xf32>, vector<20x8xf32> -> vector<20x8xf32>
    %444 = arith.addf %414, %443 : vector<20x8xf32>
    %445 = vector.extract_strided_slice %322 {offsets = [0, 4], sizes = [20, 1], strides = [1, 1]} : vector<20x10xf32> to vector<20x1xf32>
    %446 = vector.extract_strided_slice %323 {offsets = [4, 0], sizes = [1, 20], strides = [1, 1]} : vector<10x20xf32> to vector<1x20xf32>
    %447 = vector.broadcast %445 : vector<20x1xf32> to vector<20x20xf32>
    %448 = vector.broadcast %446 : vector<1x20xf32> to vector<20x20xf32>
    %449 = arith.addf %447, %448 : vector<20x20xf32>
    %cst_124 = arith.constant 0.000000e+00 : f32
    %450 = vector.broadcast %cst_124 : f32 to vector<20x20xf32>
    %451 = arith.cmpf ogt, %449, %450 : vector<20x20xf32>
    %cst_125 = arith.constant 2.000000e-01 : f32
    %452 = vector.broadcast %cst_125 : f32 to vector<20x20xf32>
    %453 = arith.mulf %452, %449 : vector<20x20xf32>
    %454 = arith.select %451, %449, %453 : vector<20x20xi1>, vector<20x20xf32>
    %455 = arith.addf %454, %0 : vector<20x20xf32>
    %cst_126 = arith.constant dense<0xFF800000> : vector<20xf32>
    %456 = vector.multi_reduction <maximumf>, %455, %cst_126 [1] : vector<20x20xf32> to vector<20xf32>
    %457 = vector.shape_cast %456 : vector<20xf32> to vector<20x1xf32>
    %458 = vector.broadcast %457 : vector<20x1xf32> to vector<20x20xf32>
    %459 = arith.subf %455, %458 : vector<20x20xf32>
    %460 = math.exp %459 : vector<20x20xf32>
    %cst_127 = arith.constant dense<0.000000e+00> : vector<20xf32>
    %461 = vector.multi_reduction <add>, %460, %cst_127 [1] : vector<20x20xf32> to vector<20xf32>
    %462 = vector.shape_cast %461 : vector<20xf32> to vector<20x1xf32>
    %cst_128 = arith.constant 9.99999968E-21 : f32
    %463 = vector.broadcast %cst_128 : f32 to vector<20x1xf32>
    %464 = arith.maximumf %462, %463 : vector<20x1xf32>
    %465 = tpu.reciprocal %464 {approx = true} : vector<20x1xf32> -> vector<20x1xf32>
    %466 = arith.mulf %464, %465 : vector<20x1xf32>
    %cst_129 = arith.constant 2.000000e+00 : f32
    %467 = vector.broadcast %cst_129 : f32 to vector<20x1xf32>
    %468 = arith.subf %467, %466 : vector<20x1xf32>
    %469 = arith.mulf %465, %468 : vector<20x1xf32>
    %470 = vector.broadcast %469 : vector<20x1xf32> to vector<20x20xf32>
    %471 = arith.mulf %460, %470 : vector<20x20xf32>
    %472 = vector.extract_strided_slice %318 {offsets = [0, 32], sizes = [20, 8], strides = [1, 1]} : vector<20x80xf32> to vector<20x8xf32>
    %cst_130 = arith.constant dense<0.000000e+00> : vector<20x8xf32>
    %473 = tpu.matmul %471, %472, %cst_130 {dimension_numbers = #tpu.dot_dimension_numbers<[1], [0], [0], [1], [0, 0, 1, 1], [], []>} : vector<20x20xf32>, vector<20x8xf32>, vector<20x8xf32> -> vector<20x8xf32>
    %474 = arith.addf %444, %473 : vector<20x8xf32>
    %475 = vector.extract_strided_slice %322 {offsets = [0, 5], sizes = [20, 1], strides = [1, 1]} : vector<20x10xf32> to vector<20x1xf32>
    %476 = vector.extract_strided_slice %323 {offsets = [5, 0], sizes = [1, 20], strides = [1, 1]} : vector<10x20xf32> to vector<1x20xf32>
    %477 = vector.broadcast %475 : vector<20x1xf32> to vector<20x20xf32>
    %478 = vector.broadcast %476 : vector<1x20xf32> to vector<20x20xf32>
    %479 = arith.addf %477, %478 : vector<20x20xf32>
    %cst_131 = arith.constant 0.000000e+00 : f32
    %480 = vector.broadcast %cst_131 : f32 to vector<20x20xf32>
    %481 = arith.cmpf ogt, %479, %480 : vector<20x20xf32>
    %cst_132 = arith.constant 2.000000e-01 : f32
    %482 = vector.broadcast %cst_132 : f32 to vector<20x20xf32>
    %483 = arith.mulf %482, %479 : vector<20x20xf32>
    %484 = arith.select %481, %479, %483 : vector<20x20xi1>, vector<20x20xf32>
    %485 = arith.addf %484, %0 : vector<20x20xf32>
    %cst_133 = arith.constant dense<0xFF800000> : vector<20xf32>
    %486 = vector.multi_reduction <maximumf>, %485, %cst_133 [1] : vector<20x20xf32> to vector<20xf32>
    %487 = vector.shape_cast %486 : vector<20xf32> to vector<20x1xf32>
    %488 = vector.broadcast %487 : vector<20x1xf32> to vector<20x20xf32>
    %489 = arith.subf %485, %488 : vector<20x20xf32>
    %490 = math.exp %489 : vector<20x20xf32>
    %cst_134 = arith.constant dense<0.000000e+00> : vector<20xf32>
    %491 = vector.multi_reduction <add>, %490, %cst_134 [1] : vector<20x20xf32> to vector<20xf32>
    %492 = vector.shape_cast %491 : vector<20xf32> to vector<20x1xf32>
    %cst_135 = arith.constant 9.99999968E-21 : f32
    %493 = vector.broadcast %cst_135 : f32 to vector<20x1xf32>
    %494 = arith.maximumf %492, %493 : vector<20x1xf32>
    %495 = tpu.reciprocal %494 {approx = true} : vector<20x1xf32> -> vector<20x1xf32>
    %496 = arith.mulf %494, %495 : vector<20x1xf32>
    %cst_136 = arith.constant 2.000000e+00 : f32
    %497 = vector.broadcast %cst_136 : f32 to vector<20x1xf32>
    %498 = arith.subf %497, %496 : vector<20x1xf32>
    %499 = arith.mulf %495, %498 : vector<20x1xf32>
    %500 = vector.broadcast %499 : vector<20x1xf32> to vector<20x20xf32>
    %501 = arith.mulf %490, %500 : vector<20x20xf32>
    %502 = vector.extract_strided_slice %318 {offsets = [0, 40], sizes = [20, 8], strides = [1, 1]} : vector<20x80xf32> to vector<20x8xf32>
    %cst_137 = arith.constant dense<0.000000e+00> : vector<20x8xf32>
    %503 = tpu.matmul %501, %502, %cst_137 {dimension_numbers = #tpu.dot_dimension_numbers<[1], [0], [0], [1], [0, 0, 1, 1], [], []>} : vector<20x20xf32>, vector<20x8xf32>, vector<20x8xf32> -> vector<20x8xf32>
    %504 = arith.addf %474, %503 : vector<20x8xf32>
    %505 = vector.extract_strided_slice %322 {offsets = [0, 6], sizes = [20, 1], strides = [1, 1]} : vector<20x10xf32> to vector<20x1xf32>
    %506 = vector.extract_strided_slice %323 {offsets = [6, 0], sizes = [1, 20], strides = [1, 1]} : vector<10x20xf32> to vector<1x20xf32>
    %507 = vector.broadcast %505 : vector<20x1xf32> to vector<20x20xf32>
    %508 = vector.broadcast %506 : vector<1x20xf32> to vector<20x20xf32>
    %509 = arith.addf %507, %508 : vector<20x20xf32>
    %cst_138 = arith.constant 0.000000e+00 : f32
    %510 = vector.broadcast %cst_138 : f32 to vector<20x20xf32>
    %511 = arith.cmpf ogt, %509, %510 : vector<20x20xf32>
    %cst_139 = arith.constant 2.000000e-01 : f32
    %512 = vector.broadcast %cst_139 : f32 to vector<20x20xf32>
    %513 = arith.mulf %512, %509 : vector<20x20xf32>
    %514 = arith.select %511, %509, %513 : vector<20x20xi1>, vector<20x20xf32>
    %515 = arith.addf %514, %0 : vector<20x20xf32>
    %cst_140 = arith.constant dense<0xFF800000> : vector<20xf32>
    %516 = vector.multi_reduction <maximumf>, %515, %cst_140 [1] : vector<20x20xf32> to vector<20xf32>
    %517 = vector.shape_cast %516 : vector<20xf32> to vector<20x1xf32>
    %518 = vector.broadcast %517 : vector<20x1xf32> to vector<20x20xf32>
    %519 = arith.subf %515, %518 : vector<20x20xf32>
    %520 = math.exp %519 : vector<20x20xf32>
    %cst_141 = arith.constant dense<0.000000e+00> : vector<20xf32>
    %521 = vector.multi_reduction <add>, %520, %cst_141 [1] : vector<20x20xf32> to vector<20xf32>
    %522 = vector.shape_cast %521 : vector<20xf32> to vector<20x1xf32>
    %cst_142 = arith.constant 9.99999968E-21 : f32
    %523 = vector.broadcast %cst_142 : f32 to vector<20x1xf32>
    %524 = arith.maximumf %522, %523 : vector<20x1xf32>
    %525 = tpu.reciprocal %524 {approx = true} : vector<20x1xf32> -> vector<20x1xf32>
    %526 = arith.mulf %524, %525 : vector<20x1xf32>
    %cst_143 = arith.constant 2.000000e+00 : f32
    %527 = vector.broadcast %cst_143 : f32 to vector<20x1xf32>
    %528 = arith.subf %527, %526 : vector<20x1xf32>
    %529 = arith.mulf %525, %528 : vector<20x1xf32>
    %530 = vector.broadcast %529 : vector<20x1xf32> to vector<20x20xf32>
    %531 = arith.mulf %520, %530 : vector<20x20xf32>
    %532 = vector.extract_strided_slice %318 {offsets = [0, 48], sizes = [20, 8], strides = [1, 1]} : vector<20x80xf32> to vector<20x8xf32>
    %cst_144 = arith.constant dense<0.000000e+00> : vector<20x8xf32>
    %533 = tpu.matmul %531, %532, %cst_144 {dimension_numbers = #tpu.dot_dimension_numbers<[1], [0], [0], [1], [0, 0, 1, 1], [], []>} : vector<20x20xf32>, vector<20x8xf32>, vector<20x8xf32> -> vector<20x8xf32>
    %534 = arith.addf %504, %533 : vector<20x8xf32>
    %535 = vector.extract_strided_slice %322 {offsets = [0, 7], sizes = [20, 1], strides = [1, 1]} : vector<20x10xf32> to vector<20x1xf32>
    %536 = vector.extract_strided_slice %323 {offsets = [7, 0], sizes = [1, 20], strides = [1, 1]} : vector<10x20xf32> to vector<1x20xf32>
    %537 = vector.broadcast %535 : vector<20x1xf32> to vector<20x20xf32>
    %538 = vector.broadcast %536 : vector<1x20xf32> to vector<20x20xf32>
    %539 = arith.addf %537, %538 : vector<20x20xf32>
    %cst_145 = arith.constant 0.000000e+00 : f32
    %540 = vector.broadcast %cst_145 : f32 to vector<20x20xf32>
    %541 = arith.cmpf ogt, %539, %540 : vector<20x20xf32>
    %cst_146 = arith.constant 2.000000e-01 : f32
    %542 = vector.broadcast %cst_146 : f32 to vector<20x20xf32>
    %543 = arith.mulf %542, %539 : vector<20x20xf32>
    %544 = arith.select %541, %539, %543 : vector<20x20xi1>, vector<20x20xf32>
    %545 = arith.addf %544, %0 : vector<20x20xf32>
    %cst_147 = arith.constant dense<0xFF800000> : vector<20xf32>
    %546 = vector.multi_reduction <maximumf>, %545, %cst_147 [1] : vector<20x20xf32> to vector<20xf32>
    %547 = vector.shape_cast %546 : vector<20xf32> to vector<20x1xf32>
    %548 = vector.broadcast %547 : vector<20x1xf32> to vector<20x20xf32>
    %549 = arith.subf %545, %548 : vector<20x20xf32>
    %550 = math.exp %549 : vector<20x20xf32>
    %cst_148 = arith.constant dense<0.000000e+00> : vector<20xf32>
    %551 = vector.multi_reduction <add>, %550, %cst_148 [1] : vector<20x20xf32> to vector<20xf32>
    %552 = vector.shape_cast %551 : vector<20xf32> to vector<20x1xf32>
    %cst_149 = arith.constant 9.99999968E-21 : f32
    %553 = vector.broadcast %cst_149 : f32 to vector<20x1xf32>
    %554 = arith.maximumf %552, %553 : vector<20x1xf32>
    %555 = tpu.reciprocal %554 {approx = true} : vector<20x1xf32> -> vector<20x1xf32>
    %556 = arith.mulf %554, %555 : vector<20x1xf32>
    %cst_150 = arith.constant 2.000000e+00 : f32
    %557 = vector.broadcast %cst_150 : f32 to vector<20x1xf32>
    %558 = arith.subf %557, %556 : vector<20x1xf32>
    %559 = arith.mulf %555, %558 : vector<20x1xf32>
    %560 = vector.broadcast %559 : vector<20x1xf32> to vector<20x20xf32>
    %561 = arith.mulf %550, %560 : vector<20x20xf32>
    %562 = vector.extract_strided_slice %318 {offsets = [0, 56], sizes = [20, 8], strides = [1, 1]} : vector<20x80xf32> to vector<20x8xf32>
    %cst_151 = arith.constant dense<0.000000e+00> : vector<20x8xf32>
    %563 = tpu.matmul %561, %562, %cst_151 {dimension_numbers = #tpu.dot_dimension_numbers<[1], [0], [0], [1], [0, 0, 1, 1], [], []>} : vector<20x20xf32>, vector<20x8xf32>, vector<20x8xf32> -> vector<20x8xf32>
    %564 = arith.addf %534, %563 : vector<20x8xf32>
    %565 = vector.extract_strided_slice %322 {offsets = [0, 8], sizes = [20, 1], strides = [1, 1]} : vector<20x10xf32> to vector<20x1xf32>
    %566 = vector.extract_strided_slice %323 {offsets = [8, 0], sizes = [1, 20], strides = [1, 1]} : vector<10x20xf32> to vector<1x20xf32>
    %567 = vector.broadcast %565 : vector<20x1xf32> to vector<20x20xf32>
    %568 = vector.broadcast %566 : vector<1x20xf32> to vector<20x20xf32>
    %569 = arith.addf %567, %568 : vector<20x20xf32>
    %cst_152 = arith.constant 0.000000e+00 : f32
    %570 = vector.broadcast %cst_152 : f32 to vector<20x20xf32>
    %571 = arith.cmpf ogt, %569, %570 : vector<20x20xf32>
    %cst_153 = arith.constant 2.000000e-01 : f32
    %572 = vector.broadcast %cst_153 : f32 to vector<20x20xf32>
    %573 = arith.mulf %572, %569 : vector<20x20xf32>
    %574 = arith.select %571, %569, %573 : vector<20x20xi1>, vector<20x20xf32>
    %575 = arith.addf %574, %0 : vector<20x20xf32>
    %cst_154 = arith.constant dense<0xFF800000> : vector<20xf32>
    %576 = vector.multi_reduction <maximumf>, %575, %cst_154 [1] : vector<20x20xf32> to vector<20xf32>
    %577 = vector.shape_cast %576 : vector<20xf32> to vector<20x1xf32>
    %578 = vector.broadcast %577 : vector<20x1xf32> to vector<20x20xf32>
    %579 = arith.subf %575, %578 : vector<20x20xf32>
    %580 = math.exp %579 : vector<20x20xf32>
    %cst_155 = arith.constant dense<0.000000e+00> : vector<20xf32>
    %581 = vector.multi_reduction <add>, %580, %cst_155 [1] : vector<20x20xf32> to vector<20xf32>
    %582 = vector.shape_cast %581 : vector<20xf32> to vector<20x1xf32>
    %cst_156 = arith.constant 9.99999968E-21 : f32
    %583 = vector.broadcast %cst_156 : f32 to vector<20x1xf32>
    %584 = arith.maximumf %582, %583 : vector<20x1xf32>
    %585 = tpu.reciprocal %584 {approx = true} : vector<20x1xf32> -> vector<20x1xf32>
    %586 = arith.mulf %584, %585 : vector<20x1xf32>
    %cst_157 = arith.constant 2.000000e+00 : f32
    %587 = vector.broadcast %cst_157 : f32 to vector<20x1xf32>
    %588 = arith.subf %587, %586 : vector<20x1xf32>
    %589 = arith.mulf %585, %588 : vector<20x1xf32>
    %590 = vector.broadcast %589 : vector<20x1xf32> to vector<20x20xf32>
    %591 = arith.mulf %580, %590 : vector<20x20xf32>
    %592 = vector.extract_strided_slice %318 {offsets = [0, 64], sizes = [20, 8], strides = [1, 1]} : vector<20x80xf32> to vector<20x8xf32>
    %cst_158 = arith.constant dense<0.000000e+00> : vector<20x8xf32>
    %593 = tpu.matmul %591, %592, %cst_158 {dimension_numbers = #tpu.dot_dimension_numbers<[1], [0], [0], [1], [0, 0, 1, 1], [], []>} : vector<20x20xf32>, vector<20x8xf32>, vector<20x8xf32> -> vector<20x8xf32>
    %594 = arith.addf %564, %593 : vector<20x8xf32>
    %595 = vector.extract_strided_slice %322 {offsets = [0, 9], sizes = [20, 1], strides = [1, 1]} : vector<20x10xf32> to vector<20x1xf32>
    %596 = vector.extract_strided_slice %323 {offsets = [9, 0], sizes = [1, 20], strides = [1, 1]} : vector<10x20xf32> to vector<1x20xf32>
    %597 = vector.broadcast %595 : vector<20x1xf32> to vector<20x20xf32>
    %598 = vector.broadcast %596 : vector<1x20xf32> to vector<20x20xf32>
    %599 = arith.addf %597, %598 : vector<20x20xf32>
    %cst_159 = arith.constant 0.000000e+00 : f32
    %600 = vector.broadcast %cst_159 : f32 to vector<20x20xf32>
    %601 = arith.cmpf ogt, %599, %600 : vector<20x20xf32>
    %cst_160 = arith.constant 2.000000e-01 : f32
    %602 = vector.broadcast %cst_160 : f32 to vector<20x20xf32>
    %603 = arith.mulf %602, %599 : vector<20x20xf32>
    %604 = arith.select %601, %599, %603 : vector<20x20xi1>, vector<20x20xf32>
    %605 = arith.addf %604, %0 : vector<20x20xf32>
    %cst_161 = arith.constant dense<0xFF800000> : vector<20xf32>
    %606 = vector.multi_reduction <maximumf>, %605, %cst_161 [1] : vector<20x20xf32> to vector<20xf32>
    %607 = vector.shape_cast %606 : vector<20xf32> to vector<20x1xf32>
    %608 = vector.broadcast %607 : vector<20x1xf32> to vector<20x20xf32>
    %609 = arith.subf %605, %608 : vector<20x20xf32>
    %610 = math.exp %609 : vector<20x20xf32>
    %cst_162 = arith.constant dense<0.000000e+00> : vector<20xf32>
    %611 = vector.multi_reduction <add>, %610, %cst_162 [1] : vector<20x20xf32> to vector<20xf32>
    %612 = vector.shape_cast %611 : vector<20xf32> to vector<20x1xf32>
    %cst_163 = arith.constant 9.99999968E-21 : f32
    %613 = vector.broadcast %cst_163 : f32 to vector<20x1xf32>
    %614 = arith.maximumf %612, %613 : vector<20x1xf32>
    %615 = tpu.reciprocal %614 {approx = true} : vector<20x1xf32> -> vector<20x1xf32>
    %616 = arith.mulf %614, %615 : vector<20x1xf32>
    %cst_164 = arith.constant 2.000000e+00 : f32
    %617 = vector.broadcast %cst_164 : f32 to vector<20x1xf32>
    %618 = arith.subf %617, %616 : vector<20x1xf32>
    %619 = arith.mulf %615, %618 : vector<20x1xf32>
    %620 = vector.broadcast %619 : vector<20x1xf32> to vector<20x20xf32>
    %621 = arith.mulf %610, %620 : vector<20x20xf32>
    %622 = vector.extract_strided_slice %318 {offsets = [0, 72], sizes = [20, 8], strides = [1, 1]} : vector<20x80xf32> to vector<20x8xf32>
    %cst_165 = arith.constant dense<0.000000e+00> : vector<20x8xf32>
    %623 = tpu.matmul %621, %622, %cst_165 {dimension_numbers = #tpu.dot_dimension_numbers<[1], [0], [0], [1], [0, 0, 1, 1], [], []>} : vector<20x20xf32>, vector<20x8xf32>, vector<20x8xf32> -> vector<20x8xf32>
    %624 = arith.addf %594, %623 : vector<20x8xf32>
    %cst_166 = arith.constant 1.000000e-01 : f32
    %625 = vector.broadcast %cst_166 : f32 to vector<20x8xf32>
    %626 = arith.mulf %624, %625 : vector<20x8xf32>
    %c0_167 = arith.constant 0 : index
    %c0_168 = arith.constant 0 : index
    %627 = vector.load %arg10[%c0_167, %c0_168] : memref<1x8xf32, #tpu.memory_space<vmem>>, vector<1x8xf32>
    %628 = vector.broadcast %627 : vector<1x8xf32> to vector<20x8xf32>
    %629 = arith.addf %626, %628 : vector<20x8xf32>
    %c0_169 = arith.constant 0 : index
    %c0_170 = arith.constant 0 : index
    %630 = vector.load %arg11[%c0_169, %c0_170] : memref<20x8xf32, #tpu.memory_space<vmem>>, vector<20x8xf32>
    tpu.vector_store %arg11[%c0_169, %c0_170], %629 {strides = array<i32>} : memref<20x8xf32, #tpu.memory_space<vmem>>, vector<20x8xf32>,
    return
  }
  func.func @transform_0(%arg0: i32) -> (i32, i32) {
    %c0_i32 = arith.constant 0 : i32
    %c0_i32_0 = arith.constant 0 : i32
    %c0_i32_1 = arith.constant 0 : i32
    return %c0_i32, %c0_i32_0 : i32, i32
  }
  func.func @transform_1(%arg0: i32) -> (i32, i32) {
    %c0_i32 = arith.constant 0 : i32
    %c0_i32_0 = arith.constant 0 : i32
    %c0_i32_1 = arith.constant 0 : i32
    return %c0_i32, %c0_i32_0 : i32, i32
  }
  func.func @transform_2(%arg0: i32) -> (i32, i32) {
    %c0_i32 = arith.constant 0 : i32
    %c0_i32_0 = arith.constant 0 : i32
    %c0_i32_1 = arith.constant 0 : i32
    return %c0_i32, %c0_i32_0 : i32, i32
  }
  func.func @transform_3(%arg0: i32) -> (i32, i32) {
    %c0_i32 = arith.constant 0 : i32
    %c0_i32_0 = arith.constant 0 : i32
    %c0_i32_1 = arith.constant 0 : i32
    return %c0_i32, %c0_i32_0 : i32, i32
  }
  func.func @transform_4(%arg0: i32) -> (i32, i32) {
    %c0_i32 = arith.constant 0 : i32
    %c0_i32_0 = arith.constant 0 : i32
    %c0_i32_1 = arith.constant 0 : i32
    return %c0_i32, %c0_i32_0 : i32, i32
  }
  func.func @transform_5(%arg0: i32) -> (i32, i32) {
    %c0_i32 = arith.constant 0 : i32
    %c0_i32_0 = arith.constant 0 : i32
    %c0_i32_1 = arith.constant 0 : i32
    return %c0_i32, %c0_i32_0 : i32, i32
  }
  func.func @transform_6(%arg0: i32) -> (i32, i32) {
    %c0_i32 = arith.constant 0 : i32
    %c0_i32_0 = arith.constant 0 : i32
    %c0_i32_1 = arith.constant 0 : i32
    return %c0_i32, %c0_i32_0 : i32, i32
  }
  func.func @transform_7(%arg0: i32) -> (i32, i32) {
    %c0_i32 = arith.constant 0 : i32
    %c0_i32_0 = arith.constant 0 : i32
    %c0_i32_1 = arith.constant 0 : i32
    return %c0_i32, %c0_i32_0 : i32, i32
  }
  func.func @transform_8(%arg0: i32) -> (i32, i32) {
    %c0_i32 = arith.constant 0 : i32
    %c0_i32_0 = arith.constant 0 : i32
    %c0_i32_1 = arith.constant 0 : i32
    return %c0_i32, %c0_i32_0 : i32, i32
  }
  func.func @transform_9(%arg0: i32) -> (i32, i32) {
    %c0_i32 = arith.constant 0 : i32
    %c0_i32_0 = arith.constant 0 : i32
    %c0_i32_1 = arith.constant 0 : i32
    return %c0_i32, %c0_i32_0 : i32, i32
  }
  func.func @transform_10(%arg0: i32) -> (i32, i32) {
    %c0_i32 = arith.constant 0 : i32
    %c0_i32_0 = arith.constant 0 : i32
    %c0_i32_1 = arith.constant 0 : i32
    return %c0_i32, %c0_i32_0 : i32, i32
  }
}

</mosaic_0001>

<llo_original>
// kernel: gat_forward.1
$region0: #{gat_forward.1}
  #allocation0 [shape = 'u32[]', space=smem, size = 0x4, offset = 0x4, fixed_abs, tag = 'smem constant byte address 0x4 - core index']
  #allocation1 [shape = 'u32[144,128]{1,0:T(1,128)}', space=vmem, size = 0x12000, scoped, tag = 'internal scratch']
  %s0 = inlined_call_operand.vmem [shape: f32[20,16], index: 0, kind: input, shape index: {}]
  %s1 = inlined_call_operand.vmem [shape: f32[20,20], index: 1, kind: input, shape index: {}]
  %s2 = inlined_call_operand.vmem [shape: f32[16,320], index: 2, kind: input, shape index: {}]
  %s3 = inlined_call_operand.vmem [shape: f32[320,10], index: 3, kind: input, shape index: {}]
  %s4 = inlined_call_operand.vmem [shape: f32[320,10], index: 4, kind: input, shape index: {}]
  %s5 = inlined_call_operand.vmem [shape: f32[1,32], index: 5, kind: input, shape index: {}]
  %s6 = inlined_call_operand.vmem [shape: f32[32,80], index: 6, kind: input, shape index: {}]
  %s7 = inlined_call_operand.vmem [shape: f32[80,10], index: 7, kind: input, shape index: {}]
  %s8 = inlined_call_operand.vmem [shape: f32[80,10], index: 8, kind: input, shape index: {}]
  %s9 = inlined_call_operand.vmem [shape: f32[1,8], index: 9, kind: input, shape index: {}]
  %s10 = inlined_call_operand.vmem [shape: f32[20,8], index: 10, kind: output, shape index: {}]
  %s11 = sld [smem:[#allocation0]]
  $region50: #{gat_forward.1} parent=0
    _
  %s13 = ssub.s32 1, %s11
  %s14 = scalar_select 0, %s13, %s11
  // Predicated region
  $region2: #{gat_forward.1} parent=0 // pred_check
    _
  $region3: #{gat_forward.1} parent=0 // pred_check_branch
    %16 = sbr.rel (0) target = $region5
  $region4: #{gat_forward.1} parent=0 // pred_region
    _
  $region5: #{gat_forward.1} parent=0 // pred_fallthru
    _
  // Predicated region
  $region6: #{gat_forward.1} parent=0 // pred_check
    _
  $region7: #{gat_forward.1} parent=0 // pred_check_branch
    %18 = sbr.rel (0) target = $region9
  $region8: #{gat_forward.1} parent=0 // pred_region
    _
  $region9: #{gat_forward.1} parent=0 // pred_fallthru
    _
  // Predicated region
  $region10: #{gat_forward.1} parent=0 // pred_check
    _
  $region11: #{gat_forward.1} parent=0 // pred_check_branch
    %20 = sbr.rel (0) target = $region13
  $region12: #{gat_forward.1} parent=0 // pred_region
    _
  $region13: #{gat_forward.1} parent=0 // pred_fallthru
    _
  // Predicated region
  $region14: #{gat_forward.1} parent=0 // pred_check
    _
  $region15: #{gat_forward.1} parent=0 // pred_check_branch
    %22 = sbr.rel (0) target = $region17
  $region16: #{gat_forward.1} parent=0 // pred_region
    _
  $region17: #{gat_forward.1} parent=0 // pred_fallthru
    _
  // Predicated region
  $region18: #{gat_forward.1} parent=0 // pred_check
    _
  $region19: #{gat_forward.1} parent=0 // pred_check_branch
    %24 = sbr.rel (0) target = $region21
  $region20: #{gat_forward.1} parent=0 // pred_region
    _
  $region21: #{gat_forward.1} parent=0 // pred_fallthru
    _
  // Predicated region
  $region22: #{gat_forward.1} parent=0 // pred_check
    _
  $region23: #{gat_forward.1} parent=0 // pred_check_branch
    %26 = sbr.rel (0) target = $region25
  $region24: #{gat_forward.1} parent=0 // pred_region
    _
  $region25: #{gat_forward.1} parent=0 // pred_fallthru
    _
  // Predicated region
  $region26: #{gat_forward.1} parent=0 // pred_check
    _
  $region27: #{gat_forward.1} parent=0 // pred_check_branch
    %28 = sbr.rel (0) target = $region29
  $region28: #{gat_forward.1} parent=0 // pred_region
    _
  $region29: #{gat_forward.1} parent=0 // pred_fallthru
    _
  // Predicated region
  $region30: #{gat_forward.1} parent=0 // pred_check
    _
  $region31: #{gat_forward.1} parent=0 // pred_check_branch
    %30 = sbr.rel (0) target = $region33
  $region32: #{gat_forward.1} parent=0 // pred_region
    _
  $region33: #{gat_forward.1} parent=0 // pred_fallthru
    _
  // Predicated region
  $region34: #{gat_forward.1} parent=0 // pred_check
    _
  $region35: #{gat_forward.1} parent=0 // pred_check_branch
    %32 = sbr.rel (0) target = $region37
  $region36: #{gat_forward.1} parent=0 // pred_region
    _
  $region37: #{gat_forward.1} parent=0 // pred_fallthru
    _
  // Predicated region
  $region38: #{gat_forward.1} parent=0 // pred_check
    _
  $region39: #{gat_forward.1} parent=0 // pred_check_branch
    %34 = sbr.rel (0) target = $region41
  $region40: #{gat_forward.1} parent=0 // pred_region
    _
  $region41: #{gat_forward.1} parent=0 // pred_fallthru
    _
  %v35 = vld [vmem:[%s1] sm:$0xff]
  %v36 = vld [vmem:[%s1 + $0x8] sm:$0xff]
  %v37 = vld [vmem:[%s1 + $0x10] sm:$0xf]
  %v38 = vld [vmem:[%s0] sm:$0xff]
  %v39 = vld [vmem:[%s0 + $0x8] sm:$0xff]
  %v40 = vld [vmem:[%s0 + $0x10] sm:$0xf]
  %v41 = vld [vmem:[%s2] sm:$0xff]
  %v42 = vld [vmem:[%s2 + $0x8] sm:$0xff]
  %v43 = vld [vmem:[%s2 + $0x10] sm:$0xff]
  %v44 = vld [vmem:[%s2 + $0x18] sm:$0xff]
  %v45 = vld [vmem:[%s2 + $0x20] sm:$0xff]
  %v46 = vld [vmem:[%s2 + $0x28] sm:$0xff]
  %vm47 = vcmask 130048
  %v49 = vsel %vm47, %v38, 0
  %v52 = vsel %vm47, %v39, 0
  %v55 = vsel %vm47, %v40, 0
  %57 = vmatprep.subr.mxu0 %v42
  %58 = vmatpush1.msra.mxu0 %v41
  %59 = vmatprep.subr.mxu0 %v45
  %60 = vmatpush1.msra.mxu0 %v44
  %61 = vmatprep.subr.mxu0 0.0
  %62 = vmatpush1.msra.mxu0 0.0
  %63 = vmatprep.subr.mxu0 0.0
  %64 = vmatpush1.msra.mxu0 0.0
  %65 = vmatprep.subr.mxu0 0.0
  %66 = vmatpush1.msra.mxu0 0.0
  %67 = vmatprep.subr.mxu0 0.0
  %68 = vmatpush1.msra.mxu0 0.0
  %69 = vmatprep.subr.mxu0 0.0
  %70 = vmatpush1.msra.mxu0 0.0
  %71 = vmatprep.subr.mxu0 0.0
  %72 = vmatpush1.msra.mxu0 0.0
  %73 = vmatprep.subr.mxu0 0.0
  %74 = vmatpush1.msra.mxu0 0.0
  %75 = vmatprep.subr.mxu0 0.0
  %76 = vmatpush1.msra.mxu0 0.0
  %77 = vmatprep.subr.mxu0 0.0
  %78 = vmatpush1.msra.mxu0 0.0
  %79 = vmatprep.subr.mxu0 0.0
  %80 = vmatpush1.msra.mxu0 0.0
  %81 = vmatprep.subr.mxu0 0.0
  %82 = vmatpush1.msra.mxu0 0.0
  %83 = vmatprep.subr.mxu0 0.0
  %84 = vmatpush1.msra.mxu0 0.0
  %85 = vmatprep.subr.mxu0 0.0
  %86 = vmatpush1.msra.mxu0 0.0
  %87 = vmatprep.subr.mxu0 0.0
  %88 = vmatpush1.msra.mxu0 0.0
  %89 = vmatprep.subr.mxu0 0.0
  %90 = vmatpush1.msra.mxu0 0.0
  %91 = vmatprep.subr.mxu0 0.0
  %92 = vmatpush1.msra.mxu0 0.0
  %93 = vmatprep.subr.mxu0 0.0
  %94 = vmatpush1.msra.mxu0 0.0
  %95 = vmatprep.subr.mxu0 0.0
  %96 = vmatpush1.msra.mxu0 0.0
  %97 = vmatprep.subr.mxu0 0.0
  %98 = vmatpush1.msra.mxu0 0.0
  %99 = vmatprep.subr.mxu0 0.0
  %100 = vmatpush1.msra.mxu0 0.0
  %101 = vmatprep.subr.mxu0 0.0
  %102 = vmatpush1.msra.mxu0 0.0
  %103 = vmatprep.subr.mxu0 0.0
  %104 = vmatpush1.msra.mxu0 0.0
  %105 = vmatprep.subr.mxu0 0.0
  %106 = vmatpush1.msra.mxu0 0.0
  %107 = vmatprep.subr.mxu0 0.0
  %108 = vmatpush1.msra.mxu0 0.0
  %109 = vmatprep.subr.mxu0 0.0
  %110 = vmatpush1.msra.mxu0 0.0
  %111 = vmatprep.subr.mxu0 0.0
  %112 = vmatpush1.msra.mxu0 0.0
  %113 = vmatprep.subr.mxu0 0.0
  %114 = vmatpush1.msra.mxu0 0.0
  %115 = vmatprep.subr.mxu0 0.0
  %116 = vmatpush1.msra.mxu0 0.0
  %117 = vmatprep.subr.mxu0 0.0
  %118 = vmatpush1.msra.mxu0 0.0
  %119 = vmatprep.subr.mxu0 0.0
  %120 = vmatpush1.msra.mxu0 0.0
  %121 = vmatprep.mubr.f32.mxu0 0.0
  %122 = vmatmul.mubr.f32.gmra.mrb[0].mxu0 %v49
  %v123 = vpop.f32.mrb[0].mxu0
  %v124 = vadd.f32 0.0, %v123
  %v125 = vpop.f32.mrb[0].mxu0
  %v126 = vadd.f32 0.0, %v125
  %127 = vmatprep.mubr.f32.mxu0 0.0
  %128 = vmatmul.mubr.f32.gmra.mrb[0].mxu0 %v52
  %v129 = vpop.f32.mrb[0].mxu0
  %v130 = vadd.f32 0.0, %v129
  %v131 = vpop.f32.mrb[0].mxu0
  %v132 = vadd.f32 0.0, %v131
  %133 = vmatprep.mubr.f32.mxu0 0.0
  %134 = vmatmul.mubr.f32.gmra.mrb[0].mxu0 %v55
  %v135 = vpop.f32.mrb[0].mxu0
  %v136 = vadd.f32 0.0, %v135
  %v137 = vpop.f32.mrb[0].mxu0
  %v138 = vadd.f32 0.0, %v137
  %139 = vdwg.mxu0
  %140 = vmatprep.subr.mxu0 0.0
  %141 = vmatpush1.msra.mxu0 %v43
  %142 = vmatprep.subr.mxu0 0.0
  %143 = vmatpush1.msra.mxu0 %v46
  %144 = vmatprep.subr.mxu0 0.0
  %145 = vmatpush1.msra.mxu0 0.0
  %146 = vmatprep.subr.mxu0 0.0
  %147 = vmatpush1.msra.mxu0 0.0
  %148 = vmatprep.subr.mxu0 0.0
  %149 = vmatpush1.msra.mxu0 0.0
  %150 = vmatprep.subr.mxu0 0.0
  %151 = vmatpush1.msra.mxu0 0.0
  %152 = vmatprep.subr.mxu0 0.0
  %153 = vmatpush1.msra.mxu0 0.0
  %154 = vmatprep.subr.mxu0 0.0
  %155 = vmatpush1.msra.mxu0 0.0
  %156 = vmatprep.subr.mxu0 0.0
  %157 = vmatpush1.msra.mxu0 0.0
  %158 = vmatprep.subr.mxu0 0.0
  %159 = vmatpush1.msra.mxu0 0.0
  %160 = vmatprep.subr.mxu0 0.0
  %161 = vmatpush1.msra.mxu0 0.0
  %162 = vmatprep.subr.mxu0 0.0
  %163 = vmatpush1.msra.mxu0 0.0
  %164 = vmatprep.subr.mxu0 0.0
  %165 = vmatpush1.msra.mxu0 0.0
  %166 = vmatprep.subr.mxu0 0.0
  %167 = vmatpush1.msra.mxu0 0.0
  %168 = vmatprep.subr.mxu0 0.0
  %169 = vmatpush1.msra.mxu0 0.0
  %170 = vmatprep.subr.mxu0 0.0
  %171 = vmatpush1.msra.mxu0 0.0
  %172 = vmatprep.subr.mxu0 0.0
  %173 = vmatpush1.msra.mxu0 0.0
  %174 = vmatprep.subr.mxu0 0.0
  %175 = vmatpush1.msra.mxu0 0.0
  %176 = vmatprep.subr.mxu0 0.0
  %177 = vmatpush1.msra.mxu0 0.0
  %178 = vmatprep.subr.mxu0 0.0
  %179 = vmatpush1.msra.mxu0 0.0
  %180 = vmatprep.subr.mxu0 0.0
  %181 = vmatpush1.msra.mxu0 0.0
  %182 = vmatprep.subr.mxu0 0.0
  %183 = vmatpush1.msra.mxu0 0.0
  %184 = vmatprep.subr.mxu0 0.0
  %185 = vmatpush1.msra.mxu0 0.0
  %186 = vmatprep.subr.mxu0 0.0
  %187 = vmatpush1.msra.mxu0 0.0
  %188 = vmatprep.subr.mxu0 0.0
  %189 = vmatpush1.msra.mxu0 0.0
  %190 = vmatprep.subr.mxu0 0.0
  %191 = vmatpush1.msra.mxu0 0.0
  %192 = vmatprep.subr.mxu0 0.0
  %193 = vmatpush1.msra.mxu0 0.0
  %194 = vmatprep.subr.mxu0 0.0
  %195 = vmatpush1.msra.mxu0 0.0
  %196 = vmatprep.subr.mxu0 0.0
  %197 = vmatpush1.msra.mxu0 0.0
  %198 = vmatprep.subr.mxu0 0.0
  %199 = vmatpush1.msra.mxu0 0.0
  %200 = vmatprep.subr.mxu0 0.0
  %201 = vmatpush1.msra.mxu0 0.0
  %202 = vmatprep.subr.mxu0 0.0
  %203 = vmatpush1.msra.mxu0 0.0
  %204 = vmatprep.mubr.f32.mxu0 0.0
  %205 = vmatmul.mubr.f32.gmra.mrb[0].mxu0 %v49
  %v206 = vpop.f32.mrb[0].mxu0
  %v207 = vadd.f32 0.0, %v206
  %v208 = vpop.f32.mrb[0].mxu0
  %209 = vmatprep.mubr.f32.mxu0 0.0
  %210 = vmatmul.mubr.f32.gmra.mrb[0].mxu0 %v52
  %v211 = vpop.f32.mrb[0].mxu0
  %v212 = vadd.f32 0.0, %v211
  %v213 = vpop.f32.mrb[0].mxu0
  %214 = vmatprep.mubr.f32.mxu0 0.0
  %215 = vmatmul.mubr.f32.gmra.mrb[0].mxu0 %v55
  %v216 = vpop.f32.mrb[0].mxu0
  %v217 = vadd.f32 0.0, %v216
  %v218 = vpop.f32.mrb[0].mxu0
  %219 = vdwg.mxu0
  %v220 = vld [vmem:[%s3] sm:$0xff]
  %v221 = vld [vmem:[%s3 + $0x8] sm:$0xff]
  %v222 = vld [vmem:[%s3 + $0x10] sm:$0xff]
  %v223 = vld [vmem:[%s3 + $0x18] sm:$0xff]
  %v224 = vld [vmem:[%s3 + $0x20] sm:$0xff]
  %v225 = vld [vmem:[%s3 + $0x28] sm:$0xff]
  %v226 = vld [vmem:[%s3 + $0x30] sm:$0xff]
  %v227 = vld [vmem:[%s3 + $0x38] sm:$0xff]
  %v228 = vld [vmem:[%s3 + $0x40] sm:$0xff]
  %v229 = vld [vmem:[%s3 + $0x48] sm:$0xff]
  %v230 = vld [vmem:[%s3 + $0x50] sm:$0xff]
  %v231 = vld [vmem:[%s3 + $0x58] sm:$0xff]
  %v232 = vld [vmem:[%s3 + $0x60] sm:$0xff]
  %v233 = vld [vmem:[%s3 + $0x68] sm:$0xff]
  %v234 = vld [vmem:[%s3 + $0x70] sm:$0xff]
  %v235 = vld [vmem:[%s3 + $0x78] sm:$0xff]
  %v236 = vld [vmem:[%s3 + $0x80] sm:$0xff]
  %v237 = vld [vmem:[%s3 + $0x88] sm:$0xff]
  %v238 = vld [vmem:[%s3 + $0x90] sm:$0xff]
  %v239 = vld [vmem:[%s3 + $0x98] sm:$0xff]
  %v240 = vld [vmem:[%s3 + $0xa0] sm:$0xff]
  %v241 = vld [vmem:[%s3 + $0xa8] sm:$0xff]
  %v242 = vld [vmem:[%s3 + $0xb0] sm:$0xff]
  %v243 = vld [vmem:[%s3 + $0xb8] sm:$0xff]
  %v244 = vld [vmem:[%s3 + $0xc0] sm:$0xff]
  %v245 = vld [vmem:[%s3 + $0xc8] sm:$0xff]
  %v246 = vld [vmem:[%s3 + $0xd0] sm:$0xff]
  %v247 = vld [vmem:[%s3 + $0xd8] sm:$0xff]
  %v248 = vld [vmem:[%s3 + $0xe0] sm:$0xff]
  %v249 = vld [vmem:[%s3 + $0xe8] sm:$0xff]
  %v250 = vld [vmem:[%s3 + $0xf0] sm:$0xff]
  %v251 = vld [vmem:[%s3 + $0xf8] sm:$0xff]
  %v252 = vld [vmem:[%s3 + $0x100] sm:$0xff]
  %v253 = vld [vmem:[%s3 + $0x108] sm:$0xff]
  %v254 = vld [vmem:[%s3 + $0x110] sm:$0xff]
  %v255 = vld [vmem:[%s3 + $0x118] sm:$0xff]
  %v256 = vld [vmem:[%s3 + $0x120] sm:$0xff]
  %v257 = vld [vmem:[%s3 + $0x128] sm:$0xff]
  %v258 = vld [vmem:[%s3 + $0x130] sm:$0xff]
  %v259 = vld [vmem:[%s3 + $0x138] sm:$0xff]
  %vm260 = vcmask 523264
  %v262 = vsel %vm260, %v207, 0
  %v265 = vsel %vm260, %v212, 0
  %v268 = vsel %vm260, %v217, 0
  %270 = vmatprep.subr.mxu0 0.0
  %271 = vmatpush1.msra.mxu0 %v220
  %272 = vmatprep.subr.mxu0 0.0
  %273 = vmatpush1.msra.mxu0 %v221
  %274 = vmatprep.subr.mxu0 0.0
  %275 = vmatpush1.msra.mxu0 %v222
  %276 = vmatprep.subr.mxu0 0.0
  %277 = vmatpush1.msra.mxu0 %v223
  %278 = vmatprep.subr.mxu0 0.0
  %279 = vmatpush1.msra.mxu0 %v224
  %280 = vmatprep.subr.mxu0 0.0
  %281 = vmatpush1.msra.mxu0 %v225
  %282 = vmatprep.subr.mxu0 0.0
  %283 = vmatpush1.msra.mxu0 %v226
  %284 = vmatprep.subr.mxu0 0.0
  %285 = vmatpush1.msra.mxu0 %v227
  %286 = vmatprep.subr.mxu0 0.0
  %287 = vmatpush1.msra.mxu0 %v228
  %288 = vmatprep.subr.mxu0 0.0
  %289 = vmatpush1.msra.mxu0 %v229
  %290 = vmatprep.subr.mxu0 0.0
  %291 = vmatpush1.msra.mxu0 %v230
  %292 = vmatprep.subr.mxu0 0.0
  %293 = vmatpush1.msra.mxu0 %v231
  %294 = vmatprep.subr.mxu0 0.0
  %295 = vmatpush1.msra.mxu0 %v232
  %296 = vmatprep.subr.mxu0 0.0
  %297 = vmatpush1.msra.mxu0 %v233
  %298 = vmatprep.subr.mxu0 0.0
  %299 = vmatpush1.msra.mxu0 %v234
  %300 = vmatprep.subr.mxu0 0.0
  %301 = vmatpush1.msra.mxu0 %v235
  %302 = vmatprep.subr.mxu0 0.0
  %303 = vmatpush1.msra.mxu0 %v236
  %304 = vmatprep.subr.mxu0 0.0
  %305 = vmatpush1.msra.mxu0 %v237
  %306 = vmatprep.subr.mxu0 0.0
  %307 = vmatpush1.msra.mxu0 %v238
  %308 = vmatprep.subr.mxu0 0.0
  %309 = vmatpush1.msra.mxu0 %v239
  %310 = vmatprep.subr.mxu0 0.0
  %311 = vmatpush1.msra.mxu0 %v240
  %312 = vmatprep.subr.mxu0 0.0
  %313 = vmatpush1.msra.mxu0 %v241
  %314 = vmatprep.subr.mxu0 0.0
  %315 = vmatpush1.msra.mxu0 %v242
  %316 = vmatprep.subr.mxu0 0.0
  %317 = vmatpush1.msra.mxu0 %v243
  %318 = vmatprep.subr.mxu0 0.0
  %319 = vmatpush1.msra.mxu0 %v244
  %320 = vmatprep.subr.mxu0 0.0
  %321 = vmatpush1.msra.mxu0 %v245
  %322 = vmatprep.subr.mxu0 0.0
  %323 = vmatpush1.msra.mxu0 %v246
  %324 = vmatprep.subr.mxu0 0.0
  %325 = vmatpush1.msra.mxu0 %v247
  %326 = vmatprep.subr.mxu0 0.0
  %327 = vmatpush1.msra.mxu0 %v248
  %328 = vmatprep.subr.mxu0 0.0
  %329 = vmatpush1.msra.mxu0 %v249
  %330 = vmatprep.subr.mxu0 0.0
  %331 = vmatpush1.msra.mxu0 %v250
  %332 = vmatprep.subr.mxu0 0.0
  %333 = vmatpush1.msra.mxu0 %v251
  %334 = vmatprep.mubr.f32.mxu0 %v126
  %335 = vmatmul.mubr.f32.gmra.mrb[0].mxu0 %v124
  %v336 = vpop.f32.mrb[0].mxu0
  %v337 = vadd.f32 0.0, %v336
  %v338 = vpop.f32.mrb[0].mxu0
  %339 = vmatprep.mubr.f32.mxu0 %v132
  %340 = vmatmul.mubr.f32.gmra.mrb[0].mxu0 %v130
  %v341 = vpop.f32.mrb[0].mxu0
  %v342 = vadd.f32 0.0, %v341
  %v343 = vpop.f32.mrb[0].mxu0
  %344 = vmatprep.mubr.f32.mxu0 %v138
  %345 = vmatmul.mubr.f32.gmra.mrb[0].mxu0 %v136
  %v346 = vpop.f32.mrb[0].mxu0
  %v347 = vadd.f32 0.0, %v346
  %v348 = vpop.f32.mrb[0].mxu0
  %349 = vdwg.mxu0
  %350 = vmatprep.subr.mxu0 0.0
  %351 = vmatpush1.msra.mxu0 %v252
  %352 = vmatprep.subr.mxu0 0.0
  %353 = vmatpush1.msra.mxu0 %v253
  %354 = vmatprep.subr.mxu0 0.0
  %355 = vmatpush1.msra.mxu0 %v254
  %356 = vmatprep.subr.mxu0 0.0
  %357 = vmatpush1.msra.mxu0 %v255
  %358 = vmatprep.subr.mxu0 0.0
  %359 = vmatpush1.msra.mxu0 %v256
  %360 = vmatprep.subr.mxu0 0.0
  %361 = vmatpush1.msra.mxu0 %v257
  %362 = vmatprep.subr.mxu0 0.0
  %363 = vmatpush1.msra.mxu0 %v258
  %364 = vmatprep.subr.mxu0 0.0
  %365 = vmatpush1.msra.mxu0 %v259
  %366 = vmatprep.subr.mxu0 0.0
  %367 = vmatpush1.msra.mxu0 0.0
  %368 = vmatprep.subr.mxu0 0.0
  %369 = vmatpush1.msra.mxu0 0.0
  %370 = vmatprep.subr.mxu0 0.0
  %371 = vmatpush1.msra.mxu0 0.0
  %372 = vmatprep.subr.mxu0 0.0
  %373 = vmatpush1.msra.mxu0 0.0
  %374 = vmatprep.subr.mxu0 0.0
  %375 = vmatpush1.msra.mxu0 0.0
  %376 = vmatprep.subr.mxu0 0.0
  %377 = vmatpush1.msra.mxu0 0.0
  %378 = vmatprep.subr.mxu0 0.0
  %379 = vmatpush1.msra.mxu0 0.0
  %380 = vmatprep.subr.mxu0 0.0
  %381 = vmatpush1.msra.mxu0 0.0
  %382 = vmatprep.subr.mxu0 0.0
  %383 = vmatpush1.msra.mxu0 0.0
  %384 = vmatprep.subr.mxu0 0.0
  %385 = vmatpush1.msra.mxu0 0.0
  %386 = vmatprep.subr.mxu0 0.0
  %387 = vmatpush1.msra.mxu0 0.0
  %388 = vmatprep.subr.mxu0 0.0
  %389 = vmatpush1.msra.mxu0 0.0
  %390 = vmatprep.subr.mxu0 0.0
  %391 = vmatpush1.msra.mxu0 0.0
  %392 = vmatprep.subr.mxu0 0.0
  %393 = vmatpush1.msra.mxu0 0.0
  %394 = vmatprep.subr.mxu0 0.0
  %395 = vmatpush1.msra.mxu0 0.0
  %396 = vmatprep.subr.mxu0 0.0
  %397 = vmatpush1.msra.mxu0 0.0
  %398 = vmatprep.subr.mxu0 0.0
  %399 = vmatpush1.msra.mxu0 0.0
  %400 = vmatprep.subr.mxu0 0.0
  %401 = vmatpush1.msra.mxu0 0.0
  %402 = vmatprep.subr.mxu0 0.0
  %403 = vmatpush1.msra.mxu0 0.0
  %404 = vmatprep.subr.mxu0 0.0
  %405 = vmatpush1.msra.mxu0 0.0
  %406 = vmatprep.subr.mxu0 0.0
  %407 = vmatpush1.msra.mxu0 0.0
  %408 = vmatprep.subr.mxu0 0.0
  %409 = vmatpush1.msra.mxu0 0.0
  %410 = vmatprep.subr.mxu0 0.0
  %411 = vmatpush1.msra.mxu0 0.0
  %412 = vmatprep.subr.mxu0 0.0
  %413 = vmatpush1.msra.mxu0 0.0
  %414 = vmatprep.mubr.f32.mxu0 0.0
  %415 = vmatmul.mubr.f32.gmra.mrb[0].mxu0 %v262
  %v416 = vpop.f32.mrb[0].mxu0
  %v417 = vadd.f32 %v337, %v416
  %v418 = vpop.f32.mrb[0].mxu0
  %419 = vmatprep.mubr.f32.mxu0 0.0
  %420 = vmatmul.mubr.f32.gmra.mrb[0].mxu0 %v265
  %v421 = vpop.f32.mrb[0].mxu0
  %v422 = vadd.f32 %v342, %v421
  %v423 = vpop.f32.mrb[0].mxu0
  %424 = vmatprep.mubr.f32.mxu0 0.0
  %425 = vmatmul.mubr.f32.gmra.mrb[0].mxu0 %v268
  %v426 = vpop.f32.mrb[0].mxu0
  %v427 = vadd.f32 %v347, %v426
  %v428 = vpop.f32.mrb[0].mxu0
  %429 = vdwg.mxu0
  %v430 = vld [vmem:[%s4] sm:$0xff]
  %v431 = vld [vmem:[%s4 + $0x8] sm:$0xff]
  %v432 = vld [vmem:[%s4 + $0x10] sm:$0xff]
  %v433 = vld [vmem:[%s4 + $0x18] sm:$0xff]
  %v434 = vld [vmem:[%s4 + $0x20] sm:$0xff]
  %v435 = vld [vmem:[%s4 + $0x28] sm:$0xff]
  %v436 = vld [vmem:[%s4 + $0x30] sm:$0xff]
  %v437 = vld [vmem:[%s4 + $0x38] sm:$0xff]
  %v438 = vld [vmem:[%s4 + $0x40] sm:$0xff]
  %v439 = vld [vmem:[%s4 + $0x48] sm:$0xff]
  %v440 = vld [vmem:[%s4 + $0x50] sm:$0xff]
  %v441 = vld [vmem:[%s4 + $0x58] sm:$0xff]
  %v442 = vld [vmem:[%s4 + $0x60] sm:$0xff]
  %v443 = vld [vmem:[%s4 + $0x68] sm:$0xff]
  %v444 = vld [vmem:[%s4 + $0x70] sm:$0xff]
  %v445 = vld [vmem:[%s4 + $0x78] sm:$0xff]
  %v446 = vld [vmem:[%s4 + $0x80] sm:$0xff]
  %v447 = vld [vmem:[%s4 + $0x88] sm:$0xff]
  %v448 = vld [vmem:[%s4 + $0x90] sm:$0xff]
  %v449 = vld [vmem:[%s4 + $0x98] sm:$0xff]
  %v450 = vld [vmem:[%s4 + $0xa0] sm:$0xff]
  %v451 = vld [vmem:[%s4 + $0xa8] sm:$0xff]
  %v452 = vld [vmem:[%s4 + $0xb0] sm:$0xff]
  %v453 = vld [vmem:[%s4 + $0xb8] sm:$0xff]
  %v454 = vld [vmem:[%s4 + $0xc0] sm:$0xff]
  %v455 = vld [vmem:[%s4 + $0xc8] sm:$0xff]
  %v456 = vld [vmem:[%s4 + $0xd0] sm:$0xff]
  %v457 = vld [vmem:[%s4 + $0xd8] sm:$0xff]
  %v458 = vld [vmem:[%s4 + $0xe0] sm:$0xff]
  %v459 = vld [vmem:[%s4 + $0xe8] sm:$0xff]
  %v460 = vld [vmem:[%s4 + $0xf0] sm:$0xff]
  %v461 = vld [vmem:[%s4 + $0xf8] sm:$0xff]
  %v462 = vld [vmem:[%s4 + $0x100] sm:$0xff]
  %v463 = vld [vmem:[%s4 + $0x108] sm:$0xff]
  %v464 = vld [vmem:[%s4 + $0x110] sm:$0xff]
  %v465 = vld [vmem:[%s4 + $0x118] sm:$0xff]
  %v466 = vld [vmem:[%s4 + $0x120] sm:$0xff]
  %v467 = vld [vmem:[%s4 + $0x128] sm:$0xff]
  %v468 = vld [vmem:[%s4 + $0x130] sm:$0xff]
  %v469 = vld [vmem:[%s4 + $0x138] sm:$0xff]
  %470 = vmatprep.subr.mxu0 0.0
  %471 = vmatpush1.msra.mxu0 %v430
  %472 = vmatprep.subr.mxu0 0.0
  %473 = vmatpush1.msra.mxu0 %v431
  %474 = vmatprep.subr.mxu0 0.0
  %475 = vmatpush1.msra.mxu0 %v432
  %476 = vmatprep.subr.mxu0 0.0
  %477 = vmatpush1.msra.mxu0 %v433
  %478 = vmatprep.subr.mxu0 0.0
  %479 = vmatpush1.msra.mxu0 %v434
  %480 = vmatprep.subr.mxu0 0.0
  %481 = vmatpush1.msra.mxu0 %v435
  %482 = vmatprep.subr.mxu0 0.0
  %483 = vmatpush1.msra.mxu0 %v436
  %484 = vmatprep.subr.mxu0 0.0
  %485 = vmatpush1.msra.mxu0 %v437
  %486 = vmatprep.subr.mxu0 0.0
  %487 = vmatpush1.msra.mxu0 %v438
  %488 = vmatprep.subr.mxu0 0.0
  %489 = vmatpush1.msra.mxu0 %v439
  %490 = vmatprep.subr.mxu0 0.0
  %491 = vmatpush1.msra.mxu0 %v440
  %492 = vmatprep.subr.mxu0 0.0
  %493 = vmatpush1.msra.mxu0 %v441
  %494 = vmatprep.subr.mxu0 0.0
  %495 = vmatpush1.msra.mxu0 %v442
  %496 = vmatprep.subr.mxu0 0.0
  %497 = vmatpush1.msra.mxu0 %v443
  %498 = vmatprep.subr.mxu0 0.0
  %499 = vmatpush1.msra.mxu0 %v444
  %500 = vmatprep.subr.mxu0 0.0
  %501 = vmatpush1.msra.mxu0 %v445
  %502 = vmatprep.subr.mxu0 0.0
  %503 = vmatpush1.msra.mxu0 %v446
  %504 = vmatprep.subr.mxu0 0.0
  %505 = vmatpush1.msra.mxu0 %v447
  %506 = vmatprep.subr.mxu0 0.0
  %507 = vmatpush1.msra.mxu0 %v448
  %508 = vmatprep.subr.mxu0 0.0
  %509 = vmatpush1.msra.mxu0 %v449
  %510 = vmatprep.subr.mxu0 0.0
  %511 = vmatpush1.msra.mxu0 %v450
  %512 = vmatprep.subr.mxu0 0.0
  %513 = vmatpush1.msra.mxu0 %v451
  %514 = vmatprep.subr.mxu0 0.0
  %515 = vmatpush1.msra.mxu0 %v452
  %516 = vmatprep.subr.mxu0 0.0
  %517 = vmatpush1.msra.mxu0 %v453
  %518 = vmatprep.subr.mxu0 0.0
  %519 = vmatpush1.msra.mxu0 %v454
  %520 = vmatprep.subr.mxu0 0.0
  %521 = vmatpush1.msra.mxu0 %v455
  %522 = vmatprep.subr.mxu0 0.0
  %523 = vmatpush1.msra.mxu0 %v456
  %524 = vmatprep.subr.mxu0 0.0
  %525 = vmatpush1.msra.mxu0 %v457
  %526 = vmatprep.subr.mxu0 0.0
  %527 = vmatpush1.msra.mxu0 %v458
  %528 = vmatprep.subr.mxu0 0.0
  %529 = vmatpush1.msra.mxu0 %v459
  %530 = vmatprep.subr.mxu0 0.0
  %531 = vmatpush1.msra.mxu0 %v460
  %532 = vmatprep.subr.mxu0 0.0
  %533 = vmatpush1.msra.mxu0 %v461
  %534 = vmatprep.mubr.f32.mxu0 %v126
  %535 = vmatmul.mubr.f32.gmra.mrb[0].mxu0 %v124
  %v536 = vpop.f32.mrb[0].mxu0
  %v537 = vadd.f32 0.0, %v536
  %v538 = vpop.f32.mrb[0].mxu0
  %539 = vmatprep.mubr.f32.mxu0 %v132
  %540 = vmatmul.mubr.f32.gmra.mrb[0].mxu0 %v130
  %v541 = vpop.f32.mrb[0].mxu0
  %v542 = vadd.f32 0.0, %v541
  %v543 = vpop.f32.mrb[0].mxu0
  %544 = vmatprep.mubr.f32.mxu0 %v138
  %545 = vmatmul.mubr.f32.gmra.mrb[0].mxu0 %v136
  %v546 = vpop.f32.mrb[0].mxu0
  %v547 = vadd.f32 0.0, %v546
  %v548 = vpop.f32.mrb[0].mxu0
  %549 = vdwg.mxu0
  %550 = vmatprep.subr.mxu0 0.0
  %551 = vmatpush1.msra.mxu0 %v462
  %552 = vmatprep.subr.mxu0 0.0
  %553 = vmatpush1.msra.mxu0 %v463
  %554 = vmatprep.subr.mxu0 0.0
  %555 = vmatpush1.msra.mxu0 %v464
  %556 = vmatprep.subr.mxu0 0.0
  %557 = vmatpush1.msra.mxu0 %v465
  %558 = vmatprep.subr.mxu0 0.0
  %559 = vmatpush1.msra.mxu0 %v466
  %560 = vmatprep.subr.mxu0 0.0
  %561 = vmatpush1.msra.mxu0 %v467
  %562 = vmatprep.subr.mxu0 0.0
  %563 = vmatpush1.msra.mxu0 %v468
  %564 = vmatprep.subr.mxu0 0.0
  %565 = vmatpush1.msra.mxu0 %v469
  %566 = vmatprep.subr.mxu0 0.0
  %567 = vmatpush1.msra.mxu0 0.0
  %568 = vmatprep.subr.mxu0 0.0
  %569 = vmatpush1.msra.mxu0 0.0
  %570 = vmatprep.subr.mxu0 0.0
  %571 = vmatpush1.msra.mxu0 0.0
  %572 = vmatprep.subr.mxu0 0.0
  %573 = vmatpush1.msra.mxu0 0.0
  %574 = vmatprep.subr.mxu0 0.0
  %575 = vmatpush1.msra.mxu0 0.0
  %576 = vmatprep.subr.mxu0 0.0
  %577 = vmatpush1.msra.mxu0 0.0
  %578 = vmatprep.subr.mxu0 0.0
  %579 = vmatpush1.msra.mxu0 0.0
  %580 = vmatprep.subr.mxu0 0.0
  %581 = vmatpush1.msra.mxu0 0.0
  %582 = vmatprep.subr.mxu0 0.0
  %583 = vmatpush1.msra.mxu0 0.0
  %584 = vmatprep.subr.mxu0 0.0
  %585 = vmatpush1.msra.mxu0 0.0
  %586 = vmatprep.subr.mxu0 0.0
  %587 = vmatpush1.msra.mxu0 0.0
  %588 = vmatprep.subr.mxu0 0.0
  %589 = vmatpush1.msra.mxu0 0.0
  %590 = vmatprep.subr.mxu0 0.0
  %591 = vmatpush1.msra.mxu0 0.0
  %592 = vmatprep.subr.mxu0 0.0
  %593 = vmatpush1.msra.mxu0 0.0
  %594 = vmatprep.subr.mxu0 0.0
  %595 = vmatpush1.msra.mxu0 0.0
  %596 = vmatprep.subr.mxu0 0.0
  %597 = vmatpush1.msra.mxu0 0.0
  %598 = vmatprep.subr.mxu0 0.0
  %599 = vmatpush1.msra.mxu0 0.0
  %600 = vmatprep.subr.mxu0 0.0
  %601 = vmatpush1.msra.mxu0 0.0
  %602 = vmatprep.subr.mxu0 0.0
  %603 = vmatpush1.msra.mxu0 0.0
  %604 = vmatprep.subr.mxu0 0.0
  %605 = vmatpush1.msra.mxu0 0.0
  %606 = vmatprep.subr.mxu0 0.0
  %607 = vmatpush1.msra.mxu0 0.0
  %608 = vmatprep.subr.mxu0 0.0
  %609 = vmatpush1.msra.mxu0 0.0
  %610 = vmatprep.subr.mxu0 0.0
  %611 = vmatpush1.msra.mxu0 0.0
  %612 = vmatprep.subr.mxu0 0.0
  %613 = vmatpush1.msra.mxu0 0.0
  %614 = vmatprep.mubr.f32.mxu0 0.0
  %615 = vmatmul.mubr.f32.gmra.mrb[0].mxu0 %v262
  %v616 = vpop.f32.mrb[0].mxu0
  %v617 = vadd.f32 %v537, %v616
  %v618 = vpop.f32.mrb[0].mxu0
  %619 = vmatprep.mubr.f32.mxu0 0.0
  %620 = vmatmul.mubr.f32.gmra.mrb[0].mxu0 %v265
  %v621 = vpop.f32.mrb[0].mxu0
  %v622 = vadd.f32 %v542, %v621
  %v623 = vpop.f32.mrb[0].mxu0
  %624 = vmatprep.mubr.f32.mxu0 0.0
  %625 = vmatmul.mubr.f32.gmra.mrb[0].mxu0 %v268
  %v626 = vpop.f32.mrb[0].mxu0
  %v627 = vadd.f32 %v547, %v626
  %v628 = vpop.f32.mrb[0].mxu0
  %629 = vdwg.mxu0
  %630 = vxpose.xlu0.b32.start [1/16] %v417, 128
  %631 = vxpose.xlu0.b32.cont [2/16] %v422, 128
  %632 = vxpose.xlu0.b32.cont [3/16] %v427, 128
  %633 = vxpose.xlu0.b32.cont [4/16] 0.0, 128
  %634 = vxpose.xlu0.b32.cont [5/16] 0.0, 128
  %635 = vxpose.xlu0.b32.cont [6/16] 0.0, 128
  %636 = vxpose.xlu0.b32.cont [7/16] 0.0, 128
  %637 = vxpose.xlu0.b32.cont [8/16] 0.0, 128
  %638 = vxpose.xlu0.b32.cont [9/16] 0.0, 128
  %639 = vxpose.xlu0.b32.cont [10/16] 0.0, 128
  %640 = vxpose.xlu0.b32.cont [11/16] 0.0, 128
  %641 = vxpose.xlu0.b32.cont [12/16] 0.0, 128
  %642 = vxpose.xlu0.b32.cont [13/16] 0.0, 128
  %643 = vxpose.xlu0.b32.cont [14/16] 0.0, 128
  %644 = vxpose.xlu0.b32.cont [15/16] 0.0, 128
  %645 = vxpose.xlu0.b32.end [16/16] 0.0, 128
  %v646 = vpop.trf.xlu0
  %v647 = vpop.trf.xlu0
  %v648 = vpop.trf.xlu0
  %v649 = vpop.trf.xlu0
  %v650 = vpop.trf.xlu0
  %v651 = vpop.trf.xlu0
  %v652 = vpop.trf.xlu0
  %v653 = vpop.trf.xlu0
  %v654 = vpop.trf.xlu0
  %v655 = vpop.trf.xlu0
  %v656 = vpop.trf.xlu0
  %v657 = vpop.trf.xlu0
  %v658 = vpop.trf.xlu0
  %v659 = vpop.trf.xlu0
  %v660 = vpop.trf.xlu0
  %v661 = vpop.trf.xlu0
  %663 = vset.pattern.permute.xlu0 0
  %664 = vperm.xlu0 %663, %v617
  %v665 = vpop.permute.xlu0 %664
  %668 = vset.pattern.permute.xlu0 0
  %669 = vperm.xlu0 %668, %v622
  %v670 = vpop.permute.xlu0 %669
  %673 = vset.pattern.permute.xlu0 0
  %674 = vperm.xlu0 %673, %v627
  %v675 = vpop.permute.xlu0 %674
  %v677 = vlaneseq
  %v678 = vshrl.u32 %v677, 7
  %v679 = vsub.s32 0, %v678
  %v680 = vrot.slane %v646, %v679
  %v681 = vadd.f32 %v665, %v680
  %v682 = vadd.f32 %v670, %v680
  %v683 = vadd.f32 %v675, %v680
  %vm684 = vcmp.gt.f32.partialorder %v681, 0.0
  %vm685 = vcmp.gt.f32.partialorder %v682, 0.0
  %vm686 = vcmp.gt.f32.partialorder %v683, 0.0
  %v687 = vmul.f32 %v681, 0.2
  %v688 = vmul.f32 %v682, 0.2
  %v689 = vmul.f32 %v683, 0.2
  %v690 = vsel %vm684, %v681, %v687
  %v691 = vsel %vm685, %v682, %v688
  %v692 = vsel %vm686, %v683, %v689
  %v693 = vadd.f32 %v690, %v35
  %v694 = vadd.f32 %v691, %v36
  %v695 = vadd.f32 %v692, %v37
  %vm696 = vcmask 162816
  %v697 = vsel %vm696, %v693, -inf
  %698 = vmax.xlane.f32.xlu0 %v697
  %v699 = vpop.xlane.xlu0 %698
  %v700 = vsel %vm696, %v694, -inf
  %701 = vmax.xlane.f32.xlu0 %v700
  %v702 = vpop.xlane.xlu0 %701
  %vm703 = vcmask 158720
  %v704 = vsel %vm703, %v695, -inf
  %705 = vmax.xlane.f32.xlu0 %v704
  %v706 = vpop.xlane.xlu0 %705
  %v707 = vsub.f32 %v693, %v699
  %v708 = vsub.f32 %v694, %v702
  %v709 = vsub.f32 %v695, %v706
  %v710 = vmul.f32 %v707, 1.442695
  %v711 = vpow.pop %v710
  %v712 = vmul.f32 %v708, 1.442695
  %v713 = vpow.pop %v712
  %v714 = vmul.f32 %v709, 1.442695
  %v715 = vpow.pop %v714
  %v716 = vsel %vm696, %v711, 0.0
  %717 = vadd.xlane.f32.xlu0 %v716
  %v718 = vpop.xlane.xlu0 %717
  %v719 = vsel %vm696, %v713, 0.0
  %720 = vadd.xlane.f32.xlu0 %v719
  %v721 = vpop.xlane.xlu0 %720
  %v722 = vsel %vm703, %v715, 0.0
  %723 = vadd.xlane.f32.xlu0 %v722
  %v724 = vpop.xlane.xlu0 %723
  %v725 = vmax.f32 %v718, 1e-20
  %v726 = vmax.f32 %v721, 1e-20
  %v727 = vmax.f32 %v724, 1e-20
  %v728 = vrcp.pop %v725
  %v729 = vrcp.pop %v726
  %v730 = vrcp.pop %v727
  %v731 = vmul.f32 %v725, %v728
  %v732 = vmul.f32 %v726, %v729
  %v733 = vmul.f32 %v727, %v730
  %v734 = vsub.f32 2.0, %v731
  %v735 = vsub.f32 2.0, %v732
  %v736 = vsub.f32 2.0, %v733
  %v737 = vmul.f32 %v728, %v734
  %v738 = vmul.f32 %v729, %v735
  %v739 = vmul.f32 %v730, %v736
  %v740 = vmul.f32 %v711, %v737
  %v741 = vmul.f32 %v713, %v738
  %v742 = vmul.f32 %v715, %v739
  %743 = vset.pattern.permute.xlu0 1
  %744 = vperm.xlu0 %743, %v617
  %v745 = vpop.permute.xlu0 %744
  %747 = vset.pattern.permute.xlu0 1
  %748 = vperm.xlu0 %747, %v622
  %v749 = vpop.permute.xlu0 %748
  %751 = vset.pattern.permute.xlu0 1
  %752 = vperm.xlu0 %751, %v627
  %v753 = vpop.permute.xlu0 %752
  %v755 = vlaneseq
  %v756 = vshrl.u32 %v755, 7
  %v757 = vsub.s32 1, %v756
  %v758 = vrot.slane %v646, %v757
  %v759 = vadd.f32 %v745, %v758
  %v760 = vadd.f32 %v749, %v758
  %v761 = vadd.f32 %v753, %v758
  %vm762 = vcmp.gt.f32.partialorder %v759, 0.0
  %vm763 = vcmp.gt.f32.partialorder %v760, 0.0
  %vm764 = vcmp.gt.f32.partialorder %v761, 0.0
  %v765 = vmul.f32 %v759, 0.2
  %v766 = vmul.f32 %v760, 0.2
  %v767 = vmul.f32 %v761, 0.2
  %v768 = vsel %vm762, %v759, %v765
  %v769 = vsel %vm763, %v760, %v766
  %v770 = vsel %vm764, %v761, %v767
  %v771 = vadd.f32 %v768, %v35
  %v772 = vadd.f32 %v769, %v36
  %v773 = vadd.f32 %v770, %v37
  %v774 = vsel %vm696, %v771, -inf
  %775 = vmax.xlane.f32.xlu0 %v774
  %v776 = vpop.xlane.xlu0 %775
  %v777 = vsel %vm696, %v772, -inf
  %778 = vmax.xlane.f32.xlu0 %v777
  %v779 = vpop.xlane.xlu0 %778
  %v780 = vsel %vm703, %v773, -inf
  %781 = vmax.xlane.f32.xlu0 %v780
  %v782 = vpop.xlane.xlu0 %781
  %v783 = vsub.f32 %v771, %v776
  %v784 = vsub.f32 %v772, %v779
  %v785 = vsub.f32 %v773, %v782
  %v786 = vmul.f32 %v783, 1.442695
  %v787 = vpow.pop %v786
  %v788 = vmul.f32 %v784, 1.442695
  %v789 = vpow.pop %v788
  %v790 = vmul.f32 %v785, 1.442695
  %v791 = vpow.pop %v790
  %v792 = vsel %vm696, %v787, 0.0
  %793 = vadd.xlane.f32.xlu0 %v792
  %v794 = vpop.xlane.xlu0 %793
  %v795 = vsel %vm696, %v789, 0.0
  %796 = vadd.xlane.f32.xlu0 %v795
  %v797 = vpop.xlane.xlu0 %796
  %v798 = vsel %vm703, %v791, 0.0
  %799 = vadd.xlane.f32.xlu0 %v798
  %v800 = vpop.xlane.xlu0 %799
  %v801 = vmax.f32 %v794, 1e-20
  %v802 = vmax.f32 %v797, 1e-20
  %v803 = vmax.f32 %v800, 1e-20
  %v804 = vrcp.pop %v801
  %v805 = vrcp.pop %v802
  %v806 = vrcp.pop %v803
  %v807 = vmul.f32 %v801, %v804
  %v808 = vmul.f32 %v802, %v805
  %v809 = vmul.f32 %v803, %v806
  %v810 = vsub.f32 2.0, %v807
  %v811 = vsub.f32 2.0, %v808
  %v812 = vsub.f32 2.0, %v809
  %v813 = vmul.f32 %v804, %v810
  %v814 = vmul.f32 %v805, %v811
  %v815 = vmul.f32 %v806, %v812
  %v816 = vmul.f32 %v787, %v813
  %v817 = vmul.f32 %v789, %v814
  %v818 = vmul.f32 %v791, %v815
  %822 = vrot.lane.b32.xlu0 %v124, 96
  %v823 = vpop.permute.xlu0 %822
  %824 = vrot.lane.b32.xlu0 %v130, 96
  %v825 = vpop.permute.xlu0 %824
  %826 = vrot.lane.b32.xlu0 %v136, 96
  %v827 = vpop.permute.xlu0 %826
  %v831 = vsel %vm696, %v816, 0
  %v834 = vsel %vm696, %v817, 0
  %v837 = vsel %vm696, %v818, 0
  %vm839 = vcmask 1043456
  %v840 = vsel %vm839, %v827, 0
  %842 = vmatprep.subr.mxu0 0.0
  %843 = vmatpush1.msra.mxu0 %v823
  %844 = vmatprep.subr.mxu0 0.0
  %845 = vmatpush1.msra.mxu0 %v825
  %846 = vmatprep.subr.mxu0 0.0
  %847 = vmatpush1.msra.mxu0 %v840
  %848 = vmatprep.subr.mxu0 0.0
  %849 = vmatpush1.msra.mxu0 0.0
  %850 = vmatprep.subr.mxu0 0.0
  %851 = vmatpush1.msra.mxu0 0.0
  %852 = vmatprep.subr.mxu0 0.0
  %853 = vmatpush1.msra.mxu0 0.0
  %854 = vmatprep.subr.mxu0 0.0
  %855 = vmatpush1.msra.mxu0 0.0
  %856 = vmatprep.subr.mxu0 0.0
  %857 = vmatpush1.msra.mxu0 0.0
  %858 = vmatprep.subr.mxu0 0.0
  %859 = vmatpush1.msra.mxu0 0.0
  %860 = vmatprep.subr.mxu0 0.0
  %861 = vmatpush1.msra.mxu0 0.0
  %862 = vmatprep.subr.mxu0 0.0
  %863 = vmatpush1.msra.mxu0 0.0
  %864 = vmatprep.subr.mxu0 0.0
  %865 = vmatpush1.msra.mxu0 0.0
  %866 = vmatprep.subr.mxu0 0.0
  %867 = vmatpush1.msra.mxu0 0.0
  %868 = vmatprep.subr.mxu0 0.0
  %869 = vmatpush1.msra.mxu0 0.0
  %870 = vmatprep.subr.mxu0 0.0
  %871 = vmatpush1.msra.mxu0 0.0
  %872 = vmatprep.subr.mxu0 0.0
  %873 = vmatpush1.msra.mxu0 0.0
  %874 = vmatprep.subr.mxu0 0.0
  %875 = vmatpush1.msra.mxu0 0.0
  %876 = vmatprep.subr.mxu0 0.0
  %877 = vmatpush1.msra.mxu0 0.0
  %878 = vmatprep.subr.mxu0 0.0
  %879 = vmatpush1.msra.mxu0 0.0
  %880 = vmatprep.subr.mxu0 0.0
  %881 = vmatpush1.msra.mxu0 0.0
  %882 = vmatprep.subr.mxu0 0.0
  %883 = vmatpush1.msra.mxu0 0.0
  %884 = vmatprep.subr.mxu0 0.0
  %885 = vmatpush1.msra.mxu0 0.0
  %886 = vmatprep.subr.mxu0 0.0
  %887 = vmatpush1.msra.mxu0 0.0
  %888 = vmatprep.subr.mxu0 0.0
  %889 = vmatpush1.msra.mxu0 0.0
  %890 = vmatprep.subr.mxu0 0.0
  %891 = vmatpush1.msra.mxu0 0.0
  %892 = vmatprep.subr.mxu0 0.0
  %893 = vmatpush1.msra.mxu0 0.0
  %894 = vmatprep.subr.mxu0 0.0
  %895 = vmatpush1.msra.mxu0 0.0
  %896 = vmatprep.subr.mxu0 0.0
  %897 = vmatpush1.msra.mxu0 0.0
  %898 = vmatprep.subr.mxu0 0.0
  %899 = vmatpush1.msra.mxu0 0.0
  %900 = vmatprep.subr.mxu0 0.0
  %901 = vmatpush1.msra.mxu0 0.0
  %902 = vmatprep.subr.mxu0 0.0
  %903 = vmatpush1.msra.mxu0 0.0
  %904 = vmatprep.subr.mxu0 0.0
  %905 = vmatpush1.msra.mxu0 0.0
  %906 = vmatprep.mubr.f32.mxu0 0.0
  %907 = vmatmul.mubr.f32.gmra.mrb[0].mxu0 %v831
  %v908 = vpop.f32.mrb[0].mxu0
  %v909 = vadd.f32 0.0, %v908
  %v910 = vpop.f32.mrb[0].mxu0
  %911 = vmatprep.mubr.f32.mxu0 0.0
  %912 = vmatmul.mubr.f32.gmra.mrb[0].mxu0 %v834
  %v913 = vpop.f32.mrb[0].mxu0
  %v914 = vadd.f32 0.0, %v913
  %v915 = vpop.f32.mrb[0].mxu0
  %916 = vmatprep.mubr.f32.mxu0 0.0
  %917 = vmatmul.mubr.f32.gmra.mrb[0].mxu0 %v837
  %v918 = vpop.f32.mrb[0].mxu0
  %v919 = vadd.f32 0.0, %v918
  %v920 = vpop.f32.mrb[0].mxu0
  %921 = vdwg.mxu0
  %v923 = vsel %vm696, %v740, 0
  %v926 = vsel %vm696, %v741, 0
  %v929 = vsel %vm696, %v742, 0
  %v931 = vsel %vm839, %v136, 0
  %933 = vmatprep.subr.mxu0 0.0
  %934 = vmatpush1.msra.mxu0 %v124
  %935 = vmatprep.subr.mxu0 0.0
  %936 = vmatpush1.msra.mxu0 %v130
  %937 = vmatprep.subr.mxu0 0.0
  %938 = vmatpush1.msra.mxu0 %v931
  %939 = vmatprep.subr.mxu0 0.0
  %940 = vmatpush1.msra.mxu0 0.0
  %941 = vmatprep.subr.mxu0 0.0
  %942 = vmatpush1.msra.mxu0 0.0
  %943 = vmatprep.subr.mxu0 0.0
  %944 = vmatpush1.msra.mxu0 0.0
  %945 = vmatprep.subr.mxu0 0.0
  %946 = vmatpush1.msra.mxu0 0.0
  %947 = vmatprep.subr.mxu0 0.0
  %948 = vmatpush1.msra.mxu0 0.0
  %949 = vmatprep.subr.mxu0 0.0
  %950 = vmatpush1.msra.mxu0 0.0
  %951 = vmatprep.subr.mxu0 0.0
  %952 = vmatpush1.msra.mxu0 0.0
  %953 = vmatprep.subr.mxu0 0.0
  %954 = vmatpush1.msra.mxu0 0.0
  %955 = vmatprep.subr.mxu0 0.0
  %956 = vmatpush1.msra.mxu0 0.0
  %957 = vmatprep.subr.mxu0 0.0
  %958 = vmatpush1.msra.mxu0 0.0
  %959 = vmatprep.subr.mxu0 0.0
  %960 = vmatpush1.msra.mxu0 0.0
  %961 = vmatprep.subr.mxu0 0.0
  %962 = vmatpush1.msra.mxu0 0.0
  %963 = vmatprep.subr.mxu0 0.0
  %964 = vmatpush1.msra.mxu0 0.0
  %965 = vmatprep.subr.mxu0 0.0
  %966 = vmatpush1.msra.mxu0 0.0
  %967 = vmatprep.subr.mxu0 0.0
  %968 = vmatpush1.msra.mxu0 0.0
  %969 = vmatprep.subr.mxu0 0.0
  %970 = vmatpush1.msra.mxu0 0.0
  %971 = vmatprep.subr.mxu0 0.0
  %972 = vmatpush1.msra.mxu0 0.0
  %973 = vmatprep.subr.mxu0 0.0
  %974 = vmatpush1.msra.mxu0 0.0
  %975 = vmatprep.subr.mxu0 0.0
  %976 = vmatpush1.msra.mxu0 0.0
  %977 = vmatprep.subr.mxu0 0.0
  %978 = vmatpush1.msra.mxu0 0.0
  %979 = vmatprep.subr.mxu0 0.0
  %980 = vmatpush1.msra.mxu0 0.0
  %981 = vmatprep.subr.mxu0 0.0
  %982 = vmatpush1.msra.mxu0 0.0
  %983 = vmatprep.subr.mxu0 0.0
  %984 = vmatpush1.msra.mxu0 0.0
  %985 = vmatprep.subr.mxu0 0.0
  %986 = vmatpush1.msra.mxu0 0.0
  %987 = vmatprep.subr.mxu0 0.0
  %988 = vmatpush1.msra.mxu0 0.0
  %989 = vmatprep.subr.mxu0 0.0
  %990 = vmatpush1.msra.mxu0 0.0
  %991 = vmatprep.subr.mxu0 0.0
  %992 = vmatpush1.msra.mxu0 0.0
  %993 = vmatprep.subr.mxu0 0.0
  %994 = vmatpush1.msra.mxu0 0.0
  %995 = vmatprep.subr.mxu0 0.0
  %996 = vmatpush1.msra.mxu0 0.0
  %997 = vmatprep.mubr.f32.mxu0 0.0
  %998 = vmatmul.mubr.f32.gmra.mrb[0].mxu0 %v923
  %v999 = vpop.f32.mrb[0].mxu0
  %v1000 = vadd.f32 %v909, %v999
  %v1001 = vpop.f32.mrb[0].mxu0
  %1002 = vmatprep.mubr.f32.mxu0 0.0
  %1003 = vmatmul.mubr.f32.gmra.mrb[0].mxu0 %v926
  %v1004 = vpop.f32.mrb[0].mxu0
  %v1005 = vadd.f32 %v914, %v1004
  %v1006 = vpop.f32.mrb[0].mxu0
  %1007 = vmatprep.mubr.f32.mxu0 0.0
  %1008 = vmatmul.mubr.f32.gmra.mrb[0].mxu0 %v929
  %v1009 = vpop.f32.mrb[0].mxu0
  %v1010 = vadd.f32 %v919, %v1009
  %v1011 = vpop.f32.mrb[0].mxu0
  %1012 = vdwg.mxu0
  %1013 = vset.pattern.permute.xlu0 2
  %1014 = vperm.xlu0 %1013, %v617
  %v1015 = vpop.permute.xlu0 %1014
  %1017 = vset.pattern.permute.xlu0 2
  %1018 = vperm.xlu0 %1017, %v622
  %v1019 = vpop.permute.xlu0 %1018
  %1021 = vset.pattern.permute.xlu0 2
  %1022 = vperm.xlu0 %1021, %v627
  %v1023 = vpop.permute.xlu0 %1022
  %v1025 = vlaneseq
  %v1026 = vshrl.u32 %v1025, 7
  %v1027 = vsub.s32 2, %v1026
  %v1028 = vrot.slane %v646, %v1027
  %v1029 = vadd.f32 %v1015, %v1028
  %v1030 = vadd.f32 %v1019, %v1028
  %v1031 = vadd.f32 %v1023, %v1028
  %vm1032 = vcmp.gt.f32.partialorder %v1029, 0.0
  %vm1033 = vcmp.gt.f32.partialorder %v1030, 0.0
  %vm1034 = vcmp.gt.f32.partialorder %v1031, 0.0
  %v1035 = vmul.f32 %v1029, 0.2
  %v1036 = vmul.f32 %v1030, 0.2
  %v1037 = vmul.f32 %v1031, 0.2
  %v1038 = vsel %vm1032, %v1029, %v1035
  %v1039 = vsel %vm1033, %v1030, %v1036
  %v1040 = vsel %vm1034, %v1031, %v1037
  %v1041 = vadd.f32 %v1038, %v35
  %v1042 = vadd.f32 %v1039, %v36
  %v1043 = vadd.f32 %v1040, %v37
  %v1044 = vsel %vm696, %v1041, -inf
  %1045 = vmax.xlane.f32.xlu0 %v1044
  %v1046 = vpop.xlane.xlu0 %1045
  %v1047 = vsel %vm696, %v1042, -inf
  %1048 = vmax.xlane.f32.xlu0 %v1047
  %v1049 = vpop.xlane.xlu0 %1048
  %v1050 = vsel %vm703, %v1043, -inf
  %1051 = vmax.xlane.f32.xlu0 %v1050
  %v1052 = vpop.xlane.xlu0 %1051
  %v1053 = vsub.f32 %v1041, %v1046
  %v1054 = vsub.f32 %v1042, %v1049
  %v1055 = vsub.f32 %v1043, %v1052
  %v1056 = vmul.f32 %v1053, 1.442695
  %v1057 = vpow.pop %v1056
  %v1058 = vmul.f32 %v1054, 1.442695
  %v1059 = vpow.pop %v1058
  %v1060 = vmul.f32 %v1055, 1.442695
  %v1061 = vpow.pop %v1060
  %v1062 = vsel %vm696, %v1057, 0.0
  %1063 = vadd.xlane.f32.xlu0 %v1062
  %v1064 = vpop.xlane.xlu0 %1063
  %v1065 = vsel %vm696, %v1059, 0.0
  %1066 = vadd.xlane.f32.xlu0 %v1065
  %v1067 = vpop.xlane.xlu0 %1066
  %v1068 = vsel %vm703, %v1061, 0.0
  %1069 = vadd.xlane.f32.xlu0 %v1068
  %v1070 = vpop.xlane.xlu0 %1069
  %v1071 = vmax.f32 %v1064, 1e-20
  %v1072 = vmax.f32 %v1067, 1e-20
  %v1073 = vmax.f32 %v1070, 1e-20
  %v1074 = vrcp.pop %v1071
  %v1075 = vrcp.pop %v1072
  %v1076 = vrcp.pop %v1073
  %v1077 = vmul.f32 %v1071, %v1074
  %v1078 = vmul.f32 %v1072, %v1075
  %v1079 = vmul.f32 %v1073, %v1076
  %v1080 = vsub.f32 2.0, %v1077
  %v1081 = vsub.f32 2.0, %v1078
  %v1082 = vsub.f32 2.0, %v1079
  %v1083 = vmul.f32 %v1074, %v1080
  %v1084 = vmul.f32 %v1075, %v1081
  %v1085 = vmul.f32 %v1076, %v1082
  %v1086 = vmul.f32 %v1057, %v1083
  %v1087 = vmul.f32 %v1059, %v1084
  %v1088 = vmul.f32 %v1061, %v1085
  %1089 = vrot.lane.b32.xlu0 %v124, 64
  %v1090 = vpop.permute.xlu0 %1089
  %1091 = vrot.lane.b32.xlu0 %v130, 64
  %v1092 = vpop.permute.xlu0 %1091
  %1093 = vrot.lane.b32.xlu0 %v136, 64
  %v1094 = vpop.permute.xlu0 %1093
  %v1098 = vsel %vm696, %v1086, 0
  %v1101 = vsel %vm696, %v1087, 0
  %v1104 = vsel %vm696, %v1088, 0
  %v1106 = vsel %vm839, %v1094, 0
  %1108 = vmatprep.subr.mxu0 0.0
  %1109 = vmatpush1.msra.mxu0 %v1090
  %1110 = vmatprep.subr.mxu0 0.0
  %1111 = vmatpush1.msra.mxu0 %v1092
  %1112 = vmatprep.subr.mxu0 0.0
  %1113 = vmatpush1.msra.mxu0 %v1106
  %1114 = vmatprep.subr.mxu0 0.0
  %1115 = vmatpush1.msra.mxu0 0.0
  %1116 = vmatprep.subr.mxu0 0.0
  %1117 = vmatpush1.msra.mxu0 0.0
  %1118 = vmatprep.subr.mxu0 0.0
  %1119 = vmatpush1.msra.mxu0 0.0
  %1120 = vmatprep.subr.mxu0 0.0
  %1121 = vmatpush1.msra.mxu0 0.0
  %1122 = vmatprep.subr.mxu0 0.0
  %1123 = vmatpush1.msra.mxu0 0.0
  %1124 = vmatprep.subr.mxu0 0.0
  %1125 = vmatpush1.msra.mxu0 0.0
  %1126 = vmatprep.subr.mxu0 0.0
  %1127 = vmatpush1.msra.mxu0 0.0
  %1128 = vmatprep.subr.mxu0 0.0
  %1129 = vmatpush1.msra.mxu0 0.0
  %1130 = vmatprep.subr.mxu0 0.0
  %1131 = vmatpush1.msra.mxu0 0.0
  %1132 = vmatprep.subr.mxu0 0.0
  %1133 = vmatpush1.msra.mxu0 0.0
  %1134 = vmatprep.subr.mxu0 0.0
  %1135 = vmatpush1.msra.mxu0 0.0
  %1136 = vmatprep.subr.mxu0 0.0
  %1137 = vmatpush1.msra.mxu0 0.0
  %1138 = vmatprep.subr.mxu0 0.0
  %1139 = vmatpush1.msra.mxu0 0.0
  %1140 = vmatprep.subr.mxu0 0.0
  %1141 = vmatpush1.msra.mxu0 0.0
  %1142 = vmatprep.subr.mxu0 0.0
  %1143 = vmatpush1.msra.mxu0 0.0
  %1144 = vmatprep.subr.mxu0 0.0
  %1145 = vmatpush1.msra.mxu0 0.0
  %1146 = vmatprep.subr.mxu0 0.0
  %1147 = vmatpush1.msra.mxu0 0.0
  %1148 = vmatprep.subr.mxu0 0.0
  %1149 = vmatpush1.msra.mxu0 0.0
  %1150 = vmatprep.subr.mxu0 0.0
  %1151 = vmatpush1.msra.mxu0 0.0
  %1152 = vmatprep.subr.mxu0 0.0
  %1153 = vmatpush1.msra.mxu0 0.0
  %1154 = vmatprep.subr.mxu0 0.0
  %1155 = vmatpush1.msra.mxu0 0.0
  %1156 = vmatprep.subr.mxu0 0.0
  %1157 = vmatpush1.msra.mxu0 0.0
  %1158 = vmatprep.subr.mxu0 0.0
  %1159 = vmatpush1.msra.mxu0 0.0
  %1160 = vmatprep.subr.mxu0 0.0
  %1161 = vmatpush1.msra.mxu0 0.0
  %1162 = vmatprep.subr.mxu0 0.0
  %1163 = vmatpush1.msra.mxu0 0.0
  %1164 = vmatprep.subr.mxu0 0.0
  %1165 = vmatpush1.msra.mxu0 0.0
  %1166 = vmatprep.subr.mxu0 0.0
  %1167 = vmatpush1.msra.mxu0 0.0
  %1168 = vmatprep.subr.mxu0 0.0
  %1169 = vmatpush1.msra.mxu0 0.0
  %1170 = vmatprep.subr.mxu0 0.0
  %1171 = vmatpush1.msra.mxu0 0.0
  %1172 = vmatprep.mubr.f32.mxu0 0.0
  %1173 = vmatmul.mubr.f32.gmra.mrb[0].mxu0 %v1098
  %v1174 = vpop.f32.mrb[0].mxu0
  %v1175 = vadd.f32 0.0, %v1174
  %v1176 = vpop.f32.mrb[0].mxu0
  %1177 = vmatprep.mubr.f32.mxu0 0.0
  %1178 = vmatmul.mubr.f32.gmra.mrb[0].mxu0 %v1101
  %v1179 = vpop.f32.mrb[0].mxu0
  %v1180 = vadd.f32 0.0, %v1179
  %v1181 = vpop.f32.mrb[0].mxu0
  %1182 = vmatprep.mubr.f32.mxu0 0.0
  %1183 = vmatmul.mubr.f32.gmra.mrb[0].mxu0 %v1104
  %v1184 = vpop.f32.mrb[0].mxu0
  %v1185 = vadd.f32 0.0, %v1184
  %v1186 = vpop.f32.mrb[0].mxu0
  %1187 = vdwg.mxu0
  %v1188 = vadd.f32 %v1000, %v1175
  %v1189 = vadd.f32 %v1005, %v1180
  %v1190 = vadd.f32 %v1010, %v1185
  %1191 = vset.pattern.permute.xlu0 3
  %1192 = vperm.xlu0 %1191, %v617
  %v1193 = vpop.permute.xlu0 %1192
  %1195 = vset.pattern.permute.xlu0 3
  %1196 = vperm.xlu0 %1195, %v622
  %v1197 = vpop.permute.xlu0 %1196
  %1199 = vset.pattern.permute.xlu0 3
  %1200 = vperm.xlu0 %1199, %v627
  %v1201 = vpop.permute.xlu0 %1200
  %v1203 = vlaneseq
  %v1204 = vshrl.u32 %v1203, 7
  %v1205 = vsub.s32 3, %v1204
  %v1206 = vrot.slane %v646, %v1205
  %v1207 = vadd.f32 %v1193, %v1206
  %v1208 = vadd.f32 %v1197, %v1206
  %v1209 = vadd.f32 %v1201, %v1206
  %vm1210 = vcmp.gt.f32.partialorder %v1207, 0.0
  %vm1211 = vcmp.gt.f32.partialorder %v1208, 0.0
  %vm1212 = vcmp.gt.f32.partialorder %v1209, 0.0
  %v1213 = vmul.f32 %v1207, 0.2
  %v1214 = vmul.f32 %v1208, 0.2
  %v1215 = vmul.f32 %v1209, 0.2
  %v1216 = vsel %vm1210, %v1207, %v1213
  %v1217 = vsel %vm1211, %v1208, %v1214
  %v1218 = vsel %vm1212, %v1209, %v1215
  %v1219 = vadd.f32 %v1216, %v35
  %v1220 = vadd.f32 %v1217, %v36
  %v1221 = vadd.f32 %v1218, %v37
  %v1222 = vsel %vm696, %v1219, -inf
  %1223 = vmax.xlane.f32.xlu0 %v1222
  %v1224 = vpop.xlane.xlu0 %1223
  %v1225 = vsel %vm696, %v1220, -inf
  %1226 = vmax.xlane.f32.xlu0 %v1225
  %v1227 = vpop.xlane.xlu0 %1226
  %v1228 = vsel %vm703, %v1221, -inf
  %1229 = vmax.xlane.f32.xlu0 %v1228
  %v1230 = vpop.xlane.xlu0 %1229
  %v1231 = vsub.f32 %v1219, %v1224
  %v1232 = vsub.f32 %v1220, %v1227
  %v1233 = vsub.f32 %v1221, %v1230
  %v1234 = vmul.f32 %v1231, 1.442695
  %v1235 = vpow.pop %v1234
  %v1236 = vmul.f32 %v1232, 1.442695
  %v1237 = vpow.pop %v1236
  %v1238 = vmul.f32 %v1233, 1.442695
  %v1239 = vpow.pop %v1238
  %v1240 = vsel %vm696, %v1235, 0.0
  %1241 = vadd.xlane.f32.xlu0 %v1240
  %v1242 = vpop.xlane.xlu0 %1241
  %v1243 = vsel %vm696, %v1237, 0.0
  %1244 = vadd.xlane.f32.xlu0 %v1243
  %v1245 = vpop.xlane.xlu0 %1244
  %v1246 = vsel %vm703, %v1239, 0.0
  %1247 = vadd.xlane.f32.xlu0 %v1246
  %v1248 = vpop.xlane.xlu0 %1247
  %v1249 = vmax.f32 %v1242, 1e-20
  %v1250 = vmax.f32 %v1245, 1e-20
  %v1251 = vmax.f32 %v1248, 1e-20
  %v1252 = vrcp.pop %v1249
  %v1253 = vrcp.pop %v1250
  %v1254 = vrcp.pop %v1251
  %v1255 = vmul.f32 %v1249, %v1252
  %v1256 = vmul.f32 %v1250, %v1253
  %v1257 = vmul.f32 %v1251, %v1254
  %v1258 = vsub.f32 2.0, %v1255
  %v1259 = vsub.f32 2.0, %v1256
  %v1260 = vsub.f32 2.0, %v1257
  %v1261 = vmul.f32 %v1252, %v1258
  %v1262 = vmul.f32 %v1253, %v1259
  %v1263 = vmul.f32 %v1254, %v1260
  %v1264 = vmul.f32 %v1235, %v1261
  %v1265 = vmul.f32 %v1237, %v1262
  %v1266 = vmul.f32 %v1239, %v1263
  %1267 = vrot.lane.b32.xlu0 %v124, 32
  %v1268 = vpop.permute.xlu0 %1267
  %1269 = vrot.lane.b32.xlu0 %v130, 32
  %v1270 = vpop.permute.xlu0 %1269
  %1271 = vrot.lane.b32.xlu0 %v136, 32
  %v1272 = vpop.permute.xlu0 %1271
  %v1276 = vsel %vm696, %v1264, 0
  %v1279 = vsel %vm696, %v1265, 0
  %v1282 = vsel %vm696, %v1266, 0
  %v1284 = vsel %vm839, %v1272, 0
  %1286 = vmatprep.subr.mxu0 0.0
  %1287 = vmatpush1.msra.mxu0 %v1268
  %1288 = vmatprep.subr.mxu0 0.0
  %1289 = vmatpush1.msra.mxu0 %v1270
  %1290 = vmatprep.subr.mxu0 0.0
  %1291 = vmatpush1.msra.mxu0 %v1284
  %1292 = vmatprep.subr.mxu0 0.0
  %1293 = vmatpush1.msra.mxu0 0.0
  %1294 = vmatprep.subr.mxu0 0.0
  %1295 = vmatpush1.msra.mxu0 0.0
  %1296 = vmatprep.subr.mxu0 0.0
  %1297 = vmatpush1.msra.mxu0 0.0
  %1298 = vmatprep.subr.mxu0 0.0
  %1299 = vmatpush1.msra.mxu0 0.0
  %1300 = vmatprep.subr.mxu0 0.0
  %1301 = vmatpush1.msra.mxu0 0.0
  %1302 = vmatprep.subr.mxu0 0.0
  %1303 = vmatpush1.msra.mxu0 0.0
  %1304 = vmatprep.subr.mxu0 0.0
  %1305 = vmatpush1.msra.mxu0 0.0
  %1306 = vmatprep.subr.mxu0 0.0
  %1307 = vmatpush1.msra.mxu0 0.0
  %1308 = vmatprep.subr.mxu0 0.0
  %1309 = vmatpush1.msra.mxu0 0.0
  %1310 = vmatprep.subr.mxu0 0.0
  %1311 = vmatpush1.msra.mxu0 0.0
  %1312 = vmatprep.subr.mxu0 0.0
  %1313 = vmatpush1.msra.mxu0 0.0
  %1314 = vmatprep.subr.mxu0 0.0
  %1315 = vmatpush1.msra.mxu0 0.0
  %1316 = vmatprep.subr.mxu0 0.0
  %1317 = vmatpush1.msra.mxu0 0.0
  %1318 = vmatprep.subr.mxu0 0.0
  %1319 = vmatpush1.msra.mxu0 0.0
  %1320 = vmatprep.subr.mxu0 0.0
  %1321 = vmatpush1.msra.mxu0 0.0
  %1322 = vmatprep.subr.mxu0 0.0
  %1323 = vmatpush1.msra.mxu0 0.0
  %1324 = vmatprep.subr.mxu0 0.0
  %1325 = vmatpush1.msra.mxu0 0.0
  %1326 = vmatprep.subr.mxu0 0.0
  %1327 = vmatpush1.msra.mxu0 0.0
  %1328 = vmatprep.subr.mxu0 0.0
  %1329 = vmatpush1.msra.mxu0 0.0
  %1330 = vmatprep.subr.mxu0 0.0
  %1331 = vmatpush1.msra.mxu0 0.0
  %1332 = vmatprep.subr.mxu0 0.0
  %1333 = vmatpush1.msra.mxu0 0.0
  %1334 = vmatprep.subr.mxu0 0.0
  %1335 = vmatpush1.msra.mxu0 0.0
  %1336 = vmatprep.subr.mxu0 0.0
  %1337 = vmatpush1.msra.mxu0 0.0
  %1338 = vmatprep.subr.mxu0 0.0
  %1339 = vmatpush1.msra.mxu0 0.0
  %1340 = vmatprep.subr.mxu0 0.0
  %1341 = vmatpush1.msra.mxu0 0.0
  %1342 = vmatprep.subr.mxu0 0.0
  %1343 = vmatpush1.msra.mxu0 0.0
  %1344 = vmatprep.subr.mxu0 0.0
  %1345 = vmatpush1.msra.mxu0 0.0
  %1346 = vmatprep.subr.mxu0 0.0
  %1347 = vmatpush1.msra.mxu0 0.0
  %1348 = vmatprep.subr.mxu0 0.0
  %1349 = vmatpush1.msra.mxu0 0.0
  %1350 = vmatprep.mubr.f32.mxu0 0.0
  %1351 = vmatmul.mubr.f32.gmra.mrb[0].mxu0 %v1276
  %v1352 = vpop.f32.mrb[0].mxu0
  %v1353 = vadd.f32 0.0, %v1352
  %v1354 = vpop.f32.mrb[0].mxu0
  %1355 = vmatprep.mubr.f32.mxu0 0.0
  %1356 = vmatmul.mubr.f32.gmra.mrb[0].mxu0 %v1279
  %v1357 = vpop.f32.mrb[0].mxu0
  %v1358 = vadd.f32 0.0, %v1357
  %v1359 = vpop.f32.mrb[0].mxu0
  %1360 = vmatprep.mubr.f32.mxu0 0.0
  %1361 = vmatmul.mubr.f32.gmra.mrb[0].mxu0 %v1282
  %v1362 = vpop.f32.mrb[0].mxu0
  %v1363 = vadd.f32 0.0, %v1362
  %v1364 = vpop.f32.mrb[0].mxu0
  %1365 = vdwg.mxu0
  %v1366 = vadd.f32 %v1188, %v1353
  %v1367 = vadd.f32 %v1189, %v1358
  %v1368 = vadd.f32 %v1190, %v1363
  %1369 = vset.pattern.permute.xlu0 4
  %1370 = vperm.xlu0 %1369, %v617
  %v1371 = vpop.permute.xlu0 %1370
  %1373 = vset.pattern.permute.xlu0 4
  %1374 = vperm.xlu0 %1373, %v622
  %v1375 = vpop.permute.xlu0 %1374
  %1377 = vset.pattern.permute.xlu0 4
  %1378 = vperm.xlu0 %1377, %v627
  %v1379 = vpop.permute.xlu0 %1378
  %v1381 = vlaneseq
  %v1382 = vshrl.u32 %v1381, 7
  %v1383 = vsub.s32 4, %v1382
  %v1384 = vrot.slane %v646, %v1383
  %v1385 = vadd.f32 %v1371, %v1384
  %v1386 = vadd.f32 %v1375, %v1384
  %v1387 = vadd.f32 %v1379, %v1384
  %vm1388 = vcmp.gt.f32.partialorder %v1385, 0.0
  %vm1389 = vcmp.gt.f32.partialorder %v1386, 0.0
  %vm1390 = vcmp.gt.f32.partialorder %v1387, 0.0
  %v1391 = vmul.f32 %v1385, 0.2
  %v1392 = vmul.f32 %v1386, 0.2
  %v1393 = vmul.f32 %v1387, 0.2
  %v1394 = vsel %vm1388, %v1385, %v1391
  %v1395 = vsel %vm1389, %v1386, %v1392
  %v1396 = vsel %vm1390, %v1387, %v1393
  %v1397 = vadd.f32 %v1394, %v35
  %v1398 = vadd.f32 %v1395, %v36
  %v1399 = vadd.f32 %v1396, %v37
  %v1400 = vsel %vm696, %v1397, -inf
  %1401 = vmax.xlane.f32.xlu0 %v1400
  %v1402 = vpop.xlane.xlu0 %1401
  %v1403 = vsel %vm696, %v1398, -inf
  %1404 = vmax.xlane.f32.xlu0 %v1403
  %v1405 = vpop.xlane.xlu0 %1404
  %v1406 = vsel %vm703, %v1399, -inf
  %1407 = vmax.xlane.f32.xlu0 %v1406
  %v1408 = vpop.xlane.xlu0 %1407
  %v1409 = vsub.f32 %v1397, %v1402
  %v1410 = vsub.f32 %v1398, %v1405
  %v1411 = vsub.f32 %v1399, %v1408
  %v1412 = vmul.f32 %v1409, 1.442695
  %v1413 = vpow.pop %v1412
  %v1414 = vmul.f32 %v1410, 1.442695
  %v1415 = vpow.pop %v1414
  %v1416 = vmul.f32 %v1411, 1.442695
  %v1417 = vpow.pop %v1416
  %v1418 = vsel %vm696, %v1413, 0.0
  %1419 = vadd.xlane.f32.xlu0 %v1418
  %v1420 = vpop.xlane.xlu0 %1419
  %v1421 = vsel %vm696, %v1415, 0.0
  %1422 = vadd.xlane.f32.xlu0 %v1421
  %v1423 = vpop.xlane.xlu0 %1422
  %v1424 = vsel %vm703, %v1417, 0.0
  %1425 = vadd.xlane.f32.xlu0 %v1424
  %v1426 = vpop.xlane.xlu0 %1425
  %v1427 = vmax.f32 %v1420, 1e-20
  %v1428 = vmax.f32 %v1423, 1e-20
  %v1429 = vmax.f32 %v1426, 1e-20
  %v1430 = vrcp.pop %v1427
  %v1431 = vrcp.pop %v1428
  %v1432 = vrcp.pop %v1429
  %v1433 = vmul.f32 %v1427, %v1430
  %v1434 = vmul.f32 %v1428, %v1431
  %v1435 = vmul.f32 %v1429, %v1432
  %v1436 = vsub.f32 2.0, %v1433
  %v1437 = vsub.f32 2.0, %v1434
  %v1438 = vsub.f32 2.0, %v1435
  %v1439 = vmul.f32 %v1430, %v1436
  %v1440 = vmul.f32 %v1431, %v1437
  %v1441 = vmul.f32 %v1432, %v1438
  %v1442 = vmul.f32 %v1413, %v1439
  %v1443 = vmul.f32 %v1415, %v1440
  %v1444 = vmul.f32 %v1417, %v1441
  %v1446 = vsel %vm696, %v1442, 0
  %v1449 = vsel %vm696, %v1443, 0
  %v1452 = vsel %vm696, %v1444, 0
  %v1455 = vsel %vm839, %v138, 0
  %1457 = vmatprep.subr.mxu0 0.0
  %1458 = vmatpush1.msra.mxu0 %v126
  %1459 = vmatprep.subr.mxu0 0.0
  %1460 = vmatpush1.msra.mxu0 %v132
  %1461 = vmatprep.subr.mxu0 0.0
  %1462 = vmatpush1.msra.mxu0 %v1455
  %1463 = vmatprep.subr.mxu0 0.0
  %1464 = vmatpush1.msra.mxu0 0.0
  %1465 = vmatprep.subr.mxu0 0.0
  %1466 = vmatpush1.msra.mxu0 0.0
  %1467 = vmatprep.subr.mxu0 0.0
  %1468 = vmatpush1.msra.mxu0 0.0
  %1469 = vmatprep.subr.mxu0 0.0
  %1470 = vmatpush1.msra.mxu0 0.0
  %1471 = vmatprep.subr.mxu0 0.0
  %1472 = vmatpush1.msra.mxu0 0.0
  %1473 = vmatprep.subr.mxu0 0.0
  %1474 = vmatpush1.msra.mxu0 0.0
  %1475 = vmatprep.subr.mxu0 0.0
  %1476 = vmatpush1.msra.mxu0 0.0
  %1477 = vmatprep.subr.mxu0 0.0
  %1478 = vmatpush1.msra.mxu0 0.0
  %1479 = vmatprep.subr.mxu0 0.0
  %1480 = vmatpush1.msra.mxu0 0.0
  %1481 = vmatprep.subr.mxu0 0.0
  %1482 = vmatpush1.msra.mxu0 0.0
  %1483 = vmatprep.subr.mxu0 0.0
  %1484 = vmatpush1.msra.mxu0 0.0
  %1485 = vmatprep.subr.mxu0 0.0
  %1486 = vmatpush1.msra.mxu0 0.0
  %1487 = vmatprep.subr.mxu0 0.0
  %1488 = vmatpush1.msra.mxu0 0.0
  %1489 = vmatprep.subr.mxu0 0.0
  %1490 = vmatpush1.msra.mxu0 0.0
  %1491 = vmatprep.subr.mxu0 0.0
  %1492 = vmatpush1.msra.mxu0 0.0
  %1493 = vmatprep.subr.mxu0 0.0
  %1494 = vmatpush1.msra.mxu0 0.0
  %1495 = vmatprep.subr.mxu0 0.0
  %1496 = vmatpush1.msra.mxu0 0.0
  %1497 = vmatprep.subr.mxu0 0.0
  %1498 = vmatpush1.msra.mxu0 0.0
  %1499 = vmatprep.subr.mxu0 0.0
  %1500 = vmatpush1.msra.mxu0 0.0
  %1501 = vmatprep.subr.mxu0 0.0
  %1502 = vmatpush1.msra.mxu0 0.0
  %1503 = vmatprep.subr.mxu0 0.0
  %1504 = vmatpush1.msra.mxu0 0.0
  %1505 = vmatprep.subr.mxu0 0.0
  %1506 = vmatpush1.msra.mxu0 0.0
  %1507 = vmatprep.subr.mxu0 0.0
  %1508 = vmatpush1.msra.mxu0 0.0
  %1509 = vmatprep.subr.mxu0 0.0
  %1510 = vmatpush1.msra.mxu0 0.0
  %1511 = vmatprep.subr.mxu0 0.0
  %1512 = vmatpush1.msra.mxu0 0.0
  %1513 = vmatprep.subr.mxu0 0.0
  %1514 = vmatpush1.msra.mxu0 0.0
  %1515 = vmatprep.subr.mxu0 0.0
  %1516 = vmatpush1.msra.mxu0 0.0
  %1517 = vmatprep.subr.mxu0 0.0
  %1518 = vmatpush1.msra.mxu0 0.0
  %1519 = vmatprep.subr.mxu0 0.0
  %1520 = vmatpush1.msra.mxu0 0.0
  %1521 = vmatprep.mubr.f32.mxu0 0.0
  %1522 = vmatmul.mubr.f32.gmra.mrb[0].mxu0 %v1446
  %v1523 = vpop.f32.mrb[0].mxu0
  %v1524 = vadd.f32 0.0, %v1523
  %v1525 = vpop.f32.mrb[0].mxu0
  %1526 = vmatprep.mubr.f32.mxu0 0.0
  %1527 = vmatmul.mubr.f32.gmra.mrb[0].mxu0 %v1449
  %v1528 = vpop.f32.mrb[0].mxu0
  %v1529 = vadd.f32 0.0, %v1528
  %v1530 = vpop.f32.mrb[0].mxu0
  %1531 = vmatprep.mubr.f32.mxu0 0.0
  %1532 = vmatmul.mubr.f32.gmra.mrb[0].mxu0 %v1452
  %v1533 = vpop.f32.mrb[0].mxu0
  %v1534 = vadd.f32 0.0, %v1533
  %v1535 = vpop.f32.mrb[0].mxu0
  %1536 = vdwg.mxu0
  %v1537 = vadd.f32 %v1366, %v1524
  %v1538 = vadd.f32 %v1367, %v1529
  %v1539 = vadd.f32 %v1368, %v1534
  %1540 = vset.pattern.permute.xlu0 5
  %1541 = vperm.xlu0 %1540, %v617
  %v1542 = vpop.permute.xlu0 %1541
  %1544 = vset.pattern.permute.xlu0 5
  %1545 = vperm.xlu0 %1544, %v622
  %v1546 = vpop.permute.xlu0 %1545
  %1548 = vset.pattern.permute.xlu0 5
  %1549 = vperm.xlu0 %1548, %v627
  %v1550 = vpop.permute.xlu0 %1549
  %v1552 = vlaneseq
  %v1553 = vshrl.u32 %v1552, 7
  %v1554 = vsub.s32 5, %v1553
  %v1555 = vrot.slane %v646, %v1554
  %v1556 = vadd.f32 %v1542, %v1555
  %v1557 = vadd.f32 %v1546, %v1555
  %v1558 = vadd.f32 %v1550, %v1555
  %vm1559 = vcmp.gt.f32.partialorder %v1556, 0.0
  %vm1560 = vcmp.gt.f32.partialorder %v1557, 0.0
  %vm1561 = vcmp.gt.f32.partialorder %v1558, 0.0
  %v1562 = vmul.f32 %v1556, 0.2
  %v1563 = vmul.f32 %v1557, 0.2
  %v1564 = vmul.f32 %v1558, 0.2
  %v1565 = vsel %vm1559, %v1556, %v1562
  %v1566 = vsel %vm1560, %v1557, %v1563
  %v1567 = vsel %vm1561, %v1558, %v1564
  %v1568 = vadd.f32 %v1565, %v35
  %v1569 = vadd.f32 %v1566, %v36
  %v1570 = vadd.f32 %v1567, %v37
  %v1571 = vsel %vm696, %v1568, -inf
  %1572 = vmax.xlane.f32.xlu0 %v1571
  %v1573 = vpop.xlane.xlu0 %1572
  %v1574 = vsel %vm696, %v1569, -inf
  %1575 = vmax.xlane.f32.xlu0 %v1574
  %v1576 = vpop.xlane.xlu0 %1575
  %v1577 = vsel %vm703, %v1570, -inf
  %1578 = vmax.xlane.f32.xlu0 %v1577
  %v1579 = vpop.xlane.xlu0 %1578
  %v1580 = vsub.f32 %v1568, %v1573
  %v1581 = vsub.f32 %v1569, %v1576
  %v1582 = vsub.f32 %v1570, %v1579
  %v1583 = vmul.f32 %v1580, 1.442695
  %v1584 = vpow.pop %v1583
  %v1585 = vmul.f32 %v1581, 1.442695
  %v1586 = vpow.pop %v1585
  %v1587 = vmul.f32 %v1582, 1.442695
  %v1588 = vpow.pop %v1587
  %v1589 = vsel %vm696, %v1584, 0.0
  %1590 = vadd.xlane.f32.xlu0 %v1589
  %v1591 = vpop.xlane.xlu0 %1590
  %v1592 = vsel %vm696, %v1586, 0.0
  %1593 = vadd.xlane.f32.xlu0 %v1592
  %v1594 = vpop.xlane.xlu0 %1593
  %v1595 = vsel %vm703, %v1588, 0.0
  %1596 = vadd.xlane.f32.xlu0 %v1595
  %v1597 = vpop.xlane.xlu0 %1596
  %v1598 = vmax.f32 %v1591, 1e-20
  %v1599 = vmax.f32 %v1594, 1e-20
  %v1600 = vmax.f32 %v1597, 1e-20
  %v1601 = vrcp.pop %v1598
  %v1602 = vrcp.pop %v1599
  %v1603 = vrcp.pop %v1600
  %v1604 = vmul.f32 %v1598, %v1601
  %v1605 = vmul.f32 %v1599, %v1602
  %v1606 = vmul.f32 %v1600, %v1603
  %v1607 = vsub.f32 2.0, %v1604
  %v1608 = vsub.f32 2.0, %v1605
  %v1609 = vsub.f32 2.0, %v1606
  %v1610 = vmul.f32 %v1601, %v1607
  %v1611 = vmul.f32 %v1602, %v1608
  %v1612 = vmul.f32 %v1603, %v1609
  %v1613 = vmul.f32 %v1584, %v1610
  %v1614 = vmul.f32 %v1586, %v1611
  %v1615 = vmul.f32 %v1588, %v1612
  %1618 = vrot.lane.b32.xlu0 %v126, 96
  %v1619 = vpop.permute.xlu0 %1618
  %1620 = vrot.lane.b32.xlu0 %v132, 96
  %v1621 = vpop.permute.xlu0 %1620
  %1622 = vrot.lane.b32.xlu0 %v138, 96
  %v1623 = vpop.permute.xlu0 %1622
  %v1627 = vsel %vm696, %v1613, 0
  %v1630 = vsel %vm696, %v1614, 0
  %v1633 = vsel %vm696, %v1615, 0
  %v1635 = vsel %vm839, %v1623, 0
  %1637 = vmatprep.subr.mxu0 0.0
  %1638 = vmatpush1.msra.mxu0 %v1619
  %1639 = vmatprep.subr.mxu0 0.0
  %1640 = vmatpush1.msra.mxu0 %v1621
  %1641 = vmatprep.subr.mxu0 0.0
  %1642 = vmatpush1.msra.mxu0 %v1635
  %1643 = vmatprep.subr.mxu0 0.0
  %1644 = vmatpush1.msra.mxu0 0.0
  %1645 = vmatprep.subr.mxu0 0.0
  %1646 = vmatpush1.msra.mxu0 0.0
  %1647 = vmatprep.subr.mxu0 0.0
  %1648 = vmatpush1.msra.mxu0 0.0
  %1649 = vmatprep.subr.mxu0 0.0
  %1650 = vmatpush1.msra.mxu0 0.0
  %1651 = vmatprep.subr.mxu0 0.0
  %1652 = vmatpush1.msra.mxu0 0.0
  %1653 = vmatprep.subr.mxu0 0.0
  %1654 = vmatpush1.msra.mxu0 0.0
  %1655 = vmatprep.subr.mxu0 0.0
  %1656 = vmatpush1.msra.mxu0 0.0
  %1657 = vmatprep.subr.mxu0 0.0
  %1658 = vmatpush1.msra.mxu0 0.0
  %1659 = vmatprep.subr.mxu0 0.0
  %1660 = vmatpush1.msra.mxu0 0.0
  %1661 = vmatprep.subr.mxu0 0.0
  %1662 = vmatpush1.msra.mxu0 0.0
  %1663 = vmatprep.subr.mxu0 0.0
  %1664 = vmatpush1.msra.mxu0 0.0
  %1665 = vmatprep.subr.mxu0 0.0
  %1666 = vmatpush1.msra.mxu0 0.0
  %1667 = vmatprep.subr.mxu0 0.0
  %1668 = vmatpush1.msra.mxu0 0.0
  %1669 = vmatprep.subr.mxu0 0.0
  %1670 = vmatpush1.msra.mxu0 0.0
  %1671 = vmatprep.subr.mxu0 0.0
  %1672 = vmatpush1.msra.mxu0 0.0
  %1673 = vmatprep.subr.mxu0 0.0
  %1674 = vmatpush1.msra.mxu0 0.0
  %1675 = vmatprep.subr.mxu0 0.0
  %1676 = vmatpush1.msra.mxu0 0.0
  %1677 = vmatprep.subr.mxu0 0.0
  %1678 = vmatpush1.msra.mxu0 0.0
  %1679 = vmatprep.subr.mxu0 0.0
  %1680 = vmatpush1.msra.mxu0 0.0
  %1681 = vmatprep.subr.mxu0 0.0
  %1682 = vmatpush1.msra.mxu0 0.0
  %1683 = vmatprep.subr.mxu0 0.0
  %1684 = vmatpush1.msra.mxu0 0.0
  %1685 = vmatprep.subr.mxu0 0.0
  %1686 = vmatpush1.msra.mxu0 0.0
  %1687 = vmatprep.subr.mxu0 0.0
  %1688 = vmatpush1.msra.mxu0 0.0
  %1689 = vmatprep.subr.mxu0 0.0
  %1690 = vmatpush1.msra.mxu0 0.0
  %1691 = vmatprep.subr.mxu0 0.0
  %1692 = vmatpush1.msra.mxu0 0.0
  %1693 = vmatprep.subr.mxu0 0.0
  %1694 = vmatpush1.msra.mxu0 0.0
  %1695 = vmatprep.subr.mxu0 0.0
  %1696 = vmatpush1.msra.mxu0 0.0
  %1697 = vmatprep.subr.mxu0 0.0
  %1698 = vmatpush1.msra.mxu0 0.0
  %1699 = vmatprep.subr.mxu0 0.0
  %1700 = vmatpush1.msra.mxu0 0.0
  %1701 = vmatprep.mubr.f32.mxu0 0.0
  %1702 = vmatmul.mubr.f32.gmra.mrb[0].mxu0 %v1627
  %v1703 = vpop.f32.mrb[0].mxu0
  %v1704 = vadd.f32 0.0, %v1703
  %v1705 = vpop.f32.mrb[0].mxu0
  %1706 = vmatprep.mubr.f32.mxu0 0.0
  %1707 = vmatmul.mubr.f32.gmra.mrb[0].mxu0 %v1630
  %v1708 = vpop.f32.mrb[0].mxu0
  %v1709 = vadd.f32 0.0, %v1708
  %v1710 = vpop.f32.mrb[0].mxu0
  %1711 = vmatprep.mubr.f32.mxu0 0.0
  %1712 = vmatmul.mubr.f32.gmra.mrb[0].mxu0 %v1633
  %v1713 = vpop.f32.mrb[0].mxu0
  %v1714 = vadd.f32 0.0, %v1713
  %v1715 = vpop.f32.mrb[0].mxu0
  %1716 = vdwg.mxu0
  %v1717 = vadd.f32 %v1537, %v1704
  %v1718 = vadd.f32 %v1538, %v1709
  %v1719 = vadd.f32 %v1539, %v1714
  %1720 = vset.pattern.permute.xlu0 6
  %1721 = vperm.xlu0 %1720, %v617
  %v1722 = vpop.permute.xlu0 %1721
  %1724 = vset.pattern.permute.xlu0 6
  %1725 = vperm.xlu0 %1724, %v622
  %v1726 = vpop.permute.xlu0 %1725
  %1728 = vset.pattern.permute.xlu0 6
  %1729 = vperm.xlu0 %1728, %v627
  %v1730 = vpop.permute.xlu0 %1729
  %v1732 = vlaneseq
  %v1733 = vshrl.u32 %v1732, 7
  %v1734 = vsub.s32 6, %v1733
  %v1735 = vrot.slane %v646, %v1734
  %v1736 = vadd.f32 %v1722, %v1735
  %v1737 = vadd.f32 %v1726, %v1735
  %v1738 = vadd.f32 %v1730, %v1735
  %vm1739 = vcmp.gt.f32.partialorder %v1736, 0.0
  %vm1740 = vcmp.gt.f32.partialorder %v1737, 0.0
  %vm1741 = vcmp.gt.f32.partialorder %v1738, 0.0
  %v1742 = vmul.f32 %v1736, 0.2
  %v1743 = vmul.f32 %v1737, 0.2
  %v1744 = vmul.f32 %v1738, 0.2
  %v1745 = vsel %vm1739, %v1736, %v1742
  %v1746 = vsel %vm1740, %v1737, %v1743
  %v1747 = vsel %vm1741, %v1738, %v1744
  %v1748 = vadd.f32 %v1745, %v35
  %v1749 = vadd.f32 %v1746, %v36
  %v1750 = vadd.f32 %v1747, %v37
  %v1751 = vsel %vm696, %v1748, -inf
  %1752 = vmax.xlane.f32.xlu0 %v1751
  %v1753 = vpop.xlane.xlu0 %1752
  %v1754 = vsel %vm696, %v1749, -inf
  %1755 = vmax.xlane.f32.xlu0 %v1754
  %v1756 = vpop.xlane.xlu0 %1755
  %v1757 = vsel %vm703, %v1750, -inf
  %1758 = vmax.xlane.f32.xlu0 %v1757
  %v1759 = vpop.xlane.xlu0 %1758
  %v1760 = vsub.f32 %v1748, %v1753
  %v1761 = vsub.f32 %v1749, %v1756
  %v1762 = vsub.f32 %v1750, %v1759
  %v1763 = vmul.f32 %v1760, 1.442695
  %v1764 = vpow.pop %v1763
  %v1765 = vmul.f32 %v1761, 1.442695
  %v1766 = vpow.pop %v1765
  %v1767 = vmul.f32 %v1762, 1.442695
  %v1768 = vpow.pop %v1767
  %v1769 = vsel %vm696, %v1764, 0.0
  %1770 = vadd.xlane.f32.xlu0 %v1769
  %v1771 = vpop.xlane.xlu0 %1770
  %v1772 = vsel %vm696, %v1766, 0.0
  %1773 = vadd.xlane.f32.xlu0 %v1772
  %v1774 = vpop.xlane.xlu0 %1773
  %v1775 = vsel %vm703, %v1768, 0.0
  %1776 = vadd.xlane.f32.xlu0 %v1775
  %v1777 = vpop.xlane.xlu0 %1776
  %v1778 = vmax.f32 %v1771, 1e-20
  %v1779 = vmax.f32 %v1774, 1e-20
  %v1780 = vmax.f32 %v1777, 1e-20
  %v1781 = vrcp.pop %v1778
  %v1782 = vrcp.pop %v1779
  %v1783 = vrcp.pop %v1780
  %v1784 = vmul.f32 %v1778, %v1781
  %v1785 = vmul.f32 %v1779, %v1782
  %v1786 = vmul.f32 %v1780, %v1783
  %v1787 = vsub.f32 2.0, %v1784
  %v1788 = vsub.f32 2.0, %v1785
  %v1789 = vsub.f32 2.0, %v1786
  %v1790 = vmul.f32 %v1781, %v1787
  %v1791 = vmul.f32 %v1782, %v1788
  %v1792 = vmul.f32 %v1783, %v1789
  %v1793 = vmul.f32 %v1764, %v1790
  %v1794 = vmul.f32 %v1766, %v1791
  %v1795 = vmul.f32 %v1768, %v1792
  %1796 = vrot.lane.b32.xlu0 %v126, 64
  %v1797 = vpop.permute.xlu0 %1796
  %1798 = vrot.lane.b32.xlu0 %v132, 64
  %v1799 = vpop.permute.xlu0 %1798
  %1800 = vrot.lane.b32.xlu0 %v138, 64
  %v1801 = vpop.permute.xlu0 %1800
  %v1805 = vsel %vm696, %v1793, 0
  %v1808 = vsel %vm696, %v1794, 0
  %v1811 = vsel %vm696, %v1795, 0
  %v1813 = vsel %vm839, %v1801, 0
  %1815 = vmatprep.subr.mxu0 0.0
  %1816 = vmatpush1.msra.mxu0 %v1797
  %1817 = vmatprep.subr.mxu0 0.0
  %1818 = vmatpush1.msra.mxu0 %v1799
  %1819 = vmatprep.subr.mxu0 0.0
  %1820 = vmatpush1.msra.mxu0 %v1813
  %1821 = vmatprep.subr.mxu0 0.0
  %1822 = vmatpush1.msra.mxu0 0.0
  %1823 = vmatprep.subr.mxu0 0.0
  %1824 = vmatpush1.msra.mxu0 0.0
  %1825 = vmatprep.subr.mxu0 0.0
  %1826 = vmatpush1.msra.mxu0 0.0
  %1827 = vmatprep.subr.mxu0 0.0
  %1828 = vmatpush1.msra.mxu0 0.0
  %1829 = vmatprep.subr.mxu0 0.0
  %1830 = vmatpush1.msra.mxu0 0.0
  %1831 = vmatprep.subr.mxu0 0.0
  %1832 = vmatpush1.msra.mxu0 0.0
  %1833 = vmatprep.subr.mxu0 0.0
  %1834 = vmatpush1.msra.mxu0 0.0
  %1835 = vmatprep.subr.mxu0 0.0
  %1836 = vmatpush1.msra.mxu0 0.0
  %1837 = vmatprep.subr.mxu0 0.0
  %1838 = vmatpush1.msra.mxu0 0.0
  %1839 = vmatprep.subr.mxu0 0.0
  %1840 = vmatpush1.msra.mxu0 0.0
  %1841 = vmatprep.subr.mxu0 0.0
  %1842 = vmatpush1.msra.mxu0 0.0
  %1843 = vmatprep.subr.mxu0 0.0
  %1844 = vmatpush1.msra.mxu0 0.0
  %1845 = vmatprep.subr.mxu0 0.0
  %1846 = vmatpush1.msra.mxu0 0.0
  %1847 = vmatprep.subr.mxu0 0.0
  %1848 = vmatpush1.msra.mxu0 0.0
  %1849 = vmatprep.subr.mxu0 0.0
  %1850 = vmatpush1.msra.mxu0 0.0
  %1851 = vmatprep.subr.mxu0 0.0
  %1852 = vmatpush1.msra.mxu0 0.0
  %1853 = vmatprep.subr.mxu0 0.0
  %1854 = vmatpush1.msra.mxu0 0.0
  %1855 = vmatprep.subr.mxu0 0.0
  %1856 = vmatpush1.msra.mxu0 0.0
  %1857 = vmatprep.subr.mxu0 0.0
  %1858 = vmatpush1.msra.mxu0 0.0
  %1859 = vmatprep.subr.mxu0 0.0
  %1860 = vmatpush1.msra.mxu0 0.0
  %1861 = vmatprep.subr.mxu0 0.0
  %1862 = vmatpush1.msra.mxu0 0.0
  %1863 = vmatprep.subr.mxu0 0.0
  %1864 = vmatpush1.msra.mxu0 0.0
  %1865 = vmatprep.subr.mxu0 0.0
  %1866 = vmatpush1.msra.mxu0 0.0
  %1867 = vmatprep.subr.mxu0 0.0
  %1868 = vmatpush1.msra.mxu0 0.0
  %1869 = vmatprep.subr.mxu0 0.0
  %1870 = vmatpush1.msra.mxu0 0.0
  %1871 = vmatprep.subr.mxu0 0.0
  %1872 = vmatpush1.msra.mxu0 0.0
  %1873 = vmatprep.subr.mxu0 0.0
  %1874 = vmatpush1.msra.mxu0 0.0
  %1875 = vmatprep.subr.mxu0 0.0
  %1876 = vmatpush1.msra.mxu0 0.0
  %1877 = vmatprep.subr.mxu0 0.0
  %1878 = vmatpush1.msra.mxu0 0.0
  %1879 = vmatprep.mubr.f32.mxu0 0.0
  %1880 = vmatmul.mubr.f32.gmra.mrb[0].mxu0 %v1805
  %v1881 = vpop.f32.mrb[0].mxu0
  %v1882 = vadd.f32 0.0, %v1881
  %v1883 = vpop.f32.mrb[0].mxu0
  %1884 = vmatprep.mubr.f32.mxu0 0.0
  %1885 = vmatmul.mubr.f32.gmra.mrb[0].mxu0 %v1808
  %v1886 = vpop.f32.mrb[0].mxu0
  %v1887 = vadd.f32 0.0, %v1886
  %v1888 = vpop.f32.mrb[0].mxu0
  %1889 = vmatprep.mubr.f32.mxu0 0.0
  %1890 = vmatmul.mubr.f32.gmra.mrb[0].mxu0 %v1811
  %v1891 = vpop.f32.mrb[0].mxu0
  %v1892 = vadd.f32 0.0, %v1891
  %v1893 = vpop.f32.mrb[0].mxu0
  %1894 = vdwg.mxu0
  %v1895 = vadd.f32 %v1717, %v1882
  %v1896 = vadd.f32 %v1718, %v1887
  %v1897 = vadd.f32 %v1719, %v1892
  %1898 = vset.pattern.permute.xlu0 7
  %1899 = vperm.xlu0 %1898, %v617
  %v1900 = vpop.permute.xlu0 %1899
  %1902 = vset.pattern.permute.xlu0 7
  %1903 = vperm.xlu0 %1902, %v622
  %v1904 = vpop.permute.xlu0 %1903
  %1906 = vset.pattern.permute.xlu0 7
  %1907 = vperm.xlu0 %1906, %v627
  %v1908 = vpop.permute.xlu0 %1907
  %v1910 = vlaneseq
  %v1911 = vshrl.u32 %v1910, 7
  %v1912 = vsub.s32 7, %v1911
  %v1913 = vrot.slane %v646, %v1912
  %v1914 = vadd.f32 %v1900, %v1913
  %v1915 = vadd.f32 %v1904, %v1913
  %v1916 = vadd.f32 %v1908, %v1913
  %vm1917 = vcmp.gt.f32.partialorder %v1914, 0.0
  %vm1918 = vcmp.gt.f32.partialorder %v1915, 0.0
  %vm1919 = vcmp.gt.f32.partialorder %v1916, 0.0
  %v1920 = vmul.f32 %v1914, 0.2
  %v1921 = vmul.f32 %v1915, 0.2
  %v1922 = vmul.f32 %v1916, 0.2
  %v1923 = vsel %vm1917, %v1914, %v1920
  %v1924 = vsel %vm1918, %v1915, %v1921
  %v1925 = vsel %vm1919, %v1916, %v1922
  %v1926 = vadd.f32 %v1923, %v35
  %v1927 = vadd.f32 %v1924, %v36
  %v1928 = vadd.f32 %v1925, %v37
  %v1929 = vsel %vm696, %v1926, -inf
  %1930 = vmax.xlane.f32.xlu0 %v1929
  %v1931 = vpop.xlane.xlu0 %1930
  %v1932 = vsel %vm696, %v1927, -inf
  %1933 = vmax.xlane.f32.xlu0 %v1932
  %v1934 = vpop.xlane.xlu0 %1933
  %v1935 = vsel %vm703, %v1928, -inf
  %1936 = vmax.xlane.f32.xlu0 %v1935
  %v1937 = vpop.xlane.xlu0 %1936
  %v1938 = vsub.f32 %v1926, %v1931
  %v1939 = vsub.f32 %v1927, %v1934
  %v1940 = vsub.f32 %v1928, %v1937
  %v1941 = vmul.f32 %v1938, 1.442695
  %v1942 = vpow.pop %v1941
  %v1943 = vmul.f32 %v1939, 1.442695
  %v1944 = vpow.pop %v1943
  %v1945 = vmul.f32 %v1940, 1.442695
  %v1946 = vpow.pop %v1945
  %v1947 = vsel %vm696, %v1942, 0.0
  %1948 = vadd.xlane.f32.xlu0 %v1947
  %v1949 = vpop.xlane.xlu0 %1948
  %v1950 = vsel %vm696, %v1944, 0.0
  %1951 = vadd.xlane.f32.xlu0 %v1950
  %v1952 = vpop.xlane.xlu0 %1951
  %v1953 = vsel %vm703, %v1946, 0.0
  %1954 = vadd.xlane.f32.xlu0 %v1953
  %v1955 = vpop.xlane.xlu0 %1954
  %v1956 = vmax.f32 %v1949, 1e-20
  %v1957 = vmax.f32 %v1952, 1e-20
  %v1958 = vmax.f32 %v1955, 1e-20
  %v1959 = vrcp.pop %v1956
  %v1960 = vrcp.pop %v1957
  %v1961 = vrcp.pop %v1958
  %v1962 = vmul.f32 %v1956, %v1959
  %v1963 = vmul.f32 %v1957, %v1960
  %v1964 = vmul.f32 %v1958, %v1961
  %v1965 = vsub.f32 2.0, %v1962
  %v1966 = vsub.f32 2.0, %v1963
  %v1967 = vsub.f32 2.0, %v1964
  %v1968 = vmul.f32 %v1959, %v1965
  %v1969 = vmul.f32 %v1960, %v1966
  %v1970 = vmul.f32 %v1961, %v1967
  %v1971 = vmul.f32 %v1942, %v1968
  %v1972 = vmul.f32 %v1944, %v1969
  %v1973 = vmul.f32 %v1946, %v1970
  %1974 = vrot.lane.b32.xlu0 %v126, 32
  %v1975 = vpop.permute.xlu0 %1974
  %1976 = vrot.lane.b32.xlu0 %v132, 32
  %v1977 = vpop.permute.xlu0 %1976
  %1978 = vrot.lane.b32.xlu0 %v138, 32
  %v1979 = vpop.permute.xlu0 %1978
  %v1983 = vsel %vm696, %v1971, 0
  %v1986 = vsel %vm696, %v1972, 0
  %v1989 = vsel %vm696, %v1973, 0
  %v1991 = vsel %vm839, %v1979, 0
  %1993 = vmatprep.subr.mxu0 0.0
  %1994 = vmatpush1.msra.mxu0 %v1975
  %1995 = vmatprep.subr.mxu0 0.0
  %1996 = vmatpush1.msra.mxu0 %v1977
  %1997 = vmatprep.subr.mxu0 0.0
  %1998 = vmatpush1.msra.mxu0 %v1991
  %1999 = vmatprep.subr.mxu0 0.0
  %2000 = vmatpush1.msra.mxu0 0.0
  %2001 = vmatprep.subr.mxu0 0.0
  %2002 = vmatpush1.msra.mxu0 0.0
  %2003 = vmatprep.subr.mxu0 0.0
  %2004 = vmatpush1.msra.mxu0 0.0
  %2005 = vmatprep.subr.mxu0 0.0
  %2006 = vmatpush1.msra.mxu0 0.0
  %2007 = vmatprep.subr.mxu0 0.0
  %2008 = vmatpush1.msra.mxu0 0.0
  %2009 = vmatprep.subr.mxu0 0.0
  %2010 = vmatpush1.msra.mxu0 0.0
  %2011 = vmatprep.subr.mxu0 0.0
  %2012 = vmatpush1.msra.mxu0 0.0
  %2013 = vmatprep.subr.mxu0 0.0
  %2014 = vmatpush1.msra.mxu0 0.0
  %2015 = vmatprep.subr.mxu0 0.0
  %2016 = vmatpush1.msra.mxu0 0.0
  %2017 = vmatprep.subr.mxu0 0.0
  %2018 = vmatpush1.msra.mxu0 0.0
  %2019 = vmatprep.subr.mxu0 0.0
  %2020 = vmatpush1.msra.mxu0 0.0
  %2021 = vmatprep.subr.mxu0 0.0
  %2022 = vmatpush1.msra.mxu0 0.0
  %2023 = vmatprep.subr.mxu0 0.0
  %2024 = vmatpush1.msra.mxu0 0.0
  %2025 = vmatprep.subr.mxu0 0.0
  %2026 = vmatpush1.msra.mxu0 0.0
  %2027 = vmatprep.subr.mxu0 0.0
  %2028 = vmatpush1.msra.mxu0 0.0
  %2029 = vmatprep.subr.mxu0 0.0
  %2030 = vmatpush1.msra.mxu0 0.0
  %2031 = vmatprep.subr.mxu0 0.0
  %2032 = vmatpush1.msra.mxu0 0.0
  %2033 = vmatprep.subr.mxu0 0.0
  %2034 = vmatpush1.msra.mxu0 0.0
  %2035 = vmatprep.subr.mxu0 0.0
  %2036 = vmatpush1.msra.mxu0 0.0
  %2037 = vmatprep.subr.mxu0 0.0
  %2038 = vmatpush1.msra.mxu0 0.0
  %2039 = vmatprep.subr.mxu0 0.0
  %2040 = vmatpush1.msra.mxu0 0.0
  %2041 = vmatprep.subr.mxu0 0.0
  %2042 = vmatpush1.msra.mxu0 0.0
  %2043 = vmatprep.subr.mxu0 0.0
  %2044 = vmatpush1.msra.mxu0 0.0
  %2045 = vmatprep.subr.mxu0 0.0
  %2046 = vmatpush1.msra.mxu0 0.0
  %2047 = vmatprep.subr.mxu0 0.0
  %2048 = vmatpush1.msra.mxu0 0.0
  %2049 = vmatprep.subr.mxu0 0.0
  %2050 = vmatpush1.msra.mxu0 0.0
  %2051 = vmatprep.subr.mxu0 0.0
  %2052 = vmatpush1.msra.mxu0 0.0
  %2053 = vmatprep.subr.mxu0 0.0
  %2054 = vmatpush1.msra.mxu0 0.0
  %2055 = vmatprep.subr.mxu0 0.0
  %2056 = vmatpush1.msra.mxu0 0.0
  %2057 = vmatprep.mubr.f32.mxu0 0.0
  %2058 = vmatmul.mubr.f32.gmra.mrb[0].mxu0 %v1983
  %v2059 = vpop.f32.mrb[0].mxu0
  %v2060 = vadd.f32 0.0, %v2059
  %v2061 = vpop.f32.mrb[0].mxu0
  %2062 = vmatprep.mubr.f32.mxu0 0.0
  %2063 = vmatmul.mubr.f32.gmra.mrb[0].mxu0 %v1986
  %v2064 = vpop.f32.mrb[0].mxu0
  %v2065 = vadd.f32 0.0, %v2064
  %v2066 = vpop.f32.mrb[0].mxu0
  %2067 = vmatprep.mubr.f32.mxu0 0.0
  %2068 = vmatmul.mubr.f32.gmra.mrb[0].mxu0 %v1989
  %v2069 = vpop.f32.mrb[0].mxu0
  %v2070 = vadd.f32 0.0, %v2069
  %v2071 = vpop.f32.mrb[0].mxu0
  %2072 = vdwg.mxu0
  %v2073 = vadd.f32 %v1895, %v2060
  %v2074 = vadd.f32 %v1896, %v2065
  %v2075 = vadd.f32 %v1897, %v2070
  %2076 = vset.pattern.permute.xlu0 8
  %2077 = vperm.xlu0 %2076, %v617
  %v2078 = vpop.permute.xlu0 %2077
  %2080 = vset.pattern.permute.xlu0 8
  %2081 = vperm.xlu0 %2080, %v622
  %v2082 = vpop.permute.xlu0 %2081
  %2084 = vset.pattern.permute.xlu0 8
  %2085 = vperm.xlu0 %2084, %v627
  %v2086 = vpop.permute.xlu0 %2085
  %v2088 = vlaneseq
  %v2089 = vshrl.u32 %v2088, 7
  %v2090 = vsub.s32 0, %v2089
  %v2091 = vrot.slane %v647, %v2090
  %v2092 = vadd.f32 %v2078, %v2091
  %v2093 = vadd.f32 %v2082, %v2091
  %v2094 = vadd.f32 %v2086, %v2091
  %vm2095 = vcmp.gt.f32.partialorder %v2092, 0.0
  %vm2096 = vcmp.gt.f32.partialorder %v2093, 0.0
  %vm2097 = vcmp.gt.f32.partialorder %v2094, 0.0
  %v2098 = vmul.f32 %v2092, 0.2
  %v2099 = vmul.f32 %v2093, 0.2
  %v2100 = vmul.f32 %v2094, 0.2
  %v2101 = vsel %vm2095, %v2092, %v2098
  %v2102 = vsel %vm2096, %v2093, %v2099
  %v2103 = vsel %vm2097, %v2094, %v2100
  %v2104 = vadd.f32 %v2101, %v35
  %v2105 = vadd.f32 %v2102, %v36
  %v2106 = vadd.f32 %v2103, %v37
  %v2107 = vsel %vm696, %v2104, -inf
  %2108 = vmax.xlane.f32.xlu0 %v2107
  %v2109 = vpop.xlane.xlu0 %2108
  %v2110 = vsel %vm696, %v2105, -inf
  %2111 = vmax.xlane.f32.xlu0 %v2110
  %v2112 = vpop.xlane.xlu0 %2111
  %v2113 = vsel %vm703, %v2106, -inf
  %2114 = vmax.xlane.f32.xlu0 %v2113
  %v2115 = vpop.xlane.xlu0 %2114
  %v2116 = vsub.f32 %v2104, %v2109
  %v2117 = vsub.f32 %v2105, %v2112
  %v2118 = vsub.f32 %v2106, %v2115
  %v2119 = vmul.f32 %v2116, 1.442695
  %v2120 = vpow.pop %v2119
  %v2121 = vmul.f32 %v2117, 1.442695
  %v2122 = vpow.pop %v2121
  %v2123 = vmul.f32 %v2118, 1.442695
  %v2124 = vpow.pop %v2123
  %v2125 = vsel %vm696, %v2120, 0.0
  %2126 = vadd.xlane.f32.xlu0 %v2125
  %v2127 = vpop.xlane.xlu0 %2126
  %v2128 = vsel %vm696, %v2122, 0.0
  %2129 = vadd.xlane.f32.xlu0 %v2128
  %v2130 = vpop.xlane.xlu0 %2129
  %v2131 = vsel %vm703, %v2124, 0.0
  %2132 = vadd.xlane.f32.xlu0 %v2131
  %v2133 = vpop.xlane.xlu0 %2132
  %v2134 = vmax.f32 %v2127, 1e-20
  %v2135 = vmax.f32 %v2130, 1e-20
  %v2136 = vmax.f32 %v2133, 1e-20
  %v2137 = vrcp.pop %v2134
  %v2138 = vrcp.pop %v2135
  %v2139 = vrcp.pop %v2136
  %v2140 = vmul.f32 %v2134, %v2137
  %v2141 = vmul.f32 %v2135, %v2138
  %v2142 = vmul.f32 %v2136, %v2139
  %v2143 = vsub.f32 2.0, %v2140
  %v2144 = vsub.f32 2.0, %v2141
  %v2145 = vsub.f32 2.0, %v2142
  %v2146 = vmul.f32 %v2137, %v2143
  %v2147 = vmul.f32 %v2138, %v2144
  %v2148 = vmul.f32 %v2139, %v2145
  %v2149 = vmul.f32 %v2120, %v2146
  %v2150 = vmul.f32 %v2122, %v2147
  %v2151 = vmul.f32 %v2124, %v2148
  %v2153 = vsel %vm696, %v2149, 0
  %v2156 = vsel %vm696, %v2150, 0
  %v2159 = vsel %vm696, %v2151, 0
  %v2161 = vsel %vm839, %v217, 0
  %2163 = vmatprep.subr.mxu0 0.0
  %2164 = vmatpush1.msra.mxu0 %v207
  %2165 = vmatprep.subr.mxu0 0.0
  %2166 = vmatpush1.msra.mxu0 %v212
  %2167 = vmatprep.subr.mxu0 0.0
  %2168 = vmatpush1.msra.mxu0 %v2161
  %2169 = vmatprep.subr.mxu0 0.0
  %2170 = vmatpush1.msra.mxu0 0.0
  %2171 = vmatprep.subr.mxu0 0.0
  %2172 = vmatpush1.msra.mxu0 0.0
  %2173 = vmatprep.subr.mxu0 0.0
  %2174 = vmatpush1.msra.mxu0 0.0
  %2175 = vmatprep.subr.mxu0 0.0
  %2176 = vmatpush1.msra.mxu0 0.0
  %2177 = vmatprep.subr.mxu0 0.0
  %2178 = vmatpush1.msra.mxu0 0.0
  %2179 = vmatprep.subr.mxu0 0.0
  %2180 = vmatpush1.msra.mxu0 0.0
  %2181 = vmatprep.subr.mxu0 0.0
  %2182 = vmatpush1.msra.mxu0 0.0
  %2183 = vmatprep.subr.mxu0 0.0
  %2184 = vmatpush1.msra.mxu0 0.0
  %2185 = vmatprep.subr.mxu0 0.0
  %2186 = vmatpush1.msra.mxu0 0.0
  %2187 = vmatprep.subr.mxu0 0.0
  %2188 = vmatpush1.msra.mxu0 0.0
  %2189 = vmatprep.subr.mxu0 0.0
  %2190 = vmatpush1.msra.mxu0 0.0
  %2191 = vmatprep.subr.mxu0 0.0
  %2192 = vmatpush1.msra.mxu0 0.0
  %2193 = vmatprep.subr.mxu0 0.0
  %2194 = vmatpush1.msra.mxu0 0.0
  %2195 = vmatprep.subr.mxu0 0.0
  %2196 = vmatpush1.msra.mxu0 0.0
  %2197 = vmatprep.subr.mxu0 0.0
  %2198 = vmatpush1.msra.mxu0 0.0
  %2199 = vmatprep.subr.mxu0 0.0
  %2200 = vmatpush1.msra.mxu0 0.0
  %2201 = vmatprep.subr.mxu0 0.0
  %2202 = vmatpush1.msra.mxu0 0.0
  %2203 = vmatprep.subr.mxu0 0.0
  %2204 = vmatpush1.msra.mxu0 0.0
  %2205 = vmatprep.subr.mxu0 0.0
  %2206 = vmatpush1.msra.mxu0 0.0
  %2207 = vmatprep.subr.mxu0 0.0
  %2208 = vmatpush1.msra.mxu0 0.0
  %2209 = vmatprep.subr.mxu0 0.0
  %2210 = vmatpush1.msra.mxu0 0.0
  %2211 = vmatprep.subr.mxu0 0.0
  %2212 = vmatpush1.msra.mxu0 0.0
  %2213 = vmatprep.subr.mxu0 0.0
  %2214 = vmatpush1.msra.mxu0 0.0
  %2215 = vmatprep.subr.mxu0 0.0
  %2216 = vmatpush1.msra.mxu0 0.0
  %2217 = vmatprep.subr.mxu0 0.0
  %2218 = vmatpush1.msra.mxu0 0.0
  %2219 = vmatprep.subr.mxu0 0.0
  %2220 = vmatpush1.msra.mxu0 0.0
  %2221 = vmatprep.subr.mxu0 0.0
  %2222 = vmatpush1.msra.mxu0 0.0
  %2223 = vmatprep.subr.mxu0 0.0
  %2224 = vmatpush1.msra.mxu0 0.0
  %2225 = vmatprep.subr.mxu0 0.0
  %2226 = vmatpush1.msra.mxu0 0.0
  %2227 = vmatprep.mubr.f32.mxu0 0.0
  %2228 = vmatmul.mubr.f32.gmra.mrb[0].mxu0 %v2153
  %v2229 = vpop.f32.mrb[0].mxu0
  %v2230 = vadd.f32 0.0, %v2229
  %v2231 = vpop.f32.mrb[0].mxu0
  %2232 = vmatprep.mubr.f32.mxu0 0.0
  %2233 = vmatmul.mubr.f32.gmra.mrb[0].mxu0 %v2156
  %v2234 = vpop.f32.mrb[0].mxu0
  %v2235 = vadd.f32 0.0, %v2234
  %v2236 = vpop.f32.mrb[0].mxu0
  %2237 = vmatprep.mubr.f32.mxu0 0.0
  %2238 = vmatmul.mubr.f32.gmra.mrb[0].mxu0 %v2159
  %v2239 = vpop.f32.mrb[0].mxu0
  %v2240 = vadd.f32 0.0, %v2239
  %v2241 = vpop.f32.mrb[0].mxu0
  %2242 = vdwg.mxu0
  %v2243 = vadd.f32 %v2073, %v2230
  %v2244 = vadd.f32 %v2074, %v2235
  %v2245 = vadd.f32 %v2075, %v2240
  %2246 = vset.pattern.permute.xlu0 9
  %2247 = vperm.xlu0 %2246, %v617
  %v2248 = vpop.permute.xlu0 %2247
  %2250 = vset.pattern.permute.xlu0 9
  %2251 = vperm.xlu0 %2250, %v622
  %v2252 = vpop.permute.xlu0 %2251
  %2254 = vset.pattern.permute.xlu0 9
  %2255 = vperm.xlu0 %2254, %v627
  %v2256 = vpop.permute.xlu0 %2255
  %v2258 = vlaneseq
  %v2259 = vshrl.u32 %v2258, 7
  %v2260 = vsub.s32 1, %v2259
  %v2261 = vrot.slane %v647, %v2260
  %v2262 = vadd.f32 %v2248, %v2261
  %v2263 = vadd.f32 %v2252, %v2261
  %v2264 = vadd.f32 %v2256, %v2261
  %vm2265 = vcmp.gt.f32.partialorder %v2262, 0.0
  %vm2266 = vcmp.gt.f32.partialorder %v2263, 0.0
  %vm2267 = vcmp.gt.f32.partialorder %v2264, 0.0
  %v2268 = vmul.f32 %v2262, 0.2
  %v2269 = vmul.f32 %v2263, 0.2
  %v2270 = vmul.f32 %v2264, 0.2
  %v2271 = vsel %vm2265, %v2262, %v2268
  %v2272 = vsel %vm2266, %v2263, %v2269
  %v2273 = vsel %vm2267, %v2264, %v2270
  %v2274 = vadd.f32 %v2271, %v35
  %v2275 = vadd.f32 %v2272, %v36
  %v2276 = vadd.f32 %v2273, %v37
  %v2277 = vsel %vm696, %v2274, -inf
  %2278 = vmax.xlane.f32.xlu0 %v2277
  %v2279 = vpop.xlane.xlu0 %2278
  %v2280 = vsel %vm696, %v2275, -inf
  %2281 = vmax.xlane.f32.xlu0 %v2280
  %v2282 = vpop.xlane.xlu0 %2281
  %v2283 = vsel %vm703, %v2276, -inf
  %2284 = vmax.xlane.f32.xlu0 %v2283
  %v2285 = vpop.xlane.xlu0 %2284
  %v2286 = vsub.f32 %v2274, %v2279
  %v2287 = vsub.f32 %v2275, %v2282
  %v2288 = vsub.f32 %v2276, %v2285
  %v2289 = vmul.f32 %v2286, 1.442695
  %v2290 = vpow.pop %v2289
  %v2291 = vmul.f32 %v2287, 1.442695
  %v2292 = vpow.pop %v2291
  %v2293 = vmul.f32 %v2288, 1.442695
  %v2294 = vpow.pop %v2293
  %v2295 = vsel %vm696, %v2290, 0.0
  %2296 = vadd.xlane.f32.xlu0 %v2295
  %v2297 = vpop.xlane.xlu0 %2296
  %v2298 = vsel %vm696, %v2292, 0.0
  %2299 = vadd.xlane.f32.xlu0 %v2298
  %v2300 = vpop.xlane.xlu0 %2299
  %v2301 = vsel %vm703, %v2294, 0.0
  %2302 = vadd.xlane.f32.xlu0 %v2301
  %v2303 = vpop.xlane.xlu0 %2302
  %v2304 = vmax.f32 %v2297, 1e-20
  %v2305 = vmax.f32 %v2300, 1e-20
  %v2306 = vmax.f32 %v2303, 1e-20
  %v2307 = vrcp.pop %v2304
  %v2308 = vrcp.pop %v2305
  %v2309 = vrcp.pop %v2306
  %v2310 = vmul.f32 %v2304, %v2307
  %v2311 = vmul.f32 %v2305, %v2308
  %v2312 = vmul.f32 %v2306, %v2309
  %v2313 = vsub.f32 2.0, %v2310
  %v2314 = vsub.f32 2.0, %v2311
  %v2315 = vsub.f32 2.0, %v2312
  %v2316 = vmul.f32 %v2307, %v2313
  %v2317 = vmul.f32 %v2308, %v2314
  %v2318 = vmul.f32 %v2309, %v2315
  %v2319 = vmul.f32 %v2290, %v2316
  %v2320 = vmul.f32 %v2292, %v2317
  %v2321 = vmul.f32 %v2294, %v2318
  %2322 = vrot.lane.b32.xlu0 %v207, 96
  %v2323 = vpop.permute.xlu0 %2322
  %2324 = vrot.lane.b32.xlu0 %v212, 96
  %v2325 = vpop.permute.xlu0 %2324
  %2326 = vrot.lane.b32.xlu0 %v217, 96
  %v2327 = vpop.permute.xlu0 %2326
  %v2331 = vsel %vm696, %v2319, 0
  %v2334 = vsel %vm696, %v2320, 0
  %v2337 = vsel %vm696, %v2321, 0
  %v2339 = vsel %vm839, %v2327, 0
  %2341 = vmatprep.subr.mxu0 0.0
  %2342 = vmatpush1.msra.mxu0 %v2323
  %2343 = vmatprep.subr.mxu0 0.0
  %2344 = vmatpush1.msra.mxu0 %v2325
  %2345 = vmatprep.subr.mxu0 0.0
  %2346 = vmatpush1.msra.mxu0 %v2339
  %2347 = vmatprep.subr.mxu0 0.0
  %2348 = vmatpush1.msra.mxu0 0.0
  %2349 = vmatprep.subr.mxu0 0.0
  %2350 = vmatpush1.msra.mxu0 0.0
  %2351 = vmatprep.subr.mxu0 0.0
  %2352 = vmatpush1.msra.mxu0 0.0
  %2353 = vmatprep.subr.mxu0 0.0
  %2354 = vmatpush1.msra.mxu0 0.0
  %2355 = vmatprep.subr.mxu0 0.0
  %2356 = vmatpush1.msra.mxu0 0.0
  %2357 = vmatprep.subr.mxu0 0.0
  %2358 = vmatpush1.msra.mxu0 0.0
  %2359 = vmatprep.subr.mxu0 0.0
  %2360 = vmatpush1.msra.mxu0 0.0
  %2361 = vmatprep.subr.mxu0 0.0
  %2362 = vmatpush1.msra.mxu0 0.0
  %2363 = vmatprep.subr.mxu0 0.0
  %2364 = vmatpush1.msra.mxu0 0.0
  %2365 = vmatprep.subr.mxu0 0.0
  %2366 = vmatpush1.msra.mxu0 0.0
  %2367 = vmatprep.subr.mxu0 0.0
  %2368 = vmatpush1.msra.mxu0 0.0
  %2369 = vmatprep.subr.mxu0 0.0
  %2370 = vmatpush1.msra.mxu0 0.0
  %2371 = vmatprep.subr.mxu0 0.0
  %2372 = vmatpush1.msra.mxu0 0.0
  %2373 = vmatprep.subr.mxu0 0.0
  %2374 = vmatpush1.msra.mxu0 0.0
  %2375 = vmatprep.subr.mxu0 0.0
  %2376 = vmatpush1.msra.mxu0 0.0
  %2377 = vmatprep.subr.mxu0 0.0
  %2378 = vmatpush1.msra.mxu0 0.0
  %2379 = vmatprep.subr.mxu0 0.0
  %2380 = vmatpush1.msra.mxu0 0.0
  %2381 = vmatprep.subr.mxu0 0.0
  %2382 = vmatpush1.msra.mxu0 0.0
  %2383 = vmatprep.subr.mxu0 0.0
  %2384 = vmatpush1.msra.mxu0 0.0
  %2385 = vmatprep.subr.mxu0 0.0
  %2386 = vmatpush1.msra.mxu0 0.0
  %2387 = vmatprep.subr.mxu0 0.0
  %2388 = vmatpush1.msra.mxu0 0.0
  %2389 = vmatprep.subr.mxu0 0.0
  %2390 = vmatpush1.msra.mxu0 0.0
  %2391 = vmatprep.subr.mxu0 0.0
  %2392 = vmatpush1.msra.mxu0 0.0
  %2393 = vmatprep.subr.mxu0 0.0
  %2394 = vmatpush1.msra.mxu0 0.0
  %2395 = vmatprep.subr.mxu0 0.0
  %2396 = vmatpush1.msra.mxu0 0.0
  %2397 = vmatprep.subr.mxu0 0.0
  %2398 = vmatpush1.msra.mxu0 0.0
  %2399 = vmatprep.subr.mxu0 0.0
  %2400 = vmatpush1.msra.mxu0 0.0
  %2401 = vmatprep.subr.mxu0 0.0
  %2402 = vmatpush1.msra.mxu0 0.0
  %2403 = vmatprep.subr.mxu0 0.0
  %2404 = vmatpush1.msra.mxu0 0.0
  %2405 = vmatprep.mubr.f32.mxu0 0.0
  %2406 = vmatmul.mubr.f32.gmra.mrb[0].mxu0 %v2331
  %v2407 = vpop.f32.mrb[0].mxu0
  %v2408 = vadd.f32 0.0, %v2407
  %v2409 = vpop.f32.mrb[0].mxu0
  %2410 = vmatprep.mubr.f32.mxu0 0.0
  %2411 = vmatmul.mubr.f32.gmra.mrb[0].mxu0 %v2334
  %v2412 = vpop.f32.mrb[0].mxu0
  %v2413 = vadd.f32 0.0, %v2412
  %v2414 = vpop.f32.mrb[0].mxu0
  %2415 = vmatprep.mubr.f32.mxu0 0.0
  %2416 = vmatmul.mubr.f32.gmra.mrb[0].mxu0 %v2337
  %v2417 = vpop.f32.mrb[0].mxu0
  %v2418 = vadd.f32 0.0, %v2417
  %v2419 = vpop.f32.mrb[0].mxu0
  %2420 = vdwg.mxu0
  %v2421 = vadd.f32 %v2243, %v2408
  %v2422 = vadd.f32 %v2244, %v2413
  %v2423 = vadd.f32 %v2245, %v2418
  %v2424 = vmul.f32 %v2421, 0.1
  %v2425 = vmul.f32 %v2422, 0.1
  %v2426 = vmul.f32 %v2423, 0.1
  %v2427 = vld [vmem:[%s5] sm:$0x1]
  %v2429 = vlaneseq
  %v2430 = vshrl.u32 %v2429, 7
  %v2431 = vsub.s32 0, %v2430
  %v2432 = vrot.slane %v2427, %v2431
  %v2434 = vadd.f32 %v2424, %v2432
  %v2435 = vadd.f32 %v2425, %v2432
  %v2436 = vadd.f32 %v2426, %v2432
  %v2437 = vmax.f32 %v2434, 0.0
  %v2438 = vmax.f32 %v2435, 0.0
  %v2439 = vmax.f32 %v2436, 0.0
  %v2440 = vld [vmem:[%s6] sm:$0xff]
  %v2441 = vld [vmem:[%s6 + $0x8] sm:$0xff]
  %v2442 = vld [vmem:[%s6 + $0x10] sm:$0xff]
  %v2443 = vld [vmem:[%s6 + $0x18] sm:$0xff]
  %vm2444 = vcmask 261120
  %v2446 = vsel %vm2444, %v2437, 0
  %v2449 = vsel %vm2444, %v2438, 0
  %v2452 = vsel %vm2444, %v2439, 0
  %2454 = vmatprep.subr.mxu0 0.0
  %2455 = vmatpush1.msra.mxu0 %v2440
  %2456 = vmatprep.subr.mxu0 0.0
  %2457 = vmatpush1.msra.mxu0 %v2441
  %2458 = vmatprep.subr.mxu0 0.0
  %2459 = vmatpush1.msra.mxu0 %v2442
  %2460 = vmatprep.subr.mxu0 0.0
  %2461 = vmatpush1.msra.mxu0 %v2443
  %2462 = vmatprep.subr.mxu0 0.0
  %2463 = vmatpush1.msra.mxu0 0.0
  %2464 = vmatprep.subr.mxu0 0.0
  %2465 = vmatpush1.msra.mxu0 0.0
  %2466 = vmatprep.subr.mxu0 0.0
  %2467 = vmatpush1.msra.mxu0 0.0
  %2468 = vmatprep.subr.mxu0 0.0
  %2469 = vmatpush1.msra.mxu0 0.0
  %2470 = vmatprep.subr.mxu0 0.0
  %2471 = vmatpush1.msra.mxu0 0.0
  %2472 = vmatprep.subr.mxu0 0.0
  %2473 = vmatpush1.msra.mxu0 0.0
  %2474 = vmatprep.subr.mxu0 0.0
  %2475 = vmatpush1.msra.mxu0 0.0
  %2476 = vmatprep.subr.mxu0 0.0
  %2477 = vmatpush1.msra.mxu0 0.0
  %2478 = vmatprep.subr.mxu0 0.0
  %2479 = vmatpush1.msra.mxu0 0.0
  %2480 = vmatprep.subr.mxu0 0.0
  %2481 = vmatpush1.msra.mxu0 0.0
  %2482 = vmatprep.subr.mxu0 0.0
  %2483 = vmatpush1.msra.mxu0 0.0
  %2484 = vmatprep.subr.mxu0 0.0
  %2485 = vmatpush1.msra.mxu0 0.0
  %2486 = vmatprep.subr.mxu0 0.0
  %2487 = vmatpush1.msra.mxu0 0.0
  %2488 = vmatprep.subr.mxu0 0.0
  %2489 = vmatpush1.msra.mxu0 0.0
  %2490 = vmatprep.subr.mxu0 0.0
  %2491 = vmatpush1.msra.mxu0 0.0
  %2492 = vmatprep.subr.mxu0 0.0
  %2493 = vmatpush1.msra.mxu0 0.0
  %2494 = vmatprep.subr.mxu0 0.0
  %2495 = vmatpush1.msra.mxu0 0.0
  %2496 = vmatprep.subr.mxu0 0.0
  %2497 = vmatpush1.msra.mxu0 0.0
  %2498 = vmatprep.subr.mxu0 0.0
  %2499 = vmatpush1.msra.mxu0 0.0
  %2500 = vmatprep.subr.mxu0 0.0
  %2501 = vmatpush1.msra.mxu0 0.0
  %2502 = vmatprep.subr.mxu0 0.0
  %2503 = vmatpush1.msra.mxu0 0.0
  %2504 = vmatprep.subr.mxu0 0.0
  %2505 = vmatpush1.msra.mxu0 0.0
  %2506 = vmatprep.subr.mxu0 0.0
  %2507 = vmatpush1.msra.mxu0 0.0
  %2508 = vmatprep.subr.mxu0 0.0
  %2509 = vmatpush1.msra.mxu0 0.0
  %2510 = vmatprep.subr.mxu0 0.0
  %2511 = vmatpush1.msra.mxu0 0.0
  %2512 = vmatprep.subr.mxu0 0.0
  %2513 = vmatpush1.msra.mxu0 0.0
  %2514 = vmatprep.subr.mxu0 0.0
  %2515 = vmatpush1.msra.mxu0 0.0
  %2516 = vmatprep.subr.mxu0 0.0
  %2517 = vmatpush1.msra.mxu0 0.0
  %2518 = vmatprep.mubr.f32.mxu0 0.0
  %2519 = vmatmul.mubr.f32.gmra.mrb[0].mxu0 %v2446
  %v2520 = vpop.f32.mrb[0].mxu0
  %v2521 = vadd.f32 0.0, %v2520
  %v2522 = vpop.f32.mrb[0].mxu0
  %2523 = vmatprep.mubr.f32.mxu0 0.0
  %2524 = vmatmul.mubr.f32.gmra.mrb[0].mxu0 %v2449
  %v2525 = vpop.f32.mrb[0].mxu0
  %v2526 = vadd.f32 0.0, %v2525
  %v2527 = vpop.f32.mrb[0].mxu0
  %2528 = vmatprep.mubr.f32.mxu0 0.0
  %2529 = vmatmul.mubr.f32.gmra.mrb[0].mxu0 %v2452
  %v2530 = vpop.f32.mrb[0].mxu0
  %v2531 = vadd.f32 0.0, %v2530
  %v2532 = vpop.f32.mrb[0].mxu0
  %2533 = vdwg.mxu0
  %v2534 = vld [vmem:[%s7] sm:$0xff]
  %v2535 = vld [vmem:[%s7 + $0x8] sm:$0xff]
  %v2536 = vld [vmem:[%s7 + $0x10] sm:$0xff]
  %v2537 = vld [vmem:[%s7 + $0x18] sm:$0xff]
  %v2538 = vld [vmem:[%s7 + $0x20] sm:$0xff]
  %v2539 = vld [vmem:[%s7 + $0x28] sm:$0xff]
  %v2540 = vld [vmem:[%s7 + $0x30] sm:$0xff]
  %v2541 = vld [vmem:[%s7 + $0x38] sm:$0xff]
  %v2542 = vld [vmem:[%s7 + $0x40] sm:$0xff]
  %v2543 = vld [vmem:[%s7 + $0x48] sm:$0xff]
  %vm2544 = vcmask 654336
  %v2546 = vsel %vm2544, %v2521, 0
  %v2549 = vsel %vm2544, %v2526, 0
  %v2552 = vsel %vm2544, %v2531, 0
  %2554 = vmatprep.subr.mxu0 0.0
  %2555 = vmatpush1.msra.mxu0 %v2534
  %2556 = vmatprep.subr.mxu0 0.0
  %2557 = vmatpush1.msra.mxu0 %v2535
  %2558 = vmatprep.subr.mxu0 0.0
  %2559 = vmatpush1.msra.mxu0 %v2536
  %2560 = vmatprep.subr.mxu0 0.0
  %2561 = vmatpush1.msra.mxu0 %v2537
  %2562 = vmatprep.subr.mxu0 0.0
  %2563 = vmatpush1.msra.mxu0 %v2538
  %2564 = vmatprep.subr.mxu0 0.0
  %2565 = vmatpush1.msra.mxu0 %v2539
  %2566 = vmatprep.subr.mxu0 0.0
  %2567 = vmatpush1.msra.mxu0 %v2540
  %2568 = vmatprep.subr.mxu0 0.0
  %2569 = vmatpush1.msra.mxu0 %v2541
  %2570 = vmatprep.subr.mxu0 0.0
  %2571 = vmatpush1.msra.mxu0 %v2542
  %2572 = vmatprep.subr.mxu0 0.0
  %2573 = vmatpush1.msra.mxu0 %v2543
  %2574 = vmatprep.subr.mxu0 0.0
  %2575 = vmatpush1.msra.mxu0 0.0
  %2576 = vmatprep.subr.mxu0 0.0
  %2577 = vmatpush1.msra.mxu0 0.0
  %2578 = vmatprep.subr.mxu0 0.0
  %2579 = vmatpush1.msra.mxu0 0.0
  %2580 = vmatprep.subr.mxu0 0.0
  %2581 = vmatpush1.msra.mxu0 0.0
  %2582 = vmatprep.subr.mxu0 0.0
  %2583 = vmatpush1.msra.mxu0 0.0
  %2584 = vmatprep.subr.mxu0 0.0
  %2585 = vmatpush1.msra.mxu0 0.0
  %2586 = vmatprep.subr.mxu0 0.0
  %2587 = vmatpush1.msra.mxu0 0.0
  %2588 = vmatprep.subr.mxu0 0.0
  %2589 = vmatpush1.msra.mxu0 0.0
  %2590 = vmatprep.subr.mxu0 0.0
  %2591 = vmatpush1.msra.mxu0 0.0
  %2592 = vmatprep.subr.mxu0 0.0
  %2593 = vmatpush1.msra.mxu0 0.0
  %2594 = vmatprep.subr.mxu0 0.0
  %2595 = vmatpush1.msra.mxu0 0.0
  %2596 = vmatprep.subr.mxu0 0.0
  %2597 = vmatpush1.msra.mxu0 0.0
  %2598 = vmatprep.subr.mxu0 0.0
  %2599 = vmatpush1.msra.mxu0 0.0
  %2600 = vmatprep.subr.mxu0 0.0
  %2601 = vmatpush1.msra.mxu0 0.0
  %2602 = vmatprep.subr.mxu0 0.0
  %2603 = vmatpush1.msra.mxu0 0.0
  %2604 = vmatprep.subr.mxu0 0.0
  %2605 = vmatpush1.msra.mxu0 0.0
  %2606 = vmatprep.subr.mxu0 0.0
  %2607 = vmatpush1.msra.mxu0 0.0
  %2608 = vmatprep.subr.mxu0 0.0
  %2609 = vmatpush1.msra.mxu0 0.0
  %2610 = vmatprep.subr.mxu0 0.0
  %2611 = vmatpush1.msra.mxu0 0.0
  %2612 = vmatprep.subr.mxu0 0.0
  %2613 = vmatpush1.msra.mxu0 0.0
  %2614 = vmatprep.subr.mxu0 0.0
  %2615 = vmatpush1.msra.mxu0 0.0
  %2616 = vmatprep.subr.mxu0 0.0
  %2617 = vmatpush1.msra.mxu0 0.0
  %2618 = vmatprep.mubr.f32.mxu0 0.0
  %2619 = vmatmul.mubr.f32.gmra.mrb[0].mxu0 %v2546
  %v2620 = vpop.f32.mrb[0].mxu0
  %v2621 = vadd.f32 0.0, %v2620
  %v2622 = vpop.f32.mrb[0].mxu0
  %2623 = vmatprep.mubr.f32.mxu0 0.0
  %2624 = vmatmul.mubr.f32.gmra.mrb[0].mxu0 %v2549
  %v2625 = vpop.f32.mrb[0].mxu0
  %v2626 = vadd.f32 0.0, %v2625
  %v2627 = vpop.f32.mrb[0].mxu0
  %2628 = vmatprep.mubr.f32.mxu0 0.0
  %2629 = vmatmul.mubr.f32.gmra.mrb[0].mxu0 %v2552
  %v2630 = vpop.f32.mrb[0].mxu0
  %v2631 = vadd.f32 0.0, %v2630
  %v2632 = vpop.f32.mrb[0].mxu0
  %2633 = vdwg.mxu0
  %v2634 = vld [vmem:[%s8] sm:$0xff]
  %v2635 = vld [vmem:[%s8 + $0x8] sm:$0xff]
  %v2636 = vld [vmem:[%s8 + $0x10] sm:$0xff]
  %v2637 = vld [vmem:[%s8 + $0x18] sm:$0xff]
  %v2638 = vld [vmem:[%s8 + $0x20] sm:$0xff]
  %v2639 = vld [vmem:[%s8 + $0x28] sm:$0xff]
  %v2640 = vld [vmem:[%s8 + $0x30] sm:$0xff]
  %v2641 = vld [vmem:[%s8 + $0x38] sm:$0xff]
  %v2642 = vld [vmem:[%s8 + $0x40] sm:$0xff]
  %v2643 = vld [vmem:[%s8 + $0x48] sm:$0xff]
  %2644 = vmatprep.subr.mxu0 0.0
  %2645 = vmatpush1.msra.mxu0 %v2634
  %2646 = vmatprep.subr.mxu0 0.0
  %2647 = vmatpush1.msra.mxu0 %v2635
  %2648 = vmatprep.subr.mxu0 0.0
  %2649 = vmatpush1.msra.mxu0 %v2636
  %2650 = vmatprep.subr.mxu0 0.0
  %2651 = vmatpush1.msra.mxu0 %v2637
  %2652 = vmatprep.subr.mxu0 0.0
  %2653 = vmatpush1.msra.mxu0 %v2638
  %2654 = vmatprep.subr.mxu0 0.0
  %2655 = vmatpush1.msra.mxu0 %v2639
  %2656 = vmatprep.subr.mxu0 0.0
  %2657 = vmatpush1.msra.mxu0 %v2640
  %2658 = vmatprep.subr.mxu0 0.0
  %2659 = vmatpush1.msra.mxu0 %v2641
  %2660 = vmatprep.subr.mxu0 0.0
  %2661 = vmatpush1.msra.mxu0 %v2642
  %2662 = vmatprep.subr.mxu0 0.0
  %2663 = vmatpush1.msra.mxu0 %v2643
  %2664 = vmatprep.subr.mxu0 0.0
  %2665 = vmatpush1.msra.mxu0 0.0
  %2666 = vmatprep.subr.mxu0 0.0
  %2667 = vmatpush1.msra.mxu0 0.0
  %2668 = vmatprep.subr.mxu0 0.0
  %2669 = vmatpush1.msra.mxu0 0.0
  %2670 = vmatprep.subr.mxu0 0.0
  %2671 = vmatpush1.msra.mxu0 0.0
  %2672 = vmatprep.subr.mxu0 0.0
  %2673 = vmatpush1.msra.mxu0 0.0
  %2674 = vmatprep.subr.mxu0 0.0
  %2675 = vmatpush1.msra.mxu0 0.0
  %2676 = vmatprep.subr.mxu0 0.0
  %2677 = vmatpush1.msra.mxu0 0.0
  %2678 = vmatprep.subr.mxu0 0.0
  %2679 = vmatpush1.msra.mxu0 0.0
  %2680 = vmatprep.subr.mxu0 0.0
  %2681 = vmatpush1.msra.mxu0 0.0
  %2682 = vmatprep.subr.mxu0 0.0
  %2683 = vmatpush1.msra.mxu0 0.0
  %2684 = vmatprep.subr.mxu0 0.0
  %2685 = vmatpush1.msra.mxu0 0.0
  %2686 = vmatprep.subr.mxu0 0.0
  %2687 = vmatpush1.msra.mxu0 0.0
  %2688 = vmatprep.subr.mxu0 0.0
  %2689 = vmatpush1.msra.mxu0 0.0
  %2690 = vmatprep.subr.mxu0 0.0
  %2691 = vmatpush1.msra.mxu0 0.0
  %2692 = vmatprep.subr.mxu0 0.0
  %2693 = vmatpush1.msra.mxu0 0.0
  %2694 = vmatprep.subr.mxu0 0.0
  %2695 = vmatpush1.msra.mxu0 0.0
  %2696 = vmatprep.subr.mxu0 0.0
  %2697 = vmatpush1.msra.mxu0 0.0
  %2698 = vmatprep.subr.mxu0 0.0
  %2699 = vmatpush1.msra.mxu0 0.0
  %2700 = vmatprep.subr.mxu0 0.0
  %2701 = vmatpush1.msra.mxu0 0.0
  %2702 = vmatprep.subr.mxu0 0.0
  %2703 = vmatpush1.msra.mxu0 0.0
  %2704 = vmatprep.subr.mxu0 0.0
  %2705 = vmatpush1.msra.mxu0 0.0
  %2706 = vmatprep.subr.mxu0 0.0
  %2707 = vmatpush1.msra.mxu0 0.0
  %2708 = vmatprep.mubr.f32.mxu0 0.0
  %2709 = vmatmul.mubr.f32.gmra.mrb[0].mxu0 %v2546
  %v2710 = vpop.f32.mrb[0].mxu0
  %v2711 = vadd.f32 0.0, %v2710
  %v2712 = vpop.f32.mrb[0].mxu0
  %2713 = vmatprep.mubr.f32.mxu0 0.0
  %2714 = vmatmul.mubr.f32.gmra.mrb[0].mxu0 %v2549
  %v2715 = vpop.f32.mrb[0].mxu0
  %v2716 = vadd.f32 0.0, %v2715
  %v2717 = vpop.f32.mrb[0].mxu0
  %2718 = vmatprep.mubr.f32.mxu0 0.0
  %2719 = vmatmul.mubr.f32.gmra.mrb[0].mxu0 %v2552
  %v2720 = vpop.f32.mrb[0].mxu0
  %v2721 = vadd.f32 0.0, %v2720
  %v2722 = vpop.f32.mrb[0].mxu0
  %2723 = vdwg.mxu0
  %2724 = vxpose.xlu0.b32.start [1/16] %v2621, 128
  %2725 = vxpose.xlu0.b32.cont [2/16] %v2626, 128
  %2726 = vxpose.xlu0.b32.cont [3/16] %v2631, 128
  %2727 = vxpose.xlu0.b32.cont [4/16] 0.0, 128
  %2728 = vxpose.xlu0.b32.cont [5/16] 0.0, 128
  %2729 = vxpose.xlu0.b32.cont [6/16] 0.0, 128
  %2730 = vxpose.xlu0.b32.cont [7/16] 0.0, 128
  %2731 = vxpose.xlu0.b32.cont [8/16] 0.0, 128
  %2732 = vxpose.xlu0.b32.cont [9/16] 0.0, 128
  %2733 = vxpose.xlu0.b32.cont [10/16] 0.0, 128
  %2734 = vxpose.xlu0.b32.cont [11/16] 0.0, 128
  %2735 = vxpose.xlu0.b32.cont [12/16] 0.0, 128
  %2736 = vxpose.xlu0.b32.cont [13/16] 0.0, 128
  %2737 = vxpose.xlu0.b32.cont [14/16] 0.0, 128
  %2738 = vxpose.xlu0.b32.cont [15/16] 0.0, 128
  %2739 = vxpose.xlu0.b32.end [16/16] 0.0, 128
  %v2740 = vpop.trf.xlu0
  %v2741 = vpop.trf.xlu0
  %v2742 = vpop.trf.xlu0
  %v2743 = vpop.trf.xlu0
  %v2744 = vpop.trf.xlu0
  %v2745 = vpop.trf.xlu0
  %v2746 = vpop.trf.xlu0
  %v2747 = vpop.trf.xlu0
  %v2748 = vpop.trf.xlu0
  %v2749 = vpop.trf.xlu0
  %v2750 = vpop.trf.xlu0
  %v2751 = vpop.trf.xlu0
  %v2752 = vpop.trf.xlu0
  %v2753 = vpop.trf.xlu0
  %v2754 = vpop.trf.xlu0
  %v2755 = vpop.trf.xlu0
  %2757 = vset.pattern.permute.xlu0 0
  %2758 = vperm.xlu0 %2757, %v2711
  %v2759 = vpop.permute.xlu0 %2758
  %2762 = vset.pattern.permute.xlu0 0
  %2763 = vperm.xlu0 %2762, %v2716
  %v2764 = vpop.permute.xlu0 %2763
  %2767 = vset.pattern.permute.xlu0 0
  %2768 = vperm.xlu0 %2767, %v2721
  %v2769 = vpop.permute.xlu0 %2768
  %v2771 = vlaneseq
  %v2772 = vshrl.u32 %v2771, 7
  %v2773 = vsub.s32 0, %v2772
  %v2774 = vrot.slane %v2740, %v2773
  %v2775 = vadd.f32 %v2759, %v2774
  %v2776 = vadd.f32 %v2764, %v2774
  %v2777 = vadd.f32 %v2769, %v2774
  %vm2778 = vcmp.gt.f32.partialorder %v2775, 0.0
  %vm2779 = vcmp.gt.f32.partialorder %v2776, 0.0
  %vm2780 = vcmp.gt.f32.partialorder %v2777, 0.0
  %v2781 = vmul.f32 %v2775, 0.2
  %v2782 = vmul.f32 %v2776, 0.2
  %v2783 = vmul.f32 %v2777, 0.2
  %v2784 = vsel %vm2778, %v2775, %v2781
  %v2785 = vsel %vm2779, %v2776, %v2782
  %v2786 = vsel %vm2780, %v2777, %v2783
  %v2787 = vadd.f32 %v2784, %v35
  %v2788 = vadd.f32 %v2785, %v36
  %v2789 = vadd.f32 %v2786, %v37
  %v2790 = vsel %vm696, %v2787, -inf
  %2791 = vmax.xlane.f32.xlu0 %v2790
  %v2792 = vpop.xlane.xlu0 %2791
  %v2793 = vsel %vm696, %v2788, -inf
  %2794 = vmax.xlane.f32.xlu0 %v2793
  %v2795 = vpop.xlane.xlu0 %2794
  %v2796 = vsel %vm703, %v2789, -inf
  %2797 = vmax.xlane.f32.xlu0 %v2796
  %v2798 = vpop.xlane.xlu0 %2797
  %v2799 = vsub.f32 %v2787, %v2792
  %v2800 = vsub.f32 %v2788, %v2795
  %v2801 = vsub.f32 %v2789, %v2798
  %v2802 = vmul.f32 %v2799, 1.442695
  %v2803 = vpow.pop %v2802
  %v2804 = vmul.f32 %v2800, 1.442695
  %v2805 = vpow.pop %v2804
  %v2806 = vmul.f32 %v2801, 1.442695
  %v2807 = vpow.pop %v2806
  %v2808 = vsel %vm696, %v2803, 0.0
  %2809 = vadd.xlane.f32.xlu0 %v2808
  %v2810 = vpop.xlane.xlu0 %2809
  %v2811 = vsel %vm696, %v2805, 0.0
  %2812 = vadd.xlane.f32.xlu0 %v2811
  %v2813 = vpop.xlane.xlu0 %2812
  %v2814 = vsel %vm703, %v2807, 0.0
  %2815 = vadd.xlane.f32.xlu0 %v2814
  %v2816 = vpop.xlane.xlu0 %2815
  %v2817 = vmax.f32 %v2810, 1e-20
  %v2818 = vmax.f32 %v2813, 1e-20
  %v2819 = vmax.f32 %v2816, 1e-20
  %v2820 = vrcp.pop %v2817
  %v2821 = vrcp.pop %v2818
  %v2822 = vrcp.pop %v2819
  %v2823 = vmul.f32 %v2817, %v2820
  %v2824 = vmul.f32 %v2818, %v2821
  %v2825 = vmul.f32 %v2819, %v2822
  %v2826 = vsub.f32 2.0, %v2823
  %v2827 = vsub.f32 2.0, %v2824
  %v2828 = vsub.f32 2.0, %v2825
  %v2829 = vmul.f32 %v2820, %v2826
  %v2830 = vmul.f32 %v2821, %v2827
  %v2831 = vmul.f32 %v2822, %v2828
  %v2832 = vmul.f32 %v2803, %v2829
  %v2833 = vmul.f32 %v2805, %v2830
  %v2834 = vmul.f32 %v2807, %v2831
  %2835 = vset.pattern.permute.xlu0 1
  %2836 = vperm.xlu0 %2835, %v2711
  %v2837 = vpop.permute.xlu0 %2836
  %2839 = vset.pattern.permute.xlu0 1
  %2840 = vperm.xlu0 %2839, %v2716
  %v2841 = vpop.permute.xlu0 %2840
  %2843 = vset.pattern.permute.xlu0 1
  %2844 = vperm.xlu0 %2843, %v2721
  %v2845 = vpop.permute.xlu0 %2844
  %v2847 = vlaneseq
  %v2848 = vshrl.u32 %v2847, 7
  %v2849 = vsub.s32 1, %v2848
  %v2850 = vrot.slane %v2740, %v2849
  %v2851 = vadd.f32 %v2837, %v2850
  %v2852 = vadd.f32 %v2841, %v2850
  %v2853 = vadd.f32 %v2845, %v2850
  %vm2854 = vcmp.gt.f32.partialorder %v2851, 0.0
  %vm2855 = vcmp.gt.f32.partialorder %v2852, 0.0
  %vm2856 = vcmp.gt.f32.partialorder %v2853, 0.0
  %v2857 = vmul.f32 %v2851, 0.2
  %v2858 = vmul.f32 %v2852, 0.2
  %v2859 = vmul.f32 %v2853, 0.2
  %v2860 = vsel %vm2854, %v2851, %v2857
  %v2861 = vsel %vm2855, %v2852, %v2858
  %v2862 = vsel %vm2856, %v2853, %v2859
  %v2863 = vadd.f32 %v2860, %v35
  %v2864 = vadd.f32 %v2861, %v36
  %v2865 = vadd.f32 %v2862, %v37
  %v2866 = vsel %vm696, %v2863, -inf
  %2867 = vmax.xlane.f32.xlu0 %v2866
  %v2868 = vpop.xlane.xlu0 %2867
  %v2869 = vsel %vm696, %v2864, -inf
  %2870 = vmax.xlane.f32.xlu0 %v2869
  %v2871 = vpop.xlane.xlu0 %2870
  %v2872 = vsel %vm703, %v2865, -inf
  %2873 = vmax.xlane.f32.xlu0 %v2872
  %v2874 = vpop.xlane.xlu0 %2873
  %v2875 = vsub.f32 %v2863, %v2868
  %v2876 = vsub.f32 %v2864, %v2871
  %v2877 = vsub.f32 %v2865, %v2874
  %v2878 = vmul.f32 %v2875, 1.442695
  %v2879 = vpow.pop %v2878
  %v2880 = vmul.f32 %v2876, 1.442695
  %v2881 = vpow.pop %v2880
  %v2882 = vmul.f32 %v2877, 1.442695
  %v2883 = vpow.pop %v2882
  %v2884 = vsel %vm696, %v2879, 0.0
  %2885 = vadd.xlane.f32.xlu0 %v2884
  %v2886 = vpop.xlane.xlu0 %2885
  %v2887 = vsel %vm696, %v2881, 0.0
  %2888 = vadd.xlane.f32.xlu0 %v2887
  %v2889 = vpop.xlane.xlu0 %2888
  %v2890 = vsel %vm703, %v2883, 0.0
  %2891 = vadd.xlane.f32.xlu0 %v2890
  %v2892 = vpop.xlane.xlu0 %2891
  %v2893 = vmax.f32 %v2886, 1e-20
  %v2894 = vmax.f32 %v2889, 1e-20
  %v2895 = vmax.f32 %v2892, 1e-20
  %v2896 = vrcp.pop %v2893
  %v2897 = vrcp.pop %v2894
  %v2898 = vrcp.pop %v2895
  %v2899 = vmul.f32 %v2893, %v2896
  %v2900 = vmul.f32 %v2894, %v2897
  %v2901 = vmul.f32 %v2895, %v2898
  %v2902 = vsub.f32 2.0, %v2899
  %v2903 = vsub.f32 2.0, %v2900
  %v2904 = vsub.f32 2.0, %v2901
  %v2905 = vmul.f32 %v2896, %v2902
  %v2906 = vmul.f32 %v2897, %v2903
  %v2907 = vmul.f32 %v2898, %v2904
  %v2908 = vmul.f32 %v2879, %v2905
  %v2909 = vmul.f32 %v2881, %v2906
  %v2910 = vmul.f32 %v2883, %v2907
  %2911 = vrot.lane.b32.xlu0 %v2521, 120
  %v2912 = vpop.permute.xlu0 %2911
  %2913 = vrot.lane.b32.xlu0 %v2526, 120
  %v2914 = vpop.permute.xlu0 %2913
  %2915 = vrot.lane.b32.xlu0 %v2531, 120
  %v2916 = vpop.permute.xlu0 %2915
  %v2920 = vsel %vm696, %v2908, 0
  %v2923 = vsel %vm696, %v2909, 0
  %v2926 = vsel %vm696, %v2910, 0
  %v2928 = vsel %vm839, %v2916, 0
  %2930 = vmatprep.subr.mxu0 0.0
  %2931 = vmatpush1.msra.mxu0 %v2912
  %2932 = vmatprep.subr.mxu0 0.0
  %2933 = vmatpush1.msra.mxu0 %v2914
  %2934 = vmatprep.subr.mxu0 0.0
  %2935 = vmatpush1.msra.mxu0 %v2928
  %2936 = vmatprep.subr.mxu0 0.0
  %2937 = vmatpush1.msra.mxu0 0.0
  %2938 = vmatprep.subr.mxu0 0.0
  %2939 = vmatpush1.msra.mxu0 0.0
  %2940 = vmatprep.subr.mxu0 0.0
  %2941 = vmatpush1.msra.mxu0 0.0
  %2942 = vmatprep.subr.mxu0 0.0
  %2943 = vmatpush1.msra.mxu0 0.0
  %2944 = vmatprep.subr.mxu0 0.0
  %2945 = vmatpush1.msra.mxu0 0.0
  %2946 = vmatprep.subr.mxu0 0.0
  %2947 = vmatpush1.msra.mxu0 0.0
  %2948 = vmatprep.subr.mxu0 0.0
  %2949 = vmatpush1.msra.mxu0 0.0
  %2950 = vmatprep.subr.mxu0 0.0
  %2951 = vmatpush1.msra.mxu0 0.0
  %2952 = vmatprep.subr.mxu0 0.0
  %2953 = vmatpush1.msra.mxu0 0.0
  %2954 = vmatprep.subr.mxu0 0.0
  %2955 = vmatpush1.msra.mxu0 0.0
  %2956 = vmatprep.subr.mxu0 0.0
  %2957 = vmatpush1.msra.mxu0 0.0
  %2958 = vmatprep.subr.mxu0 0.0
  %2959 = vmatpush1.msra.mxu0 0.0
  %2960 = vmatprep.subr.mxu0 0.0
  %2961 = vmatpush1.msra.mxu0 0.0
  %2962 = vmatprep.subr.mxu0 0.0
  %2963 = vmatpush1.msra.mxu0 0.0
  %2964 = vmatprep.subr.mxu0 0.0
  %2965 = vmatpush1.msra.mxu0 0.0
  %2966 = vmatprep.subr.mxu0 0.0
  %2967 = vmatpush1.msra.mxu0 0.0
  %2968 = vmatprep.subr.mxu0 0.0
  %2969 = vmatpush1.msra.mxu0 0.0
  %2970 = vmatprep.subr.mxu0 0.0
  %2971 = vmatpush1.msra.mxu0 0.0
  %2972 = vmatprep.subr.mxu0 0.0
  %2973 = vmatpush1.msra.mxu0 0.0
  %2974 = vmatprep.subr.mxu0 0.0
  %2975 = vmatpush1.msra.mxu0 0.0
  %2976 = vmatprep.subr.mxu0 0.0
  %2977 = vmatpush1.msra.mxu0 0.0
  %2978 = vmatprep.subr.mxu0 0.0
  %2979 = vmatpush1.msra.mxu0 0.0
  %2980 = vmatprep.subr.mxu0 0.0
  %2981 = vmatpush1.msra.mxu0 0.0
  %2982 = vmatprep.subr.mxu0 0.0
  %2983 = vmatpush1.msra.mxu0 0.0
  %2984 = vmatprep.subr.mxu0 0.0
  %2985 = vmatpush1.msra.mxu0 0.0
  %2986 = vmatprep.subr.mxu0 0.0
  %2987 = vmatpush1.msra.mxu0 0.0
  %2988 = vmatprep.subr.mxu0 0.0
  %2989 = vmatpush1.msra.mxu0 0.0
  %2990 = vmatprep.subr.mxu0 0.0
  %2991 = vmatpush1.msra.mxu0 0.0
  %2992 = vmatprep.subr.mxu0 0.0
  %2993 = vmatpush1.msra.mxu0 0.0
  %2994 = vmatprep.mubr.f32.mxu0 0.0
  %2995 = vmatmul.mubr.f32.gmra.mrb[0].mxu0 %v2920
  %v2996 = vpop.f32.mrb[0].mxu0
  %v2997 = vadd.f32 0.0, %v2996
  %v2998 = vpop.f32.mrb[0].mxu0
  %2999 = vmatprep.mubr.f32.mxu0 0.0
  %3000 = vmatmul.mubr.f32.gmra.mrb[0].mxu0 %v2923
  %v3001 = vpop.f32.mrb[0].mxu0
  %v3002 = vadd.f32 0.0, %v3001
  %v3003 = vpop.f32.mrb[0].mxu0
  %3004 = vmatprep.mubr.f32.mxu0 0.0
  %3005 = vmatmul.mubr.f32.gmra.mrb[0].mxu0 %v2926
  %v3006 = vpop.f32.mrb[0].mxu0
  %v3007 = vadd.f32 0.0, %v3006
  %v3008 = vpop.f32.mrb[0].mxu0
  %3009 = vdwg.mxu0
  %v3011 = vsel %vm696, %v2832, 0
  %v3014 = vsel %vm696, %v2833, 0
  %v3017 = vsel %vm696, %v2834, 0
  %v3019 = vsel %vm839, %v2531, 0
  %3021 = vmatprep.subr.mxu0 0.0
  %3022 = vmatpush1.msra.mxu0 %v2521
  %3023 = vmatprep.subr.mxu0 0.0
  %3024 = vmatpush1.msra.mxu0 %v2526
  %3025 = vmatprep.subr.mxu0 0.0
  %3026 = vmatpush1.msra.mxu0 %v3019
  %3027 = vmatprep.subr.mxu0 0.0
  %3028 = vmatpush1.msra.mxu0 0.0
  %3029 = vmatprep.subr.mxu0 0.0
  %3030 = vmatpush1.msra.mxu0 0.0
  %3031 = vmatprep.subr.mxu0 0.0
  %3032 = vmatpush1.msra.mxu0 0.0
  %3033 = vmatprep.subr.mxu0 0.0
  %3034 = vmatpush1.msra.mxu0 0.0
  %3035 = vmatprep.subr.mxu0 0.0
  %3036 = vmatpush1.msra.mxu0 0.0
  %3037 = vmatprep.subr.mxu0 0.0
  %3038 = vmatpush1.msra.mxu0 0.0
  %3039 = vmatprep.subr.mxu0 0.0
  %3040 = vmatpush1.msra.mxu0 0.0
  %3041 = vmatprep.subr.mxu0 0.0
  %3042 = vmatpush1.msra.mxu0 0.0
  %3043 = vmatprep.subr.mxu0 0.0
  %3044 = vmatpush1.msra.mxu0 0.0
  %3045 = vmatprep.subr.mxu0 0.0
  %3046 = vmatpush1.msra.mxu0 0.0
  %3047 = vmatprep.subr.mxu0 0.0
  %3048 = vmatpush1.msra.mxu0 0.0
  %3049 = vmatprep.subr.mxu0 0.0
  %3050 = vmatpush1.msra.mxu0 0.0
  %3051 = vmatprep.subr.mxu0 0.0
  %3052 = vmatpush1.msra.mxu0 0.0
  %3053 = vmatprep.subr.mxu0 0.0
  %3054 = vmatpush1.msra.mxu0 0.0
  %3055 = vmatprep.subr.mxu0 0.0
  %3056 = vmatpush1.msra.mxu0 0.0
  %3057 = vmatprep.subr.mxu0 0.0
  %3058 = vmatpush1.msra.mxu0 0.0
  %3059 = vmatprep.subr.mxu0 0.0
  %3060 = vmatpush1.msra.mxu0 0.0
  %3061 = vmatprep.subr.mxu0 0.0
  %3062 = vmatpush1.msra.mxu0 0.0
  %3063 = vmatprep.subr.mxu0 0.0
  %3064 = vmatpush1.msra.mxu0 0.0
  %3065 = vmatprep.subr.mxu0 0.0
  %3066 = vmatpush1.msra.mxu0 0.0
  %3067 = vmatprep.subr.mxu0 0.0
  %3068 = vmatpush1.msra.mxu0 0.0
  %3069 = vmatprep.subr.mxu0 0.0
  %3070 = vmatpush1.msra.mxu0 0.0
  %3071 = vmatprep.subr.mxu0 0.0
  %3072 = vmatpush1.msra.mxu0 0.0
  %3073 = vmatprep.subr.mxu0 0.0
  %3074 = vmatpush1.msra.mxu0 0.0
  %3075 = vmatprep.subr.mxu0 0.0
  %3076 = vmatpush1.msra.mxu0 0.0
  %3077 = vmatprep.subr.mxu0 0.0
  %3078 = vmatpush1.msra.mxu0 0.0
  %3079 = vmatprep.subr.mxu0 0.0
  %3080 = vmatpush1.msra.mxu0 0.0
  %3081 = vmatprep.subr.mxu0 0.0
  %3082 = vmatpush1.msra.mxu0 0.0
  %3083 = vmatprep.subr.mxu0 0.0
  %3084 = vmatpush1.msra.mxu0 0.0
  %3085 = vmatprep.mubr.f32.mxu0 0.0
  %3086 = vmatmul.mubr.f32.gmra.mrb[0].mxu0 %v3011
  %v3087 = vpop.f32.mrb[0].mxu0
  %v3088 = vadd.f32 %v2997, %v3087
  %v3089 = vpop.f32.mrb[0].mxu0
  %3090 = vmatprep.mubr.f32.mxu0 0.0
  %3091 = vmatmul.mubr.f32.gmra.mrb[0].mxu0 %v3014
  %v3092 = vpop.f32.mrb[0].mxu0
  %v3093 = vadd.f32 %v3002, %v3092
  %v3094 = vpop.f32.mrb[0].mxu0
  %3095 = vmatprep.mubr.f32.mxu0 0.0
  %3096 = vmatmul.mubr.f32.gmra.mrb[0].mxu0 %v3017
  %v3097 = vpop.f32.mrb[0].mxu0
  %v3098 = vadd.f32 %v3007, %v3097
  %v3099 = vpop.f32.mrb[0].mxu0
  %3100 = vdwg.mxu0
  %3101 = vset.pattern.permute.xlu0 2
  %3102 = vperm.xlu0 %3101, %v2711
  %v3103 = vpop.permute.xlu0 %3102
  %3105 = vset.pattern.permute.xlu0 2
  %3106 = vperm.xlu0 %3105, %v2716
  %v3107 = vpop.permute.xlu0 %3106
  %3109 = vset.pattern.permute.xlu0 2
  %3110 = vperm.xlu0 %3109, %v2721
  %v3111 = vpop.permute.xlu0 %3110
  %v3113 = vlaneseq
  %v3114 = vshrl.u32 %v3113, 7
  %v3115 = vsub.s32 2, %v3114
  %v3116 = vrot.slane %v2740, %v3115
  %v3117 = vadd.f32 %v3103, %v3116
  %v3118 = vadd.f32 %v3107, %v3116
  %v3119 = vadd.f32 %v3111, %v3116
  %vm3120 = vcmp.gt.f32.partialorder %v3117, 0.0
  %vm3121 = vcmp.gt.f32.partialorder %v3118, 0.0
  %vm3122 = vcmp.gt.f32.partialorder %v3119, 0.0
  %v3123 = vmul.f32 %v3117, 0.2
  %v3124 = vmul.f32 %v3118, 0.2
  %v3125 = vmul.f32 %v3119, 0.2
  %v3126 = vsel %vm3120, %v3117, %v3123
  %v3127 = vsel %vm3121, %v3118, %v3124
  %v3128 = vsel %vm3122, %v3119, %v3125
  %v3129 = vadd.f32 %v3126, %v35
  %v3130 = vadd.f32 %v3127, %v36
  %v3131 = vadd.f32 %v3128, %v37
  %v3132 = vsel %vm696, %v3129, -inf
  %3133 = vmax.xlane.f32.xlu0 %v3132
  %v3134 = vpop.xlane.xlu0 %3133
  %v3135 = vsel %vm696, %v3130, -inf
  %3136 = vmax.xlane.f32.xlu0 %v3135
  %v3137 = vpop.xlane.xlu0 %3136
  %v3138 = vsel %vm703, %v3131, -inf
  %3139 = vmax.xlane.f32.xlu0 %v3138
  %v3140 = vpop.xlane.xlu0 %3139
  %v3141 = vsub.f32 %v3129, %v3134
  %v3142 = vsub.f32 %v3130, %v3137
  %v3143 = vsub.f32 %v3131, %v3140
  %v3144 = vmul.f32 %v3141, 1.442695
  %v3145 = vpow.pop %v3144
  %v3146 = vmul.f32 %v3142, 1.442695
  %v3147 = vpow.pop %v3146
  %v3148 = vmul.f32 %v3143, 1.442695
  %v3149 = vpow.pop %v3148
  %v3150 = vsel %vm696, %v3145, 0.0
  %3151 = vadd.xlane.f32.xlu0 %v3150
  %v3152 = vpop.xlane.xlu0 %3151
  %v3153 = vsel %vm696, %v3147, 0.0
  %3154 = vadd.xlane.f32.xlu0 %v3153
  %v3155 = vpop.xlane.xlu0 %3154
  %v3156 = vsel %vm703, %v3149, 0.0
  %3157 = vadd.xlane.f32.xlu0 %v3156
  %v3158 = vpop.xlane.xlu0 %3157
  %v3159 = vmax.f32 %v3152, 1e-20
  %v3160 = vmax.f32 %v3155, 1e-20
  %v3161 = vmax.f32 %v3158, 1e-20
  %v3162 = vrcp.pop %v3159
  %v3163 = vrcp.pop %v3160
  %v3164 = vrcp.pop %v3161
  %v3165 = vmul.f32 %v3159, %v3162
  %v3166 = vmul.f32 %v3160, %v3163
  %v3167 = vmul.f32 %v3161, %v3164
  %v3168 = vsub.f32 2.0, %v3165
  %v3169 = vsub.f32 2.0, %v3166
  %v3170 = vsub.f32 2.0, %v3167
  %v3171 = vmul.f32 %v3162, %v3168
  %v3172 = vmul.f32 %v3163, %v3169
  %v3173 = vmul.f32 %v3164, %v3170
  %v3174 = vmul.f32 %v3145, %v3171
  %v3175 = vmul.f32 %v3147, %v3172
  %v3176 = vmul.f32 %v3149, %v3173
  %3177 = vrot.lane.b32.xlu0 %v2521, 112
  %v3178 = vpop.permute.xlu0 %3177
  %3179 = vrot.lane.b32.xlu0 %v2526, 112
  %v3180 = vpop.permute.xlu0 %3179
  %3181 = vrot.lane.b32.xlu0 %v2531, 112
  %v3182 = vpop.permute.xlu0 %3181
  %v3186 = vsel %vm696, %v3174, 0
  %v3189 = vsel %vm696, %v3175, 0
  %v3192 = vsel %vm696, %v3176, 0
  %v3194 = vsel %vm839, %v3182, 0
  %3196 = vmatprep.subr.mxu0 0.0
  %3197 = vmatpush1.msra.mxu0 %v3178
  %3198 = vmatprep.subr.mxu0 0.0
  %3199 = vmatpush1.msra.mxu0 %v3180
  %3200 = vmatprep.subr.mxu0 0.0
  %3201 = vmatpush1.msra.mxu0 %v3194
  %3202 = vmatprep.subr.mxu0 0.0
  %3203 = vmatpush1.msra.mxu0 0.0
  %3204 = vmatprep.subr.mxu0 0.0
  %3205 = vmatpush1.msra.mxu0 0.0
  %3206 = vmatprep.subr.mxu0 0.0
  %3207 = vmatpush1.msra.mxu0 0.0
  %3208 = vmatprep.subr.mxu0 0.0
  %3209 = vmatpush1.msra.mxu0 0.0
  %3210 = vmatprep.subr.mxu0 0.0
  %3211 = vmatpush1.msra.mxu0 0.0
  %3212 = vmatprep.subr.mxu0 0.0
  %3213 = vmatpush1.msra.mxu0 0.0
  %3214 = vmatprep.subr.mxu0 0.0
  %3215 = vmatpush1.msra.mxu0 0.0
  %3216 = vmatprep.subr.mxu0 0.0
  %3217 = vmatpush1.msra.mxu0 0.0
  %3218 = vmatprep.subr.mxu0 0.0
  %3219 = vmatpush1.msra.mxu0 0.0
  %3220 = vmatprep.subr.mxu0 0.0
  %3221 = vmatpush1.msra.mxu0 0.0
  %3222 = vmatprep.subr.mxu0 0.0
  %3223 = vmatpush1.msra.mxu0 0.0
  %3224 = vmatprep.subr.mxu0 0.0
  %3225 = vmatpush1.msra.mxu0 0.0
  %3226 = vmatprep.subr.mxu0 0.0
  %3227 = vmatpush1.msra.mxu0 0.0
  %3228 = vmatprep.subr.mxu0 0.0
  %3229 = vmatpush1.msra.mxu0 0.0
  %3230 = vmatprep.subr.mxu0 0.0
  %3231 = vmatpush1.msra.mxu0 0.0
  %3232 = vmatprep.subr.mxu0 0.0
  %3233 = vmatpush1.msra.mxu0 0.0
  %3234 = vmatprep.subr.mxu0 0.0
  %3235 = vmatpush1.msra.mxu0 0.0
  %3236 = vmatprep.subr.mxu0 0.0
  %3237 = vmatpush1.msra.mxu0 0.0
  %3238 = vmatprep.subr.mxu0 0.0
  %3239 = vmatpush1.msra.mxu0 0.0
  %3240 = vmatprep.subr.mxu0 0.0
  %3241 = vmatpush1.msra.mxu0 0.0
  %3242 = vmatprep.subr.mxu0 0.0
  %3243 = vmatpush1.msra.mxu0 0.0
  %3244 = vmatprep.subr.mxu0 0.0
  %3245 = vmatpush1.msra.mxu0 0.0
  %3246 = vmatprep.subr.mxu0 0.0
  %3247 = vmatpush1.msra.mxu0 0.0
  %3248 = vmatprep.subr.mxu0 0.0
  %3249 = vmatpush1.msra.mxu0 0.0
  %3250 = vmatprep.subr.mxu0 0.0
  %3251 = vmatpush1.msra.mxu0 0.0
  %3252 = vmatprep.subr.mxu0 0.0
  %3253 = vmatpush1.msra.mxu0 0.0
  %3254 = vmatprep.subr.mxu0 0.0
  %3255 = vmatpush1.msra.mxu0 0.0
  %3256 = vmatprep.subr.mxu0 0.0
  %3257 = vmatpush1.msra.mxu0 0.0
  %3258 = vmatprep.subr.mxu0 0.0
  %3259 = vmatpush1.msra.mxu0 0.0
  %3260 = vmatprep.mubr.f32.mxu0 0.0
  %3261 = vmatmul.mubr.f32.gmra.mrb[0].mxu0 %v3186
  %v3262 = vpop.f32.mrb[0].mxu0
  %v3263 = vadd.f32 0.0, %v3262
  %v3264 = vpop.f32.mrb[0].mxu0
  %3265 = vmatprep.mubr.f32.mxu0 0.0
  %3266 = vmatmul.mubr.f32.gmra.mrb[0].mxu0 %v3189
  %v3267 = vpop.f32.mrb[0].mxu0
  %v3268 = vadd.f32 0.0, %v3267
  %v3269 = vpop.f32.mrb[0].mxu0
  %3270 = vmatprep.mubr.f32.mxu0 0.0
  %3271 = vmatmul.mubr.f32.gmra.mrb[0].mxu0 %v3192
  %v3272 = vpop.f32.mrb[0].mxu0
  %v3273 = vadd.f32 0.0, %v3272
  %v3274 = vpop.f32.mrb[0].mxu0
  %3275 = vdwg.mxu0
  %v3276 = vadd.f32 %v3088, %v3263
  %v3277 = vadd.f32 %v3093, %v3268
  %v3278 = vadd.f32 %v3098, %v3273
  %3279 = vset.pattern.permute.xlu0 3
  %3280 = vperm.xlu0 %3279, %v2711
  %v3281 = vpop.permute.xlu0 %3280
  %3283 = vset.pattern.permute.xlu0 3
  %3284 = vperm.xlu0 %3283, %v2716
  %v3285 = vpop.permute.xlu0 %3284
  %3287 = vset.pattern.permute.xlu0 3
  %3288 = vperm.xlu0 %3287, %v2721
  %v3289 = vpop.permute.xlu0 %3288
  %v3291 = vlaneseq
  %v3292 = vshrl.u32 %v3291, 7
  %v3293 = vsub.s32 3, %v3292
  %v3294 = vrot.slane %v2740, %v3293
  %v3295 = vadd.f32 %v3281, %v3294
  %v3296 = vadd.f32 %v3285, %v3294
  %v3297 = vadd.f32 %v3289, %v3294
  %vm3298 = vcmp.gt.f32.partialorder %v3295, 0.0
  %vm3299 = vcmp.gt.f32.partialorder %v3296, 0.0
  %vm3300 = vcmp.gt.f32.partialorder %v3297, 0.0
  %v3301 = vmul.f32 %v3295, 0.2
  %v3302 = vmul.f32 %v3296, 0.2
  %v3303 = vmul.f32 %v3297, 0.2
  %v3304 = vsel %vm3298, %v3295, %v3301
  %v3305 = vsel %vm3299, %v3296, %v3302
  %v3306 = vsel %vm3300, %v3297, %v3303
  %v3307 = vadd.f32 %v3304, %v35
  %v3308 = vadd.f32 %v3305, %v36
  %v3309 = vadd.f32 %v3306, %v37
  %v3310 = vsel %vm696, %v3307, -inf
  %3311 = vmax.xlane.f32.xlu0 %v3310
  %v3312 = vpop.xlane.xlu0 %3311
  %v3313 = vsel %vm696, %v3308, -inf
  %3314 = vmax.xlane.f32.xlu0 %v3313
  %v3315 = vpop.xlane.xlu0 %3314
  %v3316 = vsel %vm703, %v3309, -inf
  %3317 = vmax.xlane.f32.xlu0 %v3316
  %v3318 = vpop.xlane.xlu0 %3317
  %v3319 = vsub.f32 %v3307, %v3312
  %v3320 = vsub.f32 %v3308, %v3315
  %v3321 = vsub.f32 %v3309, %v3318
  %v3322 = vmul.f32 %v3319, 1.442695
  %v3323 = vpow.pop %v3322
  %v3324 = vmul.f32 %v3320, 1.442695
  %v3325 = vpow.pop %v3324
  %v3326 = vmul.f32 %v3321, 1.442695
  %v3327 = vpow.pop %v3326
  %v3328 = vsel %vm696, %v3323, 0.0
  %3329 = vadd.xlane.f32.xlu0 %v3328
  %v3330 = vpop.xlane.xlu0 %3329
  %v3331 = vsel %vm696, %v3325, 0.0
  %3332 = vadd.xlane.f32.xlu0 %v3331
  %v3333 = vpop.xlane.xlu0 %3332
  %v3334 = vsel %vm703, %v3327, 0.0
  %3335 = vadd.xlane.f32.xlu0 %v3334
  %v3336 = vpop.xlane.xlu0 %3335
  %v3337 = vmax.f32 %v3330, 1e-20
  %v3338 = vmax.f32 %v3333, 1e-20
  %v3339 = vmax.f32 %v3336, 1e-20
  %v3340 = vrcp.pop %v3337
  %v3341 = vrcp.pop %v3338
  %v3342 = vrcp.pop %v3339
  %v3343 = vmul.f32 %v3337, %v3340
  %v3344 = vmul.f32 %v3338, %v3341
  %v3345 = vmul.f32 %v3339, %v3342
  %v3346 = vsub.f32 2.0, %v3343
  %v3347 = vsub.f32 2.0, %v3344
  %v3348 = vsub.f32 2.0, %v3345
  %v3349 = vmul.f32 %v3340, %v3346
  %v3350 = vmul.f32 %v3341, %v3347
  %v3351 = vmul.f32 %v3342, %v3348
  %v3352 = vmul.f32 %v3323, %v3349
  %v3353 = vmul.f32 %v3325, %v3350
  %v3354 = vmul.f32 %v3327, %v3351
  %3355 = vrot.lane.b32.xlu0 %v2521, 104
  %v3356 = vpop.permute.xlu0 %3355
  %3357 = vrot.lane.b32.xlu0 %v2526, 104
  %v3358 = vpop.permute.xlu0 %3357
  %3359 = vrot.lane.b32.xlu0 %v2531, 104
  %v3360 = vpop.permute.xlu0 %3359
  %v3364 = vsel %vm696, %v3352, 0
  %v3367 = vsel %vm696, %v3353, 0
  %v3370 = vsel %vm696, %v3354, 0
  %v3372 = vsel %vm839, %v3360, 0
  %3374 = vmatprep.subr.mxu0 0.0
  %3375 = vmatpush1.msra.mxu0 %v3356
  %3376 = vmatprep.subr.mxu0 0.0
  %3377 = vmatpush1.msra.mxu0 %v3358
  %3378 = vmatprep.subr.mxu0 0.0
  %3379 = vmatpush1.msra.mxu0 %v3372
  %3380 = vmatprep.subr.mxu0 0.0
  %3381 = vmatpush1.msra.mxu0 0.0
  %3382 = vmatprep.subr.mxu0 0.0
  %3383 = vmatpush1.msra.mxu0 0.0
  %3384 = vmatprep.subr.mxu0 0.0
  %3385 = vmatpush1.msra.mxu0 0.0
  %3386 = vmatprep.subr.mxu0 0.0
  %3387 = vmatpush1.msra.mxu0 0.0
  %3388 = vmatprep.subr.mxu0 0.0
  %3389 = vmatpush1.msra.mxu0 0.0
  %3390 = vmatprep.subr.mxu0 0.0
  %3391 = vmatpush1.msra.mxu0 0.0
  %3392 = vmatprep.subr.mxu0 0.0
  %3393 = vmatpush1.msra.mxu0 0.0
  %3394 = vmatprep.subr.mxu0 0.0
  %3395 = vmatpush1.msra.mxu0 0.0
  %3396 = vmatprep.subr.mxu0 0.0
  %3397 = vmatpush1.msra.mxu0 0.0
  %3398 = vmatprep.subr.mxu0 0.0
  %3399 = vmatpush1.msra.mxu0 0.0
  %3400 = vmatprep.subr.mxu0 0.0
  %3401 = vmatpush1.msra.mxu0 0.0
  %3402 = vmatprep.subr.mxu0 0.0
  %3403 = vmatpush1.msra.mxu0 0.0
  %3404 = vmatprep.subr.mxu0 0.0
  %3405 = vmatpush1.msra.mxu0 0.0
  %3406 = vmatprep.subr.mxu0 0.0
  %3407 = vmatpush1.msra.mxu0 0.0
  %3408 = vmatprep.subr.mxu0 0.0
  %3409 = vmatpush1.msra.mxu0 0.0
  %3410 = vmatprep.subr.mxu0 0.0
  %3411 = vmatpush1.msra.mxu0 0.0
  %3412 = vmatprep.subr.mxu0 0.0
  %3413 = vmatpush1.msra.mxu0 0.0
  %3414 = vmatprep.subr.mxu0 0.0
  %3415 = vmatpush1.msra.mxu0 0.0
  %3416 = vmatprep.subr.mxu0 0.0
  %3417 = vmatpush1.msra.mxu0 0.0
  %3418 = vmatprep.subr.mxu0 0.0
  %3419 = vmatpush1.msra.mxu0 0.0
  %3420 = vmatprep.subr.mxu0 0.0
  %3421 = vmatpush1.msra.mxu0 0.0
  %3422 = vmatprep.subr.mxu0 0.0
  %3423 = vmatpush1.msra.mxu0 0.0
  %3424 = vmatprep.subr.mxu0 0.0
  %3425 = vmatpush1.msra.mxu0 0.0
  %3426 = vmatprep.subr.mxu0 0.0
  %3427 = vmatpush1.msra.mxu0 0.0
  %3428 = vmatprep.subr.mxu0 0.0
  %3429 = vmatpush1.msra.mxu0 0.0
  %3430 = vmatprep.subr.mxu0 0.0
  %3431 = vmatpush1.msra.mxu0 0.0
  %3432 = vmatprep.subr.mxu0 0.0
  %3433 = vmatpush1.msra.mxu0 0.0
  %3434 = vmatprep.subr.mxu0 0.0
  %3435 = vmatpush1.msra.mxu0 0.0
  %3436 = vmatprep.subr.mxu0 0.0
  %3437 = vmatpush1.msra.mxu0 0.0
  %3438 = vmatprep.mubr.f32.mxu0 0.0
  %3439 = vmatmul.mubr.f32.gmra.mrb[0].mxu0 %v3364
  %v3440 = vpop.f32.mrb[0].mxu0
  %v3441 = vadd.f32 0.0, %v3440
  %v3442 = vpop.f32.mrb[0].mxu0
  %3443 = vmatprep.mubr.f32.mxu0 0.0
  %3444 = vmatmul.mubr.f32.gmra.mrb[0].mxu0 %v3367
  %v3445 = vpop.f32.mrb[0].mxu0
  %v3446 = vadd.f32 0.0, %v3445
  %v3447 = vpop.f32.mrb[0].mxu0
  %3448 = vmatprep.mubr.f32.mxu0 0.0
  %3449 = vmatmul.mubr.f32.gmra.mrb[0].mxu0 %v3370
  %v3450 = vpop.f32.mrb[0].mxu0
  %v3451 = vadd.f32 0.0, %v3450
  %v3452 = vpop.f32.mrb[0].mxu0
  %3453 = vdwg.mxu0
  %v3454 = vadd.f32 %v3276, %v3441
  %v3455 = vadd.f32 %v3277, %v3446
  %v3456 = vadd.f32 %v3278, %v3451
  %3457 = vset.pattern.permute.xlu0 4
  %3458 = vperm.xlu0 %3457, %v2711
  %v3459 = vpop.permute.xlu0 %3458
  %3461 = vset.pattern.permute.xlu0 4
  %3462 = vperm.xlu0 %3461, %v2716
  %v3463 = vpop.permute.xlu0 %3462
  %3465 = vset.pattern.permute.xlu0 4
  %3466 = vperm.xlu0 %3465, %v2721
  %v3467 = vpop.permute.xlu0 %3466
  %v3469 = vlaneseq
  %v3470 = vshrl.u32 %v3469, 7
  %v3471 = vsub.s32 4, %v3470
  %v3472 = vrot.slane %v2740, %v3471
  %v3473 = vadd.f32 %v3459, %v3472
  %v3474 = vadd.f32 %v3463, %v3472
  %v3475 = vadd.f32 %v3467, %v3472
  %vm3476 = vcmp.gt.f32.partialorder %v3473, 0.0
  %vm3477 = vcmp.gt.f32.partialorder %v3474, 0.0
  %vm3478 = vcmp.gt.f32.partialorder %v3475, 0.0
  %v3479 = vmul.f32 %v3473, 0.2
  %v3480 = vmul.f32 %v3474, 0.2
  %v3481 = vmul.f32 %v3475, 0.2
  %v3482 = vsel %vm3476, %v3473, %v3479
  %v3483 = vsel %vm3477, %v3474, %v3480
  %v3484 = vsel %vm3478, %v3475, %v3481
  %v3485 = vadd.f32 %v3482, %v35
  %v3486 = vadd.f32 %v3483, %v36
  %v3487 = vadd.f32 %v3484, %v37
  %v3488 = vsel %vm696, %v3485, -inf
  %3489 = vmax.xlane.f32.xlu0 %v3488
  %v3490 = vpop.xlane.xlu0 %3489
  %v3491 = vsel %vm696, %v3486, -inf
  %3492 = vmax.xlane.f32.xlu0 %v3491
  %v3493 = vpop.xlane.xlu0 %3492
  %v3494 = vsel %vm703, %v3487, -inf
  %3495 = vmax.xlane.f32.xlu0 %v3494
  %v3496 = vpop.xlane.xlu0 %3495
  %v3497 = vsub.f32 %v3485, %v3490
  %v3498 = vsub.f32 %v3486, %v3493
  %v3499 = vsub.f32 %v3487, %v3496
  %v3500 = vmul.f32 %v3497, 1.442695
  %v3501 = vpow.pop %v3500
  %v3502 = vmul.f32 %v3498, 1.442695
  %v3503 = vpow.pop %v3502
  %v3504 = vmul.f32 %v3499, 1.442695
  %v3505 = vpow.pop %v3504
  %v3506 = vsel %vm696, %v3501, 0.0
  %3507 = vadd.xlane.f32.xlu0 %v3506
  %v3508 = vpop.xlane.xlu0 %3507
  %v3509 = vsel %vm696, %v3503, 0.0
  %3510 = vadd.xlane.f32.xlu0 %v3509
  %v3511 = vpop.xlane.xlu0 %3510
  %v3512 = vsel %vm703, %v3505, 0.0
  %3513 = vadd.xlane.f32.xlu0 %v3512
  %v3514 = vpop.xlane.xlu0 %3513
  %v3515 = vmax.f32 %v3508, 1e-20
  %v3516 = vmax.f32 %v3511, 1e-20
  %v3517 = vmax.f32 %v3514, 1e-20
  %v3518 = vrcp.pop %v3515
  %v3519 = vrcp.pop %v3516
  %v3520 = vrcp.pop %v3517
  %v3521 = vmul.f32 %v3515, %v3518
  %v3522 = vmul.f32 %v3516, %v3519
  %v3523 = vmul.f32 %v3517, %v3520
  %v3524 = vsub.f32 2.0, %v3521
  %v3525 = vsub.f32 2.0, %v3522
  %v3526 = vsub.f32 2.0, %v3523
  %v3527 = vmul.f32 %v3518, %v3524
  %v3528 = vmul.f32 %v3519, %v3525
  %v3529 = vmul.f32 %v3520, %v3526
  %v3530 = vmul.f32 %v3501, %v3527
  %v3531 = vmul.f32 %v3503, %v3528
  %v3532 = vmul.f32 %v3505, %v3529
  %3533 = vrot.lane.b32.xlu0 %v2521, 96
  %v3534 = vpop.permute.xlu0 %3533
  %3535 = vrot.lane.b32.xlu0 %v2526, 96
  %v3536 = vpop.permute.xlu0 %3535
  %3537 = vrot.lane.b32.xlu0 %v2531, 96
  %v3538 = vpop.permute.xlu0 %3537
  %v3542 = vsel %vm696, %v3530, 0
  %v3545 = vsel %vm696, %v3531, 0
  %v3548 = vsel %vm696, %v3532, 0
  %v3550 = vsel %vm839, %v3538, 0
  %3552 = vmatprep.subr.mxu0 0.0
  %3553 = vmatpush1.msra.mxu0 %v3534
  %3554 = vmatprep.subr.mxu0 0.0
  %3555 = vmatpush1.msra.mxu0 %v3536
  %3556 = vmatprep.subr.mxu0 0.0
  %3557 = vmatpush1.msra.mxu0 %v3550
  %3558 = vmatprep.subr.mxu0 0.0
  %3559 = vmatpush1.msra.mxu0 0.0
  %3560 = vmatprep.subr.mxu0 0.0
  %3561 = vmatpush1.msra.mxu0 0.0
  %3562 = vmatprep.subr.mxu0 0.0
  %3563 = vmatpush1.msra.mxu0 0.0
  %3564 = vmatprep.subr.mxu0 0.0
  %3565 = vmatpush1.msra.mxu0 0.0
  %3566 = vmatprep.subr.mxu0 0.0
  %3567 = vmatpush1.msra.mxu0 0.0
  %3568 = vmatprep.subr.mxu0 0.0
  %3569 = vmatpush1.msra.mxu0 0.0
  %3570 = vmatprep.subr.mxu0 0.0
  %3571 = vmatpush1.msra.mxu0 0.0
  %3572 = vmatprep.subr.mxu0 0.0
  %3573 = vmatpush1.msra.mxu0 0.0
  %3574 = vmatprep.subr.mxu0 0.0
  %3575 = vmatpush1.msra.mxu0 0.0
  %3576 = vmatprep.subr.mxu0 0.0
  %3577 = vmatpush1.msra.mxu0 0.0
  %3578 = vmatprep.subr.mxu0 0.0
  %3579 = vmatpush1.msra.mxu0 0.0
  %3580 = vmatprep.subr.mxu0 0.0
  %3581 = vmatpush1.msra.mxu0 0.0
  %3582 = vmatprep.subr.mxu0 0.0
  %3583 = vmatpush1.msra.mxu0 0.0
  %3584 = vmatprep.subr.mxu0 0.0
  %3585 = vmatpush1.msra.mxu0 0.0
  %3586 = vmatprep.subr.mxu0 0.0
  %3587 = vmatpush1.msra.mxu0 0.0
  %3588 = vmatprep.subr.mxu0 0.0
  %3589 = vmatpush1.msra.mxu0 0.0
  %3590 = vmatprep.subr.mxu0 0.0
  %3591 = vmatpush1.msra.mxu0 0.0
  %3592 = vmatprep.subr.mxu0 0.0
  %3593 = vmatpush1.msra.mxu0 0.0
  %3594 = vmatprep.subr.mxu0 0.0
  %3595 = vmatpush1.msra.mxu0 0.0
  %3596 = vmatprep.subr.mxu0 0.0
  %3597 = vmatpush1.msra.mxu0 0.0
  %3598 = vmatprep.subr.mxu0 0.0
  %3599 = vmatpush1.msra.mxu0 0.0
  %3600 = vmatprep.subr.mxu0 0.0
  %3601 = vmatpush1.msra.mxu0 0.0
  %3602 = vmatprep.subr.mxu0 0.0
  %3603 = vmatpush1.msra.mxu0 0.0
  %3604 = vmatprep.subr.mxu0 0.0
  %3605 = vmatpush1.msra.mxu0 0.0
  %3606 = vmatprep.subr.mxu0 0.0
  %3607 = vmatpush1.msra.mxu0 0.0
  %3608 = vmatprep.subr.mxu0 0.0
  %3609 = vmatpush1.msra.mxu0 0.0
  %3610 = vmatprep.subr.mxu0 0.0
  %3611 = vmatpush1.msra.mxu0 0.0
  %3612 = vmatprep.subr.mxu0 0.0
  %3613 = vmatpush1.msra.mxu0 0.0
  %3614 = vmatprep.subr.mxu0 0.0
  %3615 = vmatpush1.msra.mxu0 0.0
  %3616 = vmatprep.mubr.f32.mxu0 0.0
  %3617 = vmatmul.mubr.f32.gmra.mrb[0].mxu0 %v3542
  %v3618 = vpop.f32.mrb[0].mxu0
  %v3619 = vadd.f32 0.0, %v3618
  %v3620 = vpop.f32.mrb[0].mxu0
  %3621 = vmatprep.mubr.f32.mxu0 0.0
  %3622 = vmatmul.mubr.f32.gmra.mrb[0].mxu0 %v3545
  %v3623 = vpop.f32.mrb[0].mxu0
  %v3624 = vadd.f32 0.0, %v3623
  %v3625 = vpop.f32.mrb[0].mxu0
  %3626 = vmatprep.mubr.f32.mxu0 0.0
  %3627 = vmatmul.mubr.f32.gmra.mrb[0].mxu0 %v3548
  %v3628 = vpop.f32.mrb[0].mxu0
  %v3629 = vadd.f32 0.0, %v3628
  %v3630 = vpop.f32.mrb[0].mxu0
  %3631 = vdwg.mxu0
  %v3632 = vadd.f32 %v3454, %v3619
  %v3633 = vadd.f32 %v3455, %v3624
  %v3634 = vadd.f32 %v3456, %v3629
  %3635 = vset.pattern.permute.xlu0 5
  %3636 = vperm.xlu0 %3635, %v2711
  %v3637 = vpop.permute.xlu0 %3636
  %3639 = vset.pattern.permute.xlu0 5
  %3640 = vperm.xlu0 %3639, %v2716
  %v3641 = vpop.permute.xlu0 %3640
  %3643 = vset.pattern.permute.xlu0 5
  %3644 = vperm.xlu0 %3643, %v2721
  %v3645 = vpop.permute.xlu0 %3644
  %v3647 = vlaneseq
  %v3648 = vshrl.u32 %v3647, 7
  %v3649 = vsub.s32 5, %v3648
  %v3650 = vrot.slane %v2740, %v3649
  %v3651 = vadd.f32 %v3637, %v3650
  %v3652 = vadd.f32 %v3641, %v3650
  %v3653 = vadd.f32 %v3645, %v3650
  %vm3654 = vcmp.gt.f32.partialorder %v3651, 0.0
  %vm3655 = vcmp.gt.f32.partialorder %v3652, 0.0
  %vm3656 = vcmp.gt.f32.partialorder %v3653, 0.0
  %v3657 = vmul.f32 %v3651, 0.2
  %v3658 = vmul.f32 %v3652, 0.2
  %v3659 = vmul.f32 %v3653, 0.2
  %v3660 = vsel %vm3654, %v3651, %v3657
  %v3661 = vsel %vm3655, %v3652, %v3658
  %v3662 = vsel %vm3656, %v3653, %v3659
  %v3663 = vadd.f32 %v3660, %v35
  %v3664 = vadd.f32 %v3661, %v36
  %v3665 = vadd.f32 %v3662, %v37
  %v3666 = vsel %vm696, %v3663, -inf
  %3667 = vmax.xlane.f32.xlu0 %v3666
  %v3668 = vpop.xlane.xlu0 %3667
  %v3669 = vsel %vm696, %v3664, -inf
  %3670 = vmax.xlane.f32.xlu0 %v3669
  %v3671 = vpop.xlane.xlu0 %3670
  %v3672 = vsel %vm703, %v3665, -inf
  %3673 = vmax.xlane.f32.xlu0 %v3672
  %v3674 = vpop.xlane.xlu0 %3673
  %v3675 = vsub.f32 %v3663, %v3668
  %v3676 = vsub.f32 %v3664, %v3671
  %v3677 = vsub.f32 %v3665, %v3674
  %v3678 = vmul.f32 %v3675, 1.442695
  %v3679 = vpow.pop %v3678
  %v3680 = vmul.f32 %v3676, 1.442695
  %v3681 = vpow.pop %v3680
  %v3682 = vmul.f32 %v3677, 1.442695
  %v3683 = vpow.pop %v3682
  %v3684 = vsel %vm696, %v3679, 0.0
  %3685 = vadd.xlane.f32.xlu0 %v3684
  %v3686 = vpop.xlane.xlu0 %3685
  %v3687 = vsel %vm696, %v3681, 0.0
  %3688 = vadd.xlane.f32.xlu0 %v3687
  %v3689 = vpop.xlane.xlu0 %3688
  %v3690 = vsel %vm703, %v3683, 0.0
  %3691 = vadd.xlane.f32.xlu0 %v3690
  %v3692 = vpop.xlane.xlu0 %3691
  %v3693 = vmax.f32 %v3686, 1e-20
  %v3694 = vmax.f32 %v3689, 1e-20
  %v3695 = vmax.f32 %v3692, 1e-20
  %v3696 = vrcp.pop %v3693
  %v3697 = vrcp.pop %v3694
  %v3698 = vrcp.pop %v3695
  %v3699 = vmul.f32 %v3693, %v3696
  %v3700 = vmul.f32 %v3694, %v3697
  %v3701 = vmul.f32 %v3695, %v3698
  %v3702 = vsub.f32 2.0, %v3699
  %v3703 = vsub.f32 2.0, %v3700
  %v3704 = vsub.f32 2.0, %v3701
  %v3705 = vmul.f32 %v3696, %v3702
  %v3706 = vmul.f32 %v3697, %v3703
  %v3707 = vmul.f32 %v3698, %v3704
  %v3708 = vmul.f32 %v3679, %v3705
  %v3709 = vmul.f32 %v3681, %v3706
  %v3710 = vmul.f32 %v3683, %v3707
  %3711 = vrot.lane.b32.xlu0 %v2521, 88
  %v3712 = vpop.permute.xlu0 %3711
  %3713 = vrot.lane.b32.xlu0 %v2526, 88
  %v3714 = vpop.permute.xlu0 %3713
  %3715 = vrot.lane.b32.xlu0 %v2531, 88
  %v3716 = vpop.permute.xlu0 %3715
  %v3720 = vsel %vm696, %v3708, 0
  %v3723 = vsel %vm696, %v3709, 0
  %v3726 = vsel %vm696, %v3710, 0
  %v3728 = vsel %vm839, %v3716, 0
  %3730 = vmatprep.subr.mxu0 0.0
  %3731 = vmatpush1.msra.mxu0 %v3712
  %3732 = vmatprep.subr.mxu0 0.0
  %3733 = vmatpush1.msra.mxu0 %v3714
  %3734 = vmatprep.subr.mxu0 0.0
  %3735 = vmatpush1.msra.mxu0 %v3728
  %3736 = vmatprep.subr.mxu0 0.0
  %3737 = vmatpush1.msra.mxu0 0.0
  %3738 = vmatprep.subr.mxu0 0.0
  %3739 = vmatpush1.msra.mxu0 0.0
  %3740 = vmatprep.subr.mxu0 0.0
  %3741 = vmatpush1.msra.mxu0 0.0
  %3742 = vmatprep.subr.mxu0 0.0
  %3743 = vmatpush1.msra.mxu0 0.0
  %3744 = vmatprep.subr.mxu0 0.0
  %3745 = vmatpush1.msra.mxu0 0.0
  %3746 = vmatprep.subr.mxu0 0.0
  %3747 = vmatpush1.msra.mxu0 0.0
  %3748 = vmatprep.subr.mxu0 0.0
  %3749 = vmatpush1.msra.mxu0 0.0
  %3750 = vmatprep.subr.mxu0 0.0
  %3751 = vmatpush1.msra.mxu0 0.0
  %3752 = vmatprep.subr.mxu0 0.0
  %3753 = vmatpush1.msra.mxu0 0.0
  %3754 = vmatprep.subr.mxu0 0.0
  %3755 = vmatpush1.msra.mxu0 0.0
  %3756 = vmatprep.subr.mxu0 0.0
  %3757 = vmatpush1.msra.mxu0 0.0
  %3758 = vmatprep.subr.mxu0 0.0
  %3759 = vmatpush1.msra.mxu0 0.0
  %3760 = vmatprep.subr.mxu0 0.0
  %3761 = vmatpush1.msra.mxu0 0.0
  %3762 = vmatprep.subr.mxu0 0.0
  %3763 = vmatpush1.msra.mxu0 0.0
  %3764 = vmatprep.subr.mxu0 0.0
  %3765 = vmatpush1.msra.mxu0 0.0
  %3766 = vmatprep.subr.mxu0 0.0
  %3767 = vmatpush1.msra.mxu0 0.0
  %3768 = vmatprep.subr.mxu0 0.0
  %3769 = vmatpush1.msra.mxu0 0.0
  %3770 = vmatprep.subr.mxu0 0.0
  %3771 = vmatpush1.msra.mxu0 0.0
  %3772 = vmatprep.subr.mxu0 0.0
  %3773 = vmatpush1.msra.mxu0 0.0
  %3774 = vmatprep.subr.mxu0 0.0
  %3775 = vmatpush1.msra.mxu0 0.0
  %3776 = vmatprep.subr.mxu0 0.0
  %3777 = vmatpush1.msra.mxu0 0.0
  %3778 = vmatprep.subr.mxu0 0.0
  %3779 = vmatpush1.msra.mxu0 0.0
  %3780 = vmatprep.subr.mxu0 0.0
  %3781 = vmatpush1.msra.mxu0 0.0
  %3782 = vmatprep.subr.mxu0 0.0
  %3783 = vmatpush1.msra.mxu0 0.0
  %3784 = vmatprep.subr.mxu0 0.0
  %3785 = vmatpush1.msra.mxu0 0.0
  %3786 = vmatprep.subr.mxu0 0.0
  %3787 = vmatpush1.msra.mxu0 0.0
  %3788 = vmatprep.subr.mxu0 0.0
  %3789 = vmatpush1.msra.mxu0 0.0
  %3790 = vmatprep.subr.mxu0 0.0
  %3791 = vmatpush1.msra.mxu0 0.0
  %3792 = vmatprep.subr.mxu0 0.0
  %3793 = vmatpush1.msra.mxu0 0.0
  %3794 = vmatprep.mubr.f32.mxu0 0.0
  %3795 = vmatmul.mubr.f32.gmra.mrb[0].mxu0 %v3720
  %v3796 = vpop.f32.mrb[0].mxu0
  %v3797 = vadd.f32 0.0, %v3796
  %v3798 = vpop.f32.mrb[0].mxu0
  %3799 = vmatprep.mubr.f32.mxu0 0.0
  %3800 = vmatmul.mubr.f32.gmra.mrb[0].mxu0 %v3723
  %v3801 = vpop.f32.mrb[0].mxu0
  %v3802 = vadd.f32 0.0, %v3801
  %v3803 = vpop.f32.mrb[0].mxu0
  %3804 = vmatprep.mubr.f32.mxu0 0.0
  %3805 = vmatmul.mubr.f32.gmra.mrb[0].mxu0 %v3726
  %v3806 = vpop.f32.mrb[0].mxu0
  %v3807 = vadd.f32 0.0, %v3806
  %v3808 = vpop.f32.mrb[0].mxu0
  %3809 = vdwg.mxu0
  %v3810 = vadd.f32 %v3632, %v3797
  %v3811 = vadd.f32 %v3633, %v3802
  %v3812 = vadd.f32 %v3634, %v3807
  %3813 = vset.pattern.permute.xlu0 6
  %3814 = vperm.xlu0 %3813, %v2711
  %v3815 = vpop.permute.xlu0 %3814
  %3817 = vset.pattern.permute.xlu0 6
  %3818 = vperm.xlu0 %3817, %v2716
  %v3819 = vpop.permute.xlu0 %3818
  %3821 = vset.pattern.permute.xlu0 6
  %3822 = vperm.xlu0 %3821, %v2721
  %v3823 = vpop.permute.xlu0 %3822
  %v3825 = vlaneseq
  %v3826 = vshrl.u32 %v3825, 7
  %v3827 = vsub.s32 6, %v3826
  %v3828 = vrot.slane %v2740, %v3827
  %v3829 = vadd.f32 %v3815, %v3828
  %v3830 = vadd.f32 %v3819, %v3828
  %v3831 = vadd.f32 %v3823, %v3828
  %vm3832 = vcmp.gt.f32.partialorder %v3829, 0.0
  %vm3833 = vcmp.gt.f32.partialorder %v3830, 0.0
  %vm3834 = vcmp.gt.f32.partialorder %v3831, 0.0
  %v3835 = vmul.f32 %v3829, 0.2
  %v3836 = vmul.f32 %v3830, 0.2
  %v3837 = vmul.f32 %v3831, 0.2
  %v3838 = vsel %vm3832, %v3829, %v3835
  %v3839 = vsel %vm3833, %v3830, %v3836
  %v3840 = vsel %vm3834, %v3831, %v3837
  %v3841 = vadd.f32 %v3838, %v35
  %v3842 = vadd.f32 %v3839, %v36
  %v3843 = vadd.f32 %v3840, %v37
  %v3844 = vsel %vm696, %v3841, -inf
  %3845 = vmax.xlane.f32.xlu0 %v3844
  %v3846 = vpop.xlane.xlu0 %3845
  %v3847 = vsel %vm696, %v3842, -inf
  %3848 = vmax.xlane.f32.xlu0 %v3847
  %v3849 = vpop.xlane.xlu0 %3848
  %v3850 = vsel %vm703, %v3843, -inf
  %3851 = vmax.xlane.f32.xlu0 %v3850
  %v3852 = vpop.xlane.xlu0 %3851
  %v3853 = vsub.f32 %v3841, %v3846
  %v3854 = vsub.f32 %v3842, %v3849
  %v3855 = vsub.f32 %v3843, %v3852
  %v3856 = vmul.f32 %v3853, 1.442695
  %v3857 = vpow.pop %v3856
  %v3858 = vmul.f32 %v3854, 1.442695
  %v3859 = vpow.pop %v3858
  %v3860 = vmul.f32 %v3855, 1.442695
  %v3861 = vpow.pop %v3860
  %v3862 = vsel %vm696, %v3857, 0.0
  %3863 = vadd.xlane.f32.xlu0 %v3862
  %v3864 = vpop.xlane.xlu0 %3863
  %v3865 = vsel %vm696, %v3859, 0.0
  %3866 = vadd.xlane.f32.xlu0 %v3865
  %v3867 = vpop.xlane.xlu0 %3866
  %v3868 = vsel %vm703, %v3861, 0.0
  %3869 = vadd.xlane.f32.xlu0 %v3868
  %v3870 = vpop.xlane.xlu0 %3869
  %v3871 = vmax.f32 %v3864, 1e-20
  %v3872 = vmax.f32 %v3867, 1e-20
  %v3873 = vmax.f32 %v3870, 1e-20
  %v3874 = vrcp.pop %v3871
  %v3875 = vrcp.pop %v3872
  %v3876 = vrcp.pop %v3873
  %v3877 = vmul.f32 %v3871, %v3874
  %v3878 = vmul.f32 %v3872, %v3875
  %v3879 = vmul.f32 %v3873, %v3876
  %v3880 = vsub.f32 2.0, %v3877
  %v3881 = vsub.f32 2.0, %v3878
  %v3882 = vsub.f32 2.0, %v3879
  %v3883 = vmul.f32 %v3874, %v3880
  %v3884 = vmul.f32 %v3875, %v3881
  %v3885 = vmul.f32 %v3876, %v3882
  %v3886 = vmul.f32 %v3857, %v3883
  %v3887 = vmul.f32 %v3859, %v3884
  %v3888 = vmul.f32 %v3861, %v3885
  %3889 = vrot.lane.b32.xlu0 %v2521, 80
  %v3890 = vpop.permute.xlu0 %3889
  %3891 = vrot.lane.b32.xlu0 %v2526, 80
  %v3892 = vpop.permute.xlu0 %3891
  %3893 = vrot.lane.b32.xlu0 %v2531, 80
  %v3894 = vpop.permute.xlu0 %3893
  %v3898 = vsel %vm696, %v3886, 0
  %v3901 = vsel %vm696, %v3887, 0
  %v3904 = vsel %vm696, %v3888, 0
  %v3906 = vsel %vm839, %v3894, 0
  %3908 = vmatprep.subr.mxu0 0.0
  %3909 = vmatpush1.msra.mxu0 %v3890
  %3910 = vmatprep.subr.mxu0 0.0
  %3911 = vmatpush1.msra.mxu0 %v3892
  %3912 = vmatprep.subr.mxu0 0.0
  %3913 = vmatpush1.msra.mxu0 %v3906
  %3914 = vmatprep.subr.mxu0 0.0
  %3915 = vmatpush1.msra.mxu0 0.0
  %3916 = vmatprep.subr.mxu0 0.0
  %3917 = vmatpush1.msra.mxu0 0.0
  %3918 = vmatprep.subr.mxu0 0.0
  %3919 = vmatpush1.msra.mxu0 0.0
  %3920 = vmatprep.subr.mxu0 0.0
  %3921 = vmatpush1.msra.mxu0 0.0
  %3922 = vmatprep.subr.mxu0 0.0
  %3923 = vmatpush1.msra.mxu0 0.0
  %3924 = vmatprep.subr.mxu0 0.0
  %3925 = vmatpush1.msra.mxu0 0.0
  %3926 = vmatprep.subr.mxu0 0.0
  %3927 = vmatpush1.msra.mxu0 0.0
  %3928 = vmatprep.subr.mxu0 0.0
  %3929 = vmatpush1.msra.mxu0 0.0
  %3930 = vmatprep.subr.mxu0 0.0
  %3931 = vmatpush1.msra.mxu0 0.0
  %3932 = vmatprep.subr.mxu0 0.0
  %3933 = vmatpush1.msra.mxu0 0.0
  %3934 = vmatprep.subr.mxu0 0.0
  %3935 = vmatpush1.msra.mxu0 0.0
  %3936 = vmatprep.subr.mxu0 0.0
  %3937 = vmatpush1.msra.mxu0 0.0
  %3938 = vmatprep.subr.mxu0 0.0
  %3939 = vmatpush1.msra.mxu0 0.0
  %3940 = vmatprep.subr.mxu0 0.0
  %3941 = vmatpush1.msra.mxu0 0.0
  %3942 = vmatprep.subr.mxu0 0.0
  %3943 = vmatpush1.msra.mxu0 0.0
  %3944 = vmatprep.subr.mxu0 0.0
  %3945 = vmatpush1.msra.mxu0 0.0
  %3946 = vmatprep.subr.mxu0 0.0
  %3947 = vmatpush1.msra.mxu0 0.0
  %3948 = vmatprep.subr.mxu0 0.0
  %3949 = vmatpush1.msra.mxu0 0.0
  %3950 = vmatprep.subr.mxu0 0.0
  %3951 = vmatpush1.msra.mxu0 0.0
  %3952 = vmatprep.subr.mxu0 0.0
  %3953 = vmatpush1.msra.mxu0 0.0
  %3954 = vmatprep.subr.mxu0 0.0
  %3955 = vmatpush1.msra.mxu0 0.0
  %3956 = vmatprep.subr.mxu0 0.0
  %3957 = vmatpush1.msra.mxu0 0.0
  %3958 = vmatprep.subr.mxu0 0.0
  %3959 = vmatpush1.msra.mxu0 0.0
  %3960 = vmatprep.subr.mxu0 0.0
  %3961 = vmatpush1.msra.mxu0 0.0
  %3962 = vmatprep.subr.mxu0 0.0
  %3963 = vmatpush1.msra.mxu0 0.0
  %3964 = vmatprep.subr.mxu0 0.0
  %3965 = vmatpush1.msra.mxu0 0.0
  %3966 = vmatprep.subr.mxu0 0.0
  %3967 = vmatpush1.msra.mxu0 0.0
  %3968 = vmatprep.subr.mxu0 0.0
  %3969 = vmatpush1.msra.mxu0 0.0
  %3970 = vmatprep.subr.mxu0 0.0
  %3971 = vmatpush1.msra.mxu0 0.0
  %3972 = vmatprep.mubr.f32.mxu0 0.0
  %3973 = vmatmul.mubr.f32.gmra.mrb[0].mxu0 %v3898
  %v3974 = vpop.f32.mrb[0].mxu0
  %v3975 = vadd.f32 0.0, %v3974
  %v3976 = vpop.f32.mrb[0].mxu0
  %3977 = vmatprep.mubr.f32.mxu0 0.0
  %3978 = vmatmul.mubr.f32.gmra.mrb[0].mxu0 %v3901
  %v3979 = vpop.f32.mrb[0].mxu0
  %v3980 = vadd.f32 0.0, %v3979
  %v3981 = vpop.f32.mrb[0].mxu0
  %3982 = vmatprep.mubr.f32.mxu0 0.0
  %3983 = vmatmul.mubr.f32.gmra.mrb[0].mxu0 %v3904
  %v3984 = vpop.f32.mrb[0].mxu0
  %v3985 = vadd.f32 0.0, %v3984
  %v3986 = vpop.f32.mrb[0].mxu0
  %3987 = vdwg.mxu0
  %v3988 = vadd.f32 %v3810, %v3975
  %v3989 = vadd.f32 %v3811, %v3980
  %v3990 = vadd.f32 %v3812, %v3985
  %3991 = vset.pattern.permute.xlu0 7
  %3992 = vperm.xlu0 %3991, %v2711
  %v3993 = vpop.permute.xlu0 %3992
  %3995 = vset.pattern.permute.xlu0 7
  %3996 = vperm.xlu0 %3995, %v2716
  %v3997 = vpop.permute.xlu0 %3996
  %3999 = vset.pattern.permute.xlu0 7
  %4000 = vperm.xlu0 %3999, %v2721
  %v4001 = vpop.permute.xlu0 %4000
  %v4003 = vlaneseq
  %v4004 = vshrl.u32 %v4003, 7
  %v4005 = vsub.s32 7, %v4004
  %v4006 = vrot.slane %v2740, %v4005
  %v4007 = vadd.f32 %v3993, %v4006
  %v4008 = vadd.f32 %v3997, %v4006
  %v4009 = vadd.f32 %v4001, %v4006
  %vm4010 = vcmp.gt.f32.partialorder %v4007, 0.0
  %vm4011 = vcmp.gt.f32.partialorder %v4008, 0.0
  %vm4012 = vcmp.gt.f32.partialorder %v4009, 0.0
  %v4013 = vmul.f32 %v4007, 0.2
  %v4014 = vmul.f32 %v4008, 0.2
  %v4015 = vmul.f32 %v4009, 0.2
  %v4016 = vsel %vm4010, %v4007, %v4013
  %v4017 = vsel %vm4011, %v4008, %v4014
  %v4018 = vsel %vm4012, %v4009, %v4015
  %v4019 = vadd.f32 %v4016, %v35
  %v4020 = vadd.f32 %v4017, %v36
  %v4021 = vadd.f32 %v4018, %v37
  %v4022 = vsel %vm696, %v4019, -inf
  %4023 = vmax.xlane.f32.xlu0 %v4022
  %v4024 = vpop.xlane.xlu0 %4023
  %v4025 = vsel %vm696, %v4020, -inf
  %4026 = vmax.xlane.f32.xlu0 %v4025
  %v4027 = vpop.xlane.xlu0 %4026
  %v4028 = vsel %vm703, %v4021, -inf
  %4029 = vmax.xlane.f32.xlu0 %v4028
  %v4030 = vpop.xlane.xlu0 %4029
  %v4031 = vsub.f32 %v4019, %v4024
  %v4032 = vsub.f32 %v4020, %v4027
  %v4033 = vsub.f32 %v4021, %v4030
  %v4034 = vmul.f32 %v4031, 1.442695
  %v4035 = vpow.pop %v4034
  %v4036 = vmul.f32 %v4032, 1.442695
  %v4037 = vpow.pop %v4036
  %v4038 = vmul.f32 %v4033, 1.442695
  %v4039 = vpow.pop %v4038
  %v4040 = vsel %vm696, %v4035, 0.0
  %4041 = vadd.xlane.f32.xlu0 %v4040
  %v4042 = vpop.xlane.xlu0 %4041
  %v4043 = vsel %vm696, %v4037, 0.0
  %4044 = vadd.xlane.f32.xlu0 %v4043
  %v4045 = vpop.xlane.xlu0 %4044
  %v4046 = vsel %vm703, %v4039, 0.0
  %4047 = vadd.xlane.f32.xlu0 %v4046
  %v4048 = vpop.xlane.xlu0 %4047
  %v4049 = vmax.f32 %v4042, 1e-20
  %v4050 = vmax.f32 %v4045, 1e-20
  %v4051 = vmax.f32 %v4048, 1e-20
  %v4052 = vrcp.pop %v4049
  %v4053 = vrcp.pop %v4050
  %v4054 = vrcp.pop %v4051
  %v4055 = vmul.f32 %v4049, %v4052
  %v4056 = vmul.f32 %v4050, %v4053
  %v4057 = vmul.f32 %v4051, %v4054
  %v4058 = vsub.f32 2.0, %v4055
  %v4059 = vsub.f32 2.0, %v4056
  %v4060 = vsub.f32 2.0, %v4057
  %v4061 = vmul.f32 %v4052, %v4058
  %v4062 = vmul.f32 %v4053, %v4059
  %v4063 = vmul.f32 %v4054, %v4060
  %v4064 = vmul.f32 %v4035, %v4061
  %v4065 = vmul.f32 %v4037, %v4062
  %v4066 = vmul.f32 %v4039, %v4063
  %4067 = vrot.lane.b32.xlu0 %v2521, 72
  %v4068 = vpop.permute.xlu0 %4067
  %4069 = vrot.lane.b32.xlu0 %v2526, 72
  %v4070 = vpop.permute.xlu0 %4069
  %4071 = vrot.lane.b32.xlu0 %v2531, 72
  %v4072 = vpop.permute.xlu0 %4071
  %v4076 = vsel %vm696, %v4064, 0
  %v4079 = vsel %vm696, %v4065, 0
  %v4082 = vsel %vm696, %v4066, 0
  %v4084 = vsel %vm839, %v4072, 0
  %4086 = vmatprep.subr.mxu0 0.0
  %4087 = vmatpush1.msra.mxu0 %v4068
  %4088 = vmatprep.subr.mxu0 0.0
  %4089 = vmatpush1.msra.mxu0 %v4070
  %4090 = vmatprep.subr.mxu0 0.0
  %4091 = vmatpush1.msra.mxu0 %v4084
  %4092 = vmatprep.subr.mxu0 0.0
  %4093 = vmatpush1.msra.mxu0 0.0
  %4094 = vmatprep.subr.mxu0 0.0
  %4095 = vmatpush1.msra.mxu0 0.0
  %4096 = vmatprep.subr.mxu0 0.0
  %4097 = vmatpush1.msra.mxu0 0.0
  %4098 = vmatprep.subr.mxu0 0.0
  %4099 = vmatpush1.msra.mxu0 0.0
  %4100 = vmatprep.subr.mxu0 0.0
  %4101 = vmatpush1.msra.mxu0 0.0
  %4102 = vmatprep.subr.mxu0 0.0
  %4103 = vmatpush1.msra.mxu0 0.0
  %4104 = vmatprep.subr.mxu0 0.0
  %4105 = vmatpush1.msra.mxu0 0.0
  %4106 = vmatprep.subr.mxu0 0.0
  %4107 = vmatpush1.msra.mxu0 0.0
  %4108 = vmatprep.subr.mxu0 0.0
  %4109 = vmatpush1.msra.mxu0 0.0
  %4110 = vmatprep.subr.mxu0 0.0
  %4111 = vmatpush1.msra.mxu0 0.0
  %4112 = vmatprep.subr.mxu0 0.0
  %4113 = vmatpush1.msra.mxu0 0.0
  %4114 = vmatprep.subr.mxu0 0.0
  %4115 = vmatpush1.msra.mxu0 0.0
  %4116 = vmatprep.subr.mxu0 0.0
  %4117 = vmatpush1.msra.mxu0 0.0
  %4118 = vmatprep.subr.mxu0 0.0
  %4119 = vmatpush1.msra.mxu0 0.0
  %4120 = vmatprep.subr.mxu0 0.0
  %4121 = vmatpush1.msra.mxu0 0.0
  %4122 = vmatprep.subr.mxu0 0.0
  %4123 = vmatpush1.msra.mxu0 0.0
  %4124 = vmatprep.subr.mxu0 0.0
  %4125 = vmatpush1.msra.mxu0 0.0
  %4126 = vmatprep.subr.mxu0 0.0
  %4127 = vmatpush1.msra.mxu0 0.0
  %4128 = vmatprep.subr.mxu0 0.0
  %4129 = vmatpush1.msra.mxu0 0.0
  %4130 = vmatprep.subr.mxu0 0.0
  %4131 = vmatpush1.msra.mxu0 0.0
  %4132 = vmatprep.subr.mxu0 0.0
  %4133 = vmatpush1.msra.mxu0 0.0
  %4134 = vmatprep.subr.mxu0 0.0
  %4135 = vmatpush1.msra.mxu0 0.0
  %4136 = vmatprep.subr.mxu0 0.0
  %4137 = vmatpush1.msra.mxu0 0.0
  %4138 = vmatprep.subr.mxu0 0.0
  %4139 = vmatpush1.msra.mxu0 0.0
  %4140 = vmatprep.subr.mxu0 0.0
  %4141 = vmatpush1.msra.mxu0 0.0
  %4142 = vmatprep.subr.mxu0 0.0
  %4143 = vmatpush1.msra.mxu0 0.0
  %4144 = vmatprep.subr.mxu0 0.0
  %4145 = vmatpush1.msra.mxu0 0.0
  %4146 = vmatprep.subr.mxu0 0.0
  %4147 = vmatpush1.msra.mxu0 0.0
  %4148 = vmatprep.subr.mxu0 0.0
  %4149 = vmatpush1.msra.mxu0 0.0
  %4150 = vmatprep.mubr.f32.mxu0 0.0
  %4151 = vmatmul.mubr.f32.gmra.mrb[0].mxu0 %v4076
  %v4152 = vpop.f32.mrb[0].mxu0
  %v4153 = vadd.f32 0.0, %v4152
  %v4154 = vpop.f32.mrb[0].mxu0
  %4155 = vmatprep.mubr.f32.mxu0 0.0
  %4156 = vmatmul.mubr.f32.gmra.mrb[0].mxu0 %v4079
  %v4157 = vpop.f32.mrb[0].mxu0
  %v4158 = vadd.f32 0.0, %v4157
  %v4159 = vpop.f32.mrb[0].mxu0
  %4160 = vmatprep.mubr.f32.mxu0 0.0
  %4161 = vmatmul.mubr.f32.gmra.mrb[0].mxu0 %v4082
  %v4162 = vpop.f32.mrb[0].mxu0
  %v4163 = vadd.f32 0.0, %v4162
  %v4164 = vpop.f32.mrb[0].mxu0
  %4165 = vdwg.mxu0
  %v4166 = vadd.f32 %v3988, %v4153
  %v4167 = vadd.f32 %v3989, %v4158
  %v4168 = vadd.f32 %v3990, %v4163
  %4169 = vset.pattern.permute.xlu0 8
  %4170 = vperm.xlu0 %4169, %v2711
  %v4171 = vpop.permute.xlu0 %4170
  %4173 = vset.pattern.permute.xlu0 8
  %4174 = vperm.xlu0 %4173, %v2716
  %v4175 = vpop.permute.xlu0 %4174
  %4177 = vset.pattern.permute.xlu0 8
  %4178 = vperm.xlu0 %4177, %v2721
  %v4179 = vpop.permute.xlu0 %4178
  %v4181 = vlaneseq
  %v4182 = vshrl.u32 %v4181, 7
  %v4183 = vsub.s32 0, %v4182
  %v4184 = vrot.slane %v2741, %v4183
  %v4185 = vadd.f32 %v4171, %v4184
  %v4186 = vadd.f32 %v4175, %v4184
  %v4187 = vadd.f32 %v4179, %v4184
  %vm4188 = vcmp.gt.f32.partialorder %v4185, 0.0
  %vm4189 = vcmp.gt.f32.partialorder %v4186, 0.0
  %vm4190 = vcmp.gt.f32.partialorder %v4187, 0.0
  %v4191 = vmul.f32 %v4185, 0.2
  %v4192 = vmul.f32 %v4186, 0.2
  %v4193 = vmul.f32 %v4187, 0.2
  %v4194 = vsel %vm4188, %v4185, %v4191
  %v4195 = vsel %vm4189, %v4186, %v4192
  %v4196 = vsel %vm4190, %v4187, %v4193
  %v4197 = vadd.f32 %v4194, %v35
  %v4198 = vadd.f32 %v4195, %v36
  %v4199 = vadd.f32 %v4196, %v37
  %v4200 = vsel %vm696, %v4197, -inf
  %4201 = vmax.xlane.f32.xlu0 %v4200
  %v4202 = vpop.xlane.xlu0 %4201
  %v4203 = vsel %vm696, %v4198, -inf
  %4204 = vmax.xlane.f32.xlu0 %v4203
  %v4205 = vpop.xlane.xlu0 %4204
  %v4206 = vsel %vm703, %v4199, -inf
  %4207 = vmax.xlane.f32.xlu0 %v4206
  %v4208 = vpop.xlane.xlu0 %4207
  %v4209 = vsub.f32 %v4197, %v4202
  %v4210 = vsub.f32 %v4198, %v4205
  %v4211 = vsub.f32 %v4199, %v4208
  %v4212 = vmul.f32 %v4209, 1.442695
  %v4213 = vpow.pop %v4212
  %v4214 = vmul.f32 %v4210, 1.442695
  %v4215 = vpow.pop %v4214
  %v4216 = vmul.f32 %v4211, 1.442695
  %v4217 = vpow.pop %v4216
  %v4218 = vsel %vm696, %v4213, 0.0
  %4219 = vadd.xlane.f32.xlu0 %v4218
  %v4220 = vpop.xlane.xlu0 %4219
  %v4221 = vsel %vm696, %v4215, 0.0
  %4222 = vadd.xlane.f32.xlu0 %v4221
  %v4223 = vpop.xlane.xlu0 %4222
  %v4224 = vsel %vm703, %v4217, 0.0
  %4225 = vadd.xlane.f32.xlu0 %v4224
  %v4226 = vpop.xlane.xlu0 %4225
  %v4227 = vmax.f32 %v4220, 1e-20
  %v4228 = vmax.f32 %v4223, 1e-20
  %v4229 = vmax.f32 %v4226, 1e-20
  %v4230 = vrcp.pop %v4227
  %v4231 = vrcp.pop %v4228
  %v4232 = vrcp.pop %v4229
  %v4233 = vmul.f32 %v4227, %v4230
  %v4234 = vmul.f32 %v4228, %v4231
  %v4235 = vmul.f32 %v4229, %v4232
  %v4236 = vsub.f32 2.0, %v4233
  %v4237 = vsub.f32 2.0, %v4234
  %v4238 = vsub.f32 2.0, %v4235
  %v4239 = vmul.f32 %v4230, %v4236
  %v4240 = vmul.f32 %v4231, %v4237
  %v4241 = vmul.f32 %v4232, %v4238
  %v4242 = vmul.f32 %v4213, %v4239
  %v4243 = vmul.f32 %v4215, %v4240
  %v4244 = vmul.f32 %v4217, %v4241
  %4245 = vrot.lane.b32.xlu0 %v2521, 64
  %v4246 = vpop.permute.xlu0 %4245
  %4247 = vrot.lane.b32.xlu0 %v2526, 64
  %v4248 = vpop.permute.xlu0 %4247
  %4249 = vrot.lane.b32.xlu0 %v2531, 64
  %v4250 = vpop.permute.xlu0 %4249
  %v4254 = vsel %vm696, %v4242, 0
  %v4257 = vsel %vm696, %v4243, 0
  %v4260 = vsel %vm696, %v4244, 0
  %v4262 = vsel %vm839, %v4250, 0
  %4264 = vmatprep.subr.mxu0 0.0
  %4265 = vmatpush1.msra.mxu0 %v4246
  %4266 = vmatprep.subr.mxu0 0.0
  %4267 = vmatpush1.msra.mxu0 %v4248
  %4268 = vmatprep.subr.mxu0 0.0
  %4269 = vmatpush1.msra.mxu0 %v4262
  %4270 = vmatprep.subr.mxu0 0.0
  %4271 = vmatpush1.msra.mxu0 0.0
  %4272 = vmatprep.subr.mxu0 0.0
  %4273 = vmatpush1.msra.mxu0 0.0
  %4274 = vmatprep.subr.mxu0 0.0
  %4275 = vmatpush1.msra.mxu0 0.0
  %4276 = vmatprep.subr.mxu0 0.0
  %4277 = vmatpush1.msra.mxu0 0.0
  %4278 = vmatprep.subr.mxu0 0.0
  %4279 = vmatpush1.msra.mxu0 0.0
  %4280 = vmatprep.subr.mxu0 0.0
  %4281 = vmatpush1.msra.mxu0 0.0
  %4282 = vmatprep.subr.mxu0 0.0
  %4283 = vmatpush1.msra.mxu0 0.0
  %4284 = vmatprep.subr.mxu0 0.0
  %4285 = vmatpush1.msra.mxu0 0.0
  %4286 = vmatprep.subr.mxu0 0.0
  %4287 = vmatpush1.msra.mxu0 0.0
  %4288 = vmatprep.subr.mxu0 0.0
  %4289 = vmatpush1.msra.mxu0 0.0
  %4290 = vmatprep.subr.mxu0 0.0
  %4291 = vmatpush1.msra.mxu0 0.0
  %4292 = vmatprep.subr.mxu0 0.0
  %4293 = vmatpush1.msra.mxu0 0.0
  %4294 = vmatprep.subr.mxu0 0.0
  %4295 = vmatpush1.msra.mxu0 0.0
  %4296 = vmatprep.subr.mxu0 0.0
  %4297 = vmatpush1.msra.mxu0 0.0
  %4298 = vmatprep.subr.mxu0 0.0
  %4299 = vmatpush1.msra.mxu0 0.0
  %4300 = vmatprep.subr.mxu0 0.0
  %4301 = vmatpush1.msra.mxu0 0.0
  %4302 = vmatprep.subr.mxu0 0.0
  %4303 = vmatpush1.msra.mxu0 0.0
  %4304 = vmatprep.subr.mxu0 0.0
  %4305 = vmatpush1.msra.mxu0 0.0
  %4306 = vmatprep.subr.mxu0 0.0
  %4307 = vmatpush1.msra.mxu0 0.0
  %4308 = vmatprep.subr.mxu0 0.0
  %4309 = vmatpush1.msra.mxu0 0.0
  %4310 = vmatprep.subr.mxu0 0.0
  %4311 = vmatpush1.msra.mxu0 0.0
  %4312 = vmatprep.subr.mxu0 0.0
  %4313 = vmatpush1.msra.mxu0 0.0
  %4314 = vmatprep.subr.mxu0 0.0
  %4315 = vmatpush1.msra.mxu0 0.0
  %4316 = vmatprep.subr.mxu0 0.0
  %4317 = vmatpush1.msra.mxu0 0.0
  %4318 = vmatprep.subr.mxu0 0.0
  %4319 = vmatpush1.msra.mxu0 0.0
  %4320 = vmatprep.subr.mxu0 0.0
  %4321 = vmatpush1.msra.mxu0 0.0
  %4322 = vmatprep.subr.mxu0 0.0
  %4323 = vmatpush1.msra.mxu0 0.0
  %4324 = vmatprep.subr.mxu0 0.0
  %4325 = vmatpush1.msra.mxu0 0.0
  %4326 = vmatprep.subr.mxu0 0.0
  %4327 = vmatpush1.msra.mxu0 0.0
  %4328 = vmatprep.mubr.f32.mxu0 0.0
  %4329 = vmatmul.mubr.f32.gmra.mrb[0].mxu0 %v4254
  %v4330 = vpop.f32.mrb[0].mxu0
  %v4331 = vadd.f32 0.0, %v4330
  %v4332 = vpop.f32.mrb[0].mxu0
  %4333 = vmatprep.mubr.f32.mxu0 0.0
  %4334 = vmatmul.mubr.f32.gmra.mrb[0].mxu0 %v4257
  %v4335 = vpop.f32.mrb[0].mxu0
  %v4336 = vadd.f32 0.0, %v4335
  %v4337 = vpop.f32.mrb[0].mxu0
  %4338 = vmatprep.mubr.f32.mxu0 0.0
  %4339 = vmatmul.mubr.f32.gmra.mrb[0].mxu0 %v4260
  %v4340 = vpop.f32.mrb[0].mxu0
  %v4341 = vadd.f32 0.0, %v4340
  %v4342 = vpop.f32.mrb[0].mxu0
  %4343 = vdwg.mxu0
  %v4344 = vadd.f32 %v4166, %v4331
  %v4345 = vadd.f32 %v4167, %v4336
  %v4346 = vadd.f32 %v4168, %v4341
  %4347 = vset.pattern.permute.xlu0 9
  %4348 = vperm.xlu0 %4347, %v2711
  %v4349 = vpop.permute.xlu0 %4348
  %4351 = vset.pattern.permute.xlu0 9
  %4352 = vperm.xlu0 %4351, %v2716
  %v4353 = vpop.permute.xlu0 %4352
  %4355 = vset.pattern.permute.xlu0 9
  %4356 = vperm.xlu0 %4355, %v2721
  %v4357 = vpop.permute.xlu0 %4356
  %v4359 = vlaneseq
  %v4360 = vshrl.u32 %v4359, 7
  %v4361 = vsub.s32 1, %v4360
  %v4362 = vrot.slane %v2741, %v4361
  %v4363 = vadd.f32 %v4349, %v4362
  %v4364 = vadd.f32 %v4353, %v4362
  %v4365 = vadd.f32 %v4357, %v4362
  %vm4366 = vcmp.gt.f32.partialorder %v4363, 0.0
  %vm4367 = vcmp.gt.f32.partialorder %v4364, 0.0
  %vm4368 = vcmp.gt.f32.partialorder %v4365, 0.0
  %v4369 = vmul.f32 %v4363, 0.2
  %v4370 = vmul.f32 %v4364, 0.2
  %v4371 = vmul.f32 %v4365, 0.2
  %v4372 = vsel %vm4366, %v4363, %v4369
  %v4373 = vsel %vm4367, %v4364, %v4370
  %v4374 = vsel %vm4368, %v4365, %v4371
  %v4375 = vadd.f32 %v4372, %v35
  %v4376 = vadd.f32 %v4373, %v36
  %v4377 = vadd.f32 %v4374, %v37
  %v4378 = vsel %vm696, %v4375, -inf
  %4379 = vmax.xlane.f32.xlu0 %v4378
  %v4380 = vpop.xlane.xlu0 %4379
  %v4381 = vsel %vm696, %v4376, -inf
  %4382 = vmax.xlane.f32.xlu0 %v4381
  %v4383 = vpop.xlane.xlu0 %4382
  %v4384 = vsel %vm703, %v4377, -inf
  %4385 = vmax.xlane.f32.xlu0 %v4384
  %v4386 = vpop.xlane.xlu0 %4385
  %v4387 = vsub.f32 %v4375, %v4380
  %v4388 = vsub.f32 %v4376, %v4383
  %v4389 = vsub.f32 %v4377, %v4386
  %v4390 = vmul.f32 %v4387, 1.442695
  %v4391 = vpow.pop %v4390
  %v4392 = vmul.f32 %v4388, 1.442695
  %v4393 = vpow.pop %v4392
  %v4394 = vmul.f32 %v4389, 1.442695
  %v4395 = vpow.pop %v4394
  %v4396 = vsel %vm696, %v4391, 0.0
  %4397 = vadd.xlane.f32.xlu0 %v4396
  %v4398 = vpop.xlane.xlu0 %4397
  %v4399 = vsel %vm696, %v4393, 0.0
  %4400 = vadd.xlane.f32.xlu0 %v4399
  %v4401 = vpop.xlane.xlu0 %4400
  %v4402 = vsel %vm703, %v4395, 0.0
  %4403 = vadd.xlane.f32.xlu0 %v4402
  %v4404 = vpop.xlane.xlu0 %4403
  %v4405 = vmax.f32 %v4398, 1e-20
  %v4406 = vmax.f32 %v4401, 1e-20
  %v4407 = vmax.f32 %v4404, 1e-20
  %v4408 = vrcp.pop %v4405
  %v4409 = vrcp.pop %v4406
  %v4410 = vrcp.pop %v4407
  %v4411 = vmul.f32 %v4405, %v4408
  %v4412 = vmul.f32 %v4406, %v4409
  %v4413 = vmul.f32 %v4407, %v4410
  %v4414 = vsub.f32 2.0, %v4411
  %v4415 = vsub.f32 2.0, %v4412
  %v4416 = vsub.f32 2.0, %v4413
  %v4417 = vmul.f32 %v4408, %v4414
  %v4418 = vmul.f32 %v4409, %v4415
  %v4419 = vmul.f32 %v4410, %v4416
  %v4420 = vmul.f32 %v4391, %v4417
  %v4421 = vmul.f32 %v4393, %v4418
  %v4422 = vmul.f32 %v4395, %v4419
  %4423 = vrot.lane.b32.xlu0 %v2521, 56
  %v4424 = vpop.permute.xlu0 %4423
  %4425 = vrot.lane.b32.xlu0 %v2526, 56
  %v4426 = vpop.permute.xlu0 %4425
  %4427 = vrot.lane.b32.xlu0 %v2531, 56
  %v4428 = vpop.permute.xlu0 %4427
  %v4432 = vsel %vm696, %v4420, 0
  %v4435 = vsel %vm696, %v4421, 0
  %v4438 = vsel %vm696, %v4422, 0
  %v4440 = vsel %vm839, %v4428, 0
  %4442 = vmatprep.subr.mxu0 0.0
  %4443 = vmatpush1.msra.mxu0 %v4424
  %4444 = vmatprep.subr.mxu0 0.0
  %4445 = vmatpush1.msra.mxu0 %v4426
  %4446 = vmatprep.subr.mxu0 0.0
  %4447 = vmatpush1.msra.mxu0 %v4440
  %4448 = vmatprep.subr.mxu0 0.0
  %4449 = vmatpush1.msra.mxu0 0.0
  %4450 = vmatprep.subr.mxu0 0.0
  %4451 = vmatpush1.msra.mxu0 0.0
  %4452 = vmatprep.subr.mxu0 0.0
  %4453 = vmatpush1.msra.mxu0 0.0
  %4454 = vmatprep.subr.mxu0 0.0
  %4455 = vmatpush1.msra.mxu0 0.0
  %4456 = vmatprep.subr.mxu0 0.0
  %4457 = vmatpush1.msra.mxu0 0.0
  %4458 = vmatprep.subr.mxu0 0.0
  %4459 = vmatpush1.msra.mxu0 0.0
  %4460 = vmatprep.subr.mxu0 0.0
  %4461 = vmatpush1.msra.mxu0 0.0
  %4462 = vmatprep.subr.mxu0 0.0
  %4463 = vmatpush1.msra.mxu0 0.0
  %4464 = vmatprep.subr.mxu0 0.0
  %4465 = vmatpush1.msra.mxu0 0.0
  %4466 = vmatprep.subr.mxu0 0.0
  %4467 = vmatpush1.msra.mxu0 0.0
  %4468 = vmatprep.subr.mxu0 0.0
  %4469 = vmatpush1.msra.mxu0 0.0
  %4470 = vmatprep.subr.mxu0 0.0
  %4471 = vmatpush1.msra.mxu0 0.0
  %4472 = vmatprep.subr.mxu0 0.0
  %4473 = vmatpush1.msra.mxu0 0.0
  %4474 = vmatprep.subr.mxu0 0.0
  %4475 = vmatpush1.msra.mxu0 0.0
  %4476 = vmatprep.subr.mxu0 0.0
  %4477 = vmatpush1.msra.mxu0 0.0
  %4478 = vmatprep.subr.mxu0 0.0
  %4479 = vmatpush1.msra.mxu0 0.0
  %4480 = vmatprep.subr.mxu0 0.0
  %4481 = vmatpush1.msra.mxu0 0.0
  %4482 = vmatprep.subr.mxu0 0.0
  %4483 = vmatpush1.msra.mxu0 0.0
  %4484 = vmatprep.subr.mxu0 0.0
  %4485 = vmatpush1.msra.mxu0 0.0
  %4486 = vmatprep.subr.mxu0 0.0
  %4487 = vmatpush1.msra.mxu0 0.0
  %4488 = vmatprep.subr.mxu0 0.0
  %4489 = vmatpush1.msra.mxu0 0.0
  %4490 = vmatprep.subr.mxu0 0.0
  %4491 = vmatpush1.msra.mxu0 0.0
  %4492 = vmatprep.subr.mxu0 0.0
  %4493 = vmatpush1.msra.mxu0 0.0
  %4494 = vmatprep.subr.mxu0 0.0
  %4495 = vmatpush1.msra.mxu0 0.0
  %4496 = vmatprep.subr.mxu0 0.0
  %4497 = vmatpush1.msra.mxu0 0.0
  %4498 = vmatprep.subr.mxu0 0.0
  %4499 = vmatpush1.msra.mxu0 0.0
  %4500 = vmatprep.subr.mxu0 0.0
  %4501 = vmatpush1.msra.mxu0 0.0
  %4502 = vmatprep.subr.mxu0 0.0
  %4503 = vmatpush1.msra.mxu0 0.0
  %4504 = vmatprep.subr.mxu0 0.0
  %4505 = vmatpush1.msra.mxu0 0.0
  %4506 = vmatprep.mubr.f32.mxu0 0.0
  %4507 = vmatmul.mubr.f32.gmra.mrb[0].mxu0 %v4432
  %v4508 = vpop.f32.mrb[0].mxu0
  %v4509 = vadd.f32 0.0, %v4508
  %v4510 = vpop.f32.mrb[0].mxu0
  %4511 = vmatprep.mubr.f32.mxu0 0.0
  %4512 = vmatmul.mubr.f32.gmra.mrb[0].mxu0 %v4435
  %v4513 = vpop.f32.mrb[0].mxu0
  %v4514 = vadd.f32 0.0, %v4513
  %v4515 = vpop.f32.mrb[0].mxu0
  %4516 = vmatprep.mubr.f32.mxu0 0.0
  %4517 = vmatmul.mubr.f32.gmra.mrb[0].mxu0 %v4438
  %v4518 = vpop.f32.mrb[0].mxu0
  %v4519 = vadd.f32 0.0, %v4518
  %v4520 = vpop.f32.mrb[0].mxu0
  %4521 = vdwg.mxu0
  %v4522 = vadd.f32 %v4344, %v4509
  %v4523 = vadd.f32 %v4345, %v4514
  %v4524 = vadd.f32 %v4346, %v4519
  %v4525 = vmul.f32 %v4522, 0.1
  %v4526 = vmul.f32 %v4523, 0.1
  %v4527 = vmul.f32 %v4524, 0.1
  %v4528 = vld [vmem:[%s9] sm:$0x1]
  %v4530 = vlaneseq
  %v4531 = vshrl.u32 %v4530, 7
  %v4532 = vsub.s32 0, %v4531
  %v4533 = vrot.slane %v4528, %v4532
  %v4535 = vadd.f32 %v4525, %v4533
  %v4536 = vadd.f32 %v4526, %v4533
  %v4537 = vadd.f32 %v4527, %v4533
  %vm4538 = vcmask 64512
  %4539 = vst.msk [vmem:[%s10] sm:$0xff] %vm4538, %v4535
  %4540 = vst.msk [vmem:[%s10 + $0x8] sm:$0xff] %vm4538, %v4536
  %vm4541 = vcmask 60416
  %4542 = vst.msk [vmem:[%s10 + $0x10] sm:$0xf] %vm4541, %v4537
  // Predicated region
  $region42: #{gat_forward.1} parent=0 // pred_check
    _
  $region43: #{gat_forward.1} parent=0 // pred_check_branch
    %4544 = sbr.rel (0) target = $region45
  $region44: #{gat_forward.1} parent=0 // pred_region
    _
  $region45: #{gat_forward.1} parent=0 // pred_fallthru
    _
  // Predicated region
  $region46: #{gat_forward.1} parent=0 // pred_check
    _
  $region47: #{gat_forward.1} parent=0 // pred_check_branch
    %4546 = sbr.rel (0) target = $region49
  $region48: #{gat_forward.1} parent=0 // pred_region
    _
  $region49: #{gat_forward.1} parent=0 // pred_fallthru
    _

</llo_original>
